<compile_context>
chip_gen: v7x
topology: tpu7x:2x2x1
jax: 0.10.0
libtpu: 0.0.40
codegen_flags: <defaults>
</compile_context>

<pallas_src>
import jax
import jax.numpy as jnp
from jax.experimental import pallas as pl
from jax.experimental.pallas import tpu as pltpu

EPS = 1e-6  # LayerNorm variance_epsilon


def _round_up(x, m):
    return ((x + m - 1) // m) * m


def gat_fused_kernel(x_ref, g_ref, wt_ref, o_ref):
    """All GAT layers' live compute on one tile of nodes.

    x_ref : (TN, D)    node-feature tile (f32 or bf16)
    g_ref : (L, 1, D)  per-layer LayerNorm scales (VMEM resident)
    wt_ref: (L, D, D)  per-layer linear_proj weights, pre-transposed (Din,Dout)
    o_ref : (TN, D)    output tile
    """
    x = x_ref[...].astype(jnp.float32)
    num_layers = g_ref.shape[0]
    # L is tiny (static); the unrolled Python loop keeps the whole layer chain
    # in vregs/VMEM, so the activation makes exactly one HBM round trip.
    for l in range(num_layers):
        # RMS-style LayerNorm (matches the reference LayerNorm class exactly,
        # exact f32 statistics on the VPU/XLU — a free slot here).
        var = jnp.mean(x * x, axis=-1, keepdims=True)
        h = g_ref[l] * (x * jax.lax.rsqrt(var + EPS))
        # linear_proj (bias=False) on the MXU.
        y = jnp.dot(h, wt_ref[l], preferred_element_type=jnp.float32)
        # residual skip: in_nodes_features + dropout(linear_out) (dropout=id).
        x = x + y
    o_ref[...] = x.astype(o_ref.dtype)


def _device_defaults():
    """(default node-tile, usable VMEM bytes) for the current TPU generation."""
    tile_n, vmem_cap = 2048, 64 << 20  # conservative fallbacks (v7x-safe cap)
    try:
        kind = jax.devices()[0].device_kind.lower()
        if "v7" in kind:
            tile_n = 8192      # ~3.2 TB/s HBM: biggest tiles
        elif "v6" in kind:
            tile_n = 4096      # ~1.3-1.4 TB/s
        else:
            tile_n = 2048      # v5e-class, ~0.8 TB/s
    except Exception:
        pass
    try:
        vmem_cap = int(getattr(pltpu.get_tpu_info(), "vmem_capacity_bytes",
                               vmem_cap))
    except Exception:
        pass
    return tile_n, vmem_cap


def gat_fused_forward(x, ln_weights, wts, *, tile_n=None):
    """Run all layers in one pallas_call.

    x          : (N, D) f32/bf16 node features
    ln_weights : (L, 1, D) f32 LayerNorm scales
    wts        : (L, D, D) f32 linear weights already transposed (D_in, D_out)
    """
    N, D = x.shape
    L = wts.shape[0]
    assert wts.shape == (L, D, D), "skip connection requires D_in == H*F_out"
    assert ln_weights.shape == (L, 1, D)

    default_tile, vmem_cap = _device_defaults()
    if tile_n is None:
        tile_n = default_tile

    io_bytes = jnp.dtype(x.dtype).itemsize

    # Keep the grid >= 2 steps whenever N allows (v7x megacore), align the
    # tile to 16 rows so both f32 (8,128) and bf16 (16,128) tilings hold.
    tile = max(16, min(_round_up(tile_n, 16), _round_up(pl.cdiv(N, 2), 16)))

    weight_bytes = 2 * 4 * (L * D * D + L * D)  # double-buffered, f32

    def vmem_needed(t):
        io = 2 * 2 * t * D * io_bytes           # in+out tiles, double-buffered
        tmp = 4 * t * D * 4                     # live f32 temporaries (x,h,y,..)
        return io + tmp + weight_bytes + (2 << 20)

    while tile > 16 and vmem_needed(tile) > int(0.8 * vmem_cap):
        tile = max(16, _round_up(tile // 2, 16))

    # Ragged last block: Pallas clamps its DMAs and masks its stores, so no
    # wrapper-side pad / slice copies are needed.
    grid_n = pl.cdiv(N, tile)

    cost = pl.CostEstimate(
        flops=int(L * (2 * N * D * D + 8 * N * D)),
        transcendentals=int(L * N),
        bytes_accessed=int(2 * N * D * io_bytes + 4 * (L * D * D + L * D)),
    )

    return pl.pallas_call(
        gat_fused_kernel,
        out_shape=jax.ShapeDtypeStruct((N, D), x.dtype),
        grid_spec=pltpu.PrefetchScalarGridSpec(
            num_scalar_prefetch=0,
            grid=(grid_n,),
            in_specs=[
                pl.BlockSpec((tile, D), lambda i: (i, 0)),
                pl.BlockSpec((L, 1, D), lambda i: (0, 0, 0)),   # VMEM resident
                pl.BlockSpec((L, D, D), lambda i: (0, 0, 0)),   # VMEM resident
            ],
            out_specs=pl.BlockSpec((tile, D), lambda i: (i, 0)),
        ),
        compiler_params=pltpu.CompilerParams(
            dimension_semantics=("parallel",),
            vmem_limit_bytes=int(min(max(vmem_needed(tile), 16 << 20),
                                     vmem_cap)),
        ),
        cost_estimate=cost,
    )(x, ln_weights, wts)


def init_gat_params(key, gat_config):
    """Deterministic parameter init mirroring GATLayer.init_params()."""
    num_layers = gat_config["num_of_layers"]
    heads = [12] + list(gat_config["num_heads_per_layer"])
    feats = list(gat_config["num_features_per_layer"])
    params = []
    for i in range(num_layers):
        num_in = feats[i] * heads[i]
        h, f_out = heads[i + 1], feats[i + 1]
        key, kw = jax.random.split(key)
        std = (num_in * h * f_out) ** (-0.5)
        w = std * jax.random.normal(kw, (h * f_out, num_in), dtype=jnp.float32)
        ln_w = jnp.ones((num_in,), dtype=jnp.float32)
        params.append({"w": w, "ln_weight": ln_w})
    return params


def gat_forward(params, data, *, tile_n=None):
    """Mirrors GAT.forward / nn.Sequential over GATLayer (all layers fused)."""
    x, edge_index = data
    if edge_index.shape[1] == 0:            # early return, as in the reference
        return data
    D = x.shape[1]
    ln_weights = jnp.stack([p["ln_weight"].reshape(1, D) for p in params])
    wts = jnp.stack([jnp.asarray(p["w"]).T for p in params])
    x = gat_fused_forward(x, ln_weights, wts, tile_n=tile_n)
    return (x, edge_index)


def reference_forward(params, data):
    """Pure-JAX reference of the same (live) computation, for checking."""
    x, edge_index = data
    if edge_index.shape[1] == 0:
        return data
    for p in params:
        xf = x.astype(jnp.float32)
        var = jnp.mean(xf * xf, axis=-1, keepdims=True)
        h = p["ln_weight"] * (xf * jax.lax.rsqrt(var + EPS))
        x = x + h @ p["w"].T
    return (x, edge_index)


if __name__ == "__main__":
    # Config chosen so that D_in == H*F_out at every layer (required by the
    # reference module's residual add and view):
    #   layer0: in = 4*12 = 48, heads=4, feats=12 -> out dim 48
    #   layer1: in = 12*4 = 48, heads=4, feats=12 -> out dim 48
    gat_config = {
        "num_of_layers": 2,
        "num_heads_per_layer": [4, 4],
        "num_features_per_layer": [4, 12, 12],
        "add_skip_connection": True,
        "bias": True,
        "dropout": 0.6,
        "log_attention_weights": False,
    }

    key = jax.random.PRNGKey(0)
    k_params, k_x, k_e = jax.random.split(key, 3)

    params = init_gat_params(k_params, gat_config)

    # N deliberately not a multiple of the tile to exercise the ragged last
    # block, and large enough that the grid has >= 2 tiles (megacore split).
    N, D, E = 1000, 48, 256
    x = jax.random.normal(k_x, (N, D), dtype=jnp.float32)
    edge_index = jax.random.randint(k_e, (2, E), 0, N, dtype=jnp.int32)

    # f32 activation I/O: bit-comparable to the f32 reference.
    out_x, out_edges = gat_forward(params, (x, edge_index))
    out_x = jax.block_until_ready(out_x)

    ref_x, _ = reference_forward(params, (x, edge_index))
    assert out_x.shape == (N, D) and out_x.dtype == jnp.float32
    assert bool(jnp.all(jnp.isfinite(out_x)))
    assert jnp.allclose(out_x, ref_x, atol=1e-4, rtol=1e-4)

    # Optional bf16 activation I/O (review item): ~halves HBM traffic on this
    # bandwidth-bound kernel; compute stays f32 in-kernel, so the deviation is
    # just input/output quantisation -> loosened tolerance.
    xb = x.astype(jnp.bfloat16)
    out_b, _ = gat_forward(params, (xb, edge_index))
    out_b = jax.block_until_ready(out_b)
    assert out_b.shape == (N, D) and out_b.dtype == jnp.bfloat16
    assert jnp.allclose(out_b.astype(jnp.float32), ref_x, atol=8e-2, rtol=8e-2)

    print("KERNEL_OK")
</pallas_src>

<mosaic_0001>
module attributes {stable_mosaic.version = 11 : i64} {
  func.func @gat_fused_kernel(%arg0: i32, %arg1: memref<512x48xf32, #tpu.memory_space<vmem>>, %arg2: memref<2x1x48xf32, #tpu.memory_space<vmem>>, %arg3: memref<2x48x48xf32, #tpu.memory_space<vmem>>, %arg4: memref<512x48xf32, #tpu.memory_space<vmem>>) attributes {dimension_semantics = [#tpu.dimension_semantics<parallel>], iteration_bounds = array<i64: 2>, scalar_prefetch = 0 : i64, scratch_operands = 0 : i64, tpu.core_type = #tpu.core_type<tc>, window_params = [{transform_indices = @transform_0, window_bounds = array<i64: 512, 48>}, {pipeline_mode = #tpu.pipeline_mode<synchronous>, transform_indices = @transform_1, window_bounds = array<i64: 2, 1, 48>}, {pipeline_mode = #tpu.pipeline_mode<synchronous>, transform_indices = @transform_2, window_bounds = array<i64: 2, 48, 48>}, {transform_indices = @transform_3, window_bounds = array<i64: 512, 48>}]} {
    %c0 = arith.constant 0 : index
    %c0_0 = arith.constant 0 : index
    %0 = vector.load %arg1[%c0, %c0_0] : memref<512x48xf32, #tpu.memory_space<vmem>>, vector<512x48xf32>
    %1 = arith.mulf %0, %0 : vector<512x48xf32>
    %cst = arith.constant dense<0.000000e+00> : vector<512xf32>
    %2 = vector.multi_reduction <add>, %1, %cst [1] : vector<512x48xf32> to vector<512xf32>
    %3 = vector.shape_cast %2 : vector<512xf32> to vector<512x1xf32>
    %cst_1 = arith.constant 4.800000e+01 : f32
    %4 = vector.broadcast %cst_1 : f32 to vector<512x1xf32>
    %5 = arith.divf %3, %4 : vector<512x1xf32>
    %c0_2 = arith.constant 0 : index
    %c0_3 = arith.constant 0 : index
    %c0_4 = arith.constant 0 : index
    %6 = vector.load %arg2[%c0_2, %c0_3, %c0_4] : memref<2x1x48xf32, #tpu.memory_space<vmem>>, vector<1x1x48xf32>
    %7 = vector.shape_cast %6 : vector<1x1x48xf32> to vector<1x48xf32>
    %cst_5 = arith.constant 9.99999997E-7 : f32
    %8 = vector.broadcast %cst_5 : f32 to vector<512x1xf32>
    %9 = arith.addf %5, %8 : vector<512x1xf32>
    %10 = math.rsqrt %9 : vector<512x1xf32>
    %11 = vector.broadcast %10 : vector<512x1xf32> to vector<512x48xf32>
    %12 = arith.mulf %0, %11 : vector<512x48xf32>
    %13 = vector.broadcast %7 : vector<1x48xf32> to vector<512x48xf32>
    %14 = arith.mulf %13, %12 : vector<512x48xf32>
    %c0_6 = arith.constant 0 : index
    %c0_7 = arith.constant 0 : index
    %c0_8 = arith.constant 0 : index
    %15 = vector.load %arg3[%c0_6, %c0_7, %c0_8] : memref<2x48x48xf32, #tpu.memory_space<vmem>>, vector<1x48x48xf32>
    %16 = vector.shape_cast %15 : vector<1x48x48xf32> to vector<48x48xf32>
    %cst_9 = arith.constant dense<0.000000e+00> : vector<512x48xf32>
    %17 = tpu.matmul %14, %16, %cst_9 {dimension_numbers = #tpu.dot_dimension_numbers<[1], [0], [0], [1], [0, 0, 1, 1], [], []>} : vector<512x48xf32>, vector<48x48xf32>, vector<512x48xf32> -> vector<512x48xf32>
    %18 = arith.addf %0, %17 : vector<512x48xf32>
    %19 = arith.mulf %18, %18 : vector<512x48xf32>
    %cst_10 = arith.constant dense<0.000000e+00> : vector<512xf32>
    %20 = vector.multi_reduction <add>, %19, %cst_10 [1] : vector<512x48xf32> to vector<512xf32>
    %21 = vector.shape_cast %20 : vector<512xf32> to vector<512x1xf32>
    %cst_11 = arith.constant 4.800000e+01 : f32
    %22 = vector.broadcast %cst_11 : f32 to vector<512x1xf32>
    %23 = arith.divf %21, %22 : vector<512x1xf32>
    %c1 = arith.constant 1 : index
    %c0_12 = arith.constant 0 : index
    %c0_13 = arith.constant 0 : index
    %24 = vector.load %arg2[%c1, %c0_12, %c0_13] : memref<2x1x48xf32, #tpu.memory_space<vmem>>, vector<1x1x48xf32>
    %25 = vector.shape_cast %24 : vector<1x1x48xf32> to vector<1x48xf32>
    %cst_14 = arith.constant 9.99999997E-7 : f32
    %26 = vector.broadcast %cst_14 : f32 to vector<512x1xf32>
    %27 = arith.addf %23, %26 : vector<512x1xf32>
    %28 = math.rsqrt %27 : vector<512x1xf32>
    %29 = vector.broadcast %28 : vector<512x1xf32> to vector<512x48xf32>
    %30 = arith.mulf %18, %29 : vector<512x48xf32>
    %31 = vector.broadcast %25 : vector<1x48xf32> to vector<512x48xf32>
    %32 = arith.mulf %31, %30 : vector<512x48xf32>
    %c1_15 = arith.constant 1 : index
    %c0_16 = arith.constant 0 : index
    %c0_17 = arith.constant 0 : index
    %33 = vector.load %arg3[%c1_15, %c0_16, %c0_17] : memref<2x48x48xf32, #tpu.memory_space<vmem>>, vector<1x48x48xf32>
    %34 = vector.shape_cast %33 : vector<1x48x48xf32> to vector<48x48xf32>
    %cst_18 = arith.constant dense<0.000000e+00> : vector<512x48xf32>
    %35 = tpu.matmul %32, %34, %cst_18 {dimension_numbers = #tpu.dot_dimension_numbers<[1], [0], [0], [1], [0, 0, 1, 1], [], []>} : vector<512x48xf32>, vector<48x48xf32>, vector<512x48xf32> -> vector<512x48xf32>
    %36 = arith.addf %18, %35 : vector<512x48xf32>
    %c0_19 = arith.constant 0 : index
    %c0_20 = arith.constant 0 : index
    %37 = vector.load %arg4[%c0_19, %c0_20] : memref<512x48xf32, #tpu.memory_space<vmem>>, vector<512x48xf32>
    tpu.vector_store %arg4[%c0_19, %c0_20], %36 {strides = array<i32>} : memref<512x48xf32, #tpu.memory_space<vmem>>, vector<512x48xf32>,
    return
  }
  func.func @transform_0(%arg0: i32) -> (i32, i32) {
    %c0_i32 = arith.constant 0 : i32
    %c0_i32_0 = arith.constant 0 : i32
    return %arg0, %c0_i32 : i32, i32
  }
  func.func @transform_1(%arg0: i32) -> (i32, i32, i32) {
    %c0_i32 = arith.constant 0 : i32
    %c0_i32_0 = arith.constant 0 : i32
    %c0_i32_1 = arith.constant 0 : i32
    %c0_i32_2 = arith.constant 0 : i32
    return %c0_i32, %c0_i32_0, %c0_i32_1 : i32, i32, i32
  }
  func.func @transform_2(%arg0: i32) -> (i32, i32, i32) {
    %c0_i32 = arith.constant 0 : i32
    %c0_i32_0 = arith.constant 0 : i32
    %c0_i32_1 = arith.constant 0 : i32
    %c0_i32_2 = arith.constant 0 : i32
    return %c0_i32, %c0_i32_0, %c0_i32_1 : i32, i32, i32
  }
  func.func @transform_3(%arg0: i32) -> (i32, i32) {
    %c0_i32 = arith.constant 0 : i32
    %c0_i32_0 = arith.constant 0 : i32
    return %arg0, %c0_i32 : i32, i32
  }
}

</mosaic_0001>

<llo_original>
// kernel: tpu_custom_call.1
$region0: #{tpu_custom_call.1}
  #allocation0 [shape = 'u32[]', space=smem, size = 0x4, offset = 0x4, fixed_abs, tag = 'smem constant byte address 0x4 - core index']
  #allocation1 [shape = 'u32[144,128]{1,0:T(1,128)}', space=vmem, size = 0x12000, scoped, tag = 'internal scratch']
  %s0 = inlined_call_operand.vmem [shape: f32[1000,48], index: 0, kind: input, shape index: {}]
  %s1 = inlined_call_operand.vmem [shape: f32[2,1,48], index: 1, kind: input, shape index: {}]
  %s2 = inlined_call_operand.vmem [shape: f32[2,48,48], index: 2, kind: input, shape index: {}]
  %s3 = inlined_call_operand.vmem [shape: f32[1000,48], index: 3, kind: output, shape index: {}]
  %s4 = sld [smem:[#allocation0]]
  $region93: #{tpu_custom_call.1} parent=0
    _
  %s6 = ssub.s32 1, %s4
  %s7 = scalar_select 0, %s6, %s4
  $region1: #{tpu_custom_call.1} parent=0
    #allocation2 [shape = 'u8[524288]{0}', space=vmem, size = 0x80000, scoped, tag = 'output window, operand 0']
    loop: start=0, step=1, limit=4
    $region2: #{tpu_custom_call.1} parent=1 // loop_pre_header
      _
    $region3: #{tpu_custom_call.1} parent=1 // loop_header
      %s9 = sphi 0, %s13
      %p10 = scmp.ge.s32.totalorder %s9, 4
      %s19 = sphi 0, %s21
      %s22 = sphi 0, %s19
      %s23 = sphi 0, %s22
      %s39 = sphi 0, %s23
      %s43 = sphi 0, %s43
      %s45 = sphi 0, %s43
      %s46 = sphi 0, %s45
      %s60 = sphi 0, %s46
      %s64 = sphi 0, %s64
      %s66 = sphi 0, %s64
      %s67 = sphi 0, %s66
      %s81 = sphi 0, %s67
      %s87 = sphi 0, %s89
      %s90 = sphi 0, %s87
      %s91 = sphi 0, %s90
      %s107 = sphi 0, %s91
    $region4: #{tpu_custom_call.1} parent=1 // loop_header_branch
      %12 = sbr.rel (%p10) target = $region8
    $region5: #{tpu_custom_call.1} parent=1 // loop_body
      %s14 = ssub.s32 %s9, 1
      %s15 = ssub.s32 %s9, 2
      %s16 = sadd.s32 %s9, 1
      %s17 = ssub.s32 %s9, %s16
      %p18 = scmp.eq.s32.totalorder %s17, 0
      %s20 = sadd.s32 %s19, 1
      %s21 = scalar_select %p18, %s19, %s20
      %p24 = pneg %p18
      %p25 = scmp.eq.s32.totalorder %s9, 1
      %p26 = por %p24, %p25
      %p27 = scmp.ne.s32.totalorder %s19, %s22
      %p28 = scmp.eq.s32.totalorder %s9, 0
      %p29 = por %p27, %p28
      %p30 = scmp.ne.s32.totalorder %s19, %s22
      %p31 = scmp.eq.s32.totalorder %s14, 1
      %p32 = por %p30, %p31
      %p33 = scmp.ne.s32.totalorder %s22, %s23
      %p34 = scmp.eq.s32.totalorder %s14, 0
      %p35 = por %p33, %p34
      %p36 = scmp.ne.s32.totalorder %s22, %s23
      %p37 = scmp.eq.s32.totalorder %s15, 1
      %p38 = por %p36, %p37
      %p40 = scmp.ne.s32.totalorder %s23, %s39
      %p41 = scmp.eq.s32.totalorder %s15, 0
      %p42 = por %p40, %p41
      %s44 = sadd.s32 %s43, 1
      %p47 = scmp.eq.s32.totalorder %s9, 1
      %p48 = scmp.ne.s32.totalorder %s43, %s45
      %p49 = scmp.eq.s32.totalorder %s9, 0
      %p50 = por %p48, %p49
      %p51 = scmp.ne.s32.totalorder %s43, %s45
      %p52 = scmp.eq.s32.totalorder %s14, 1
      %p53 = por %p51, %p52
      %p54 = scmp.ne.s32.totalorder %s45, %s46
      %p55 = scmp.eq.s32.totalorder %s14, 0
      %p56 = por %p54, %p55
      %p57 = scmp.ne.s32.totalorder %s45, %s46
      %p58 = scmp.eq.s32.totalorder %s15, 1
      %p59 = por %p57, %p58
      %p61 = scmp.ne.s32.totalorder %s46, %s60
      %p62 = scmp.eq.s32.totalorder %s15, 0
      %p63 = por %p61, %p62
      %s65 = sadd.s32 %s64, 1
      %p68 = scmp.eq.s32.totalorder %s9, 1
      %p69 = scmp.ne.s32.totalorder %s64, %s66
      %p70 = scmp.eq.s32.totalorder %s9, 0
      %p71 = por %p69, %p70
      %p72 = scmp.ne.s32.totalorder %s64, %s66
      %p73 = scmp.eq.s32.totalorder %s14, 1
      %p74 = por %p72, %p73
      %p75 = scmp.ne.s32.totalorder %s66, %s67
      %p76 = scmp.eq.s32.totalorder %s14, 0
      %p77 = por %p75, %p76
      %p78 = scmp.ne.s32.totalorder %s66, %s67
      %p79 = scmp.eq.s32.totalorder %s15, 1
      %p80 = por %p78, %p79
      %p82 = scmp.ne.s32.totalorder %s67, %s81
      %p83 = scmp.eq.s32.totalorder %s15, 0
      %p84 = por %p82, %p83
      %s85 = ssub.s32 %s9, %s16
      %p86 = scmp.eq.s32.totalorder %s85, 0
      %s88 = sadd.s32 %s87, 1
      %s89 = scalar_select %p86, %s87, %s88
      %p92 = pneg %p86
      %p93 = scmp.eq.s32.totalorder %s9, 1
      %p94 = por %p92, %p93
      %p95 = scmp.ne.s32.totalorder %s87, %s90
      %p96 = scmp.eq.s32.totalorder %s9, 0
      %p97 = por %p95, %p96
      %p98 = scmp.ne.s32.totalorder %s87, %s90
      %p99 = scmp.eq.s32.totalorder %s14, 1
      %p100 = por %p98, %p99
      %p101 = scmp.ne.s32.totalorder %s90, %s91
      %p102 = scmp.eq.s32.totalorder %s14, 0
      %p103 = por %p101, %p102
      %p104 = scmp.ne.s32.totalorder %s90, %s91
      %p105 = scmp.eq.s32.totalorder %s15, 1
      %p106 = por %p104, %p105
      %p108 = scmp.ne.s32.totalorder %s91, %s107
      %p109 = scmp.eq.s32.totalorder %s15, 0
      %p110 = por %p108, %p109
      %p111 = scmp.le.s32.totalorder 1, %s9
      %p112 = scmp.lt.s32.totalorder %s9, 3
      %p113 = pnand %p111, %p112
      %p114 = pneg %p113
      // Predicated region
      $region9: #{tpu_custom_call.1} parent=5 // pred_check
        _
      $region10: #{tpu_custom_call.1} parent=5 // pred_check_branch
        %116 = sbr.rel (%p113) target = $region12
      $region11: #{tpu_custom_call.1} parent=5 // pred_region
        %s117 = ssub.s32 %s9, 1
        // Predicated region
        $region13: #{tpu_custom_call.1} parent=11 // pred_check
          %p118 = pneg %p56
        $region14: #{tpu_custom_call.1} parent=11 // pred_check_branch
          %120 = sbr.rel (%p118) target = $region16
        $region15: #{tpu_custom_call.1} parent=11 // pred_region
          _
        $region16: #{tpu_custom_call.1} parent=11 // pred_fallthru
          _
        // Predicated region
        $region17: #{tpu_custom_call.1} parent=11 // pred_check
          %p121 = pneg %p77
        $region18: #{tpu_custom_call.1} parent=11 // pred_check_branch
          %123 = sbr.rel (%p121) target = $region20
        $region19: #{tpu_custom_call.1} parent=11 // pred_region
          _
        $region20: #{tpu_custom_call.1} parent=11 // pred_fallthru
          _
      $region12: #{tpu_custom_call.1} parent=5 // pred_fallthru
        _
      %p124 = scmp.lt.s32.totalorder %s9, 2
      // Predicated region
      $region21: #{tpu_custom_call.1} parent=5 // pred_check
        %p125 = pneg %p124
      $region22: #{tpu_custom_call.1} parent=5 // pred_check_branch
        %127 = sbr.rel (%p125) target = $region24
      $region23: #{tpu_custom_call.1} parent=5 // pred_region
        // Predicated region
        $region25: #{tpu_custom_call.1} parent=23 // pred_check
          %p128 = pneg %p29
        $region26: #{tpu_custom_call.1} parent=23 // pred_check_branch
          %130 = sbr.rel (%p128) target = $region28
        $region27: #{tpu_custom_call.1} parent=23 // pred_region
          %s131 = smul.u32 64, %s9
          %s132 = ssub.s32 125, %s131
          %p133 = scmp.lt.s32.totalorder %s132, 64
          %s134 = scalar_select %p133, %s132, 64
          %s135 = smul.u32 128, %s134
          %p136 = scmp.lt.s32.totalorder %s131, 124
          %s137 = scalar_select %p136, %s131, 124
          %s138 = smul.addr %s137, 8
          %s139 = scalar_lea.vmem %s0, %s138
          %s140 = smul.u32 64, %s9
          %s141 = ssub.s32 125, %s140
          %p142 = scmp.lt.s32.totalorder %s141, 64
          %s143 = scalar_select %p142, %s141, 64
          %s144 = smul.u32 128, %s143
        $region28: #{tpu_custom_call.1} parent=23 // pred_fallthru
          _
      $region24: #{tpu_custom_call.1} parent=5 // pred_fallthru
        _
      %p145 = scmp.le.s32.totalorder 1, %s9
      %p146 = scmp.lt.s32.totalorder %s9, 3
      %p147 = pnand %p145, %p146
      %p148 = pneg %p147
      // Predicated region
      $region29: #{tpu_custom_call.1} parent=5 // pred_check
        _
      $region30: #{tpu_custom_call.1} parent=5 // pred_check_branch
        %150 = sbr.rel (%p147) target = $region32
      $region31: #{tpu_custom_call.1} parent=5 // pred_region
        %s151 = ssub.s32 %s9, 1
        %s152 = smul.u32 64, %s14
        %s153 = ssub.s32 125, %s152
        %p154 = scmp.lt.s32.totalorder %s153, 64
        %s155 = scalar_select %p154, %s153, 64
        %s156 = smul.u32 128, %s155
        %p157 = scmp.lt.s32.totalorder %s152, 124
        %s158 = scalar_select %p157, %s152, 124
        %s159 = smul.addr %s158, 8
        %s160 = scalar_lea.vmem %s0, %s159
        %p161 = pneg %p35
        %p162 = pneg %p32
        %p163 = pneg %p56
        %p164 = pneg %p53
        %p165 = pneg %p77
        %p166 = pneg %p74
        %p167 = pneg %p103
        %p168 = pneg %p100
        %s169 = sand.u32 %s90, 1
        %s170 = sand.u32 %s90, 1
        %s171 = smul.addr %s170, 512
        %s172 = scalar_lea.vmem [#allocation2], %s171
        %s173 = smul.u32 64, %s14
        %s174 = ssub.s32 125, %s173
        %p175 = scmp.lt.s32.totalorder %s174, 64
        %s176 = scalar_select %p175, %s174, 64
        %s177 = smul.u32 128, %s176
        %p178 = scmp.lt.s32.totalorder %s173, 124
        %s179 = scalar_select %p178, %s173, 124
        %s180 = smul.addr %s179, 8
        %s181 = scalar_lea.vmem %s0, %s180
        %s182 = smul.u32 64, %s14
        %s183 = ssub.s32 125, %s182
        %p184 = scmp.lt.s32.totalorder %s183, 64
        %s185 = scalar_select %p184, %s183, 64
        %s186 = smul.u32 128, %s185
        %s187 = smul.u32 64, %s14
        %s188 = ssub.s32 125, %s187
        %p189 = scmp.lt.s32.totalorder %s188, 64
        %s190 = scalar_select %p189, %s188, 64
        %s191 = smul.u32 128, %s190
        %v192 = vld [vmem:[%s181] sm:$0xff]
        %v193 = vld [vmem:[%s181 + $0x8] sm:$0xff]
        %v194 = vld [vmem:[%s181 + $0x10] sm:$0xff]
        %v195 = vld [vmem:[%s181 + $0x18] sm:$0xff]
        %v196 = vld [vmem:[%s181 + $0x20] sm:$0xff]
        %v197 = vld [vmem:[%s181 + $0x28] sm:$0xff]
        %v198 = vld [vmem:[%s181 + $0x30] sm:$0xff]
        %v199 = vld [vmem:[%s181 + $0x38] sm:$0xff]
        %v200 = vld [vmem:[%s181 + $0x40] sm:$0xff]
        %v201 = vld [vmem:[%s181 + $0x48] sm:$0xff]
        %v202 = vld [vmem:[%s181 + $0x50] sm:$0xff]
        %v203 = vld [vmem:[%s181 + $0x58] sm:$0xff]
        %v204 = vld [vmem:[%s181 + $0x60] sm:$0xff]
        %v205 = vld [vmem:[%s181 + $0x68] sm:$0xff]
        %v206 = vld [vmem:[%s181 + $0x70] sm:$0xff]
        %v207 = vld [vmem:[%s181 + $0x78] sm:$0xff]
        %v208 = vld [vmem:[%s181 + $0x80] sm:$0xff]
        %v209 = vld [vmem:[%s181 + $0x88] sm:$0xff]
        %v210 = vld [vmem:[%s181 + $0x90] sm:$0xff]
        %v211 = vld [vmem:[%s181 + $0x98] sm:$0xff]
        %v212 = vld [vmem:[%s181 + $0xa0] sm:$0xff]
        %v213 = vld [vmem:[%s181 + $0xa8] sm:$0xff]
        %v214 = vld [vmem:[%s181 + $0xb0] sm:$0xff]
        %v215 = vld [vmem:[%s181 + $0xb8] sm:$0xff]
        %v216 = vld [vmem:[%s181 + $0xc0] sm:$0xff]
        %v217 = vld [vmem:[%s181 + $0xc8] sm:$0xff]
        %v218 = vld [vmem:[%s181 + $0xd0] sm:$0xff]
        %v219 = vld [vmem:[%s181 + $0xd8] sm:$0xff]
        %v220 = vld [vmem:[%s181 + $0xe0] sm:$0xff]
        %v221 = vld [vmem:[%s181 + $0xe8] sm:$0xff]
        %v222 = vld [vmem:[%s181 + $0xf0] sm:$0xff]
        %v223 = vld [vmem:[%s181 + $0xf8] sm:$0xff]
        %v224 = vld [vmem:[%s181 + $0x100] sm:$0xff]
        %v225 = vld [vmem:[%s181 + $0x108] sm:$0xff]
        %v226 = vld [vmem:[%s181 + $0x110] sm:$0xff]
        %v227 = vld [vmem:[%s181 + $0x118] sm:$0xff]
        %v228 = vld [vmem:[%s181 + $0x120] sm:$0xff]
        %v229 = vld [vmem:[%s181 + $0x128] sm:$0xff]
        %v230 = vld [vmem:[%s181 + $0x130] sm:$0xff]
        %v231 = vld [vmem:[%s181 + $0x138] sm:$0xff]
        %v232 = vld [vmem:[%s181 + $0x140] sm:$0xff]
        %v233 = vld [vmem:[%s181 + $0x148] sm:$0xff]
        %v234 = vld [vmem:[%s181 + $0x150] sm:$0xff]
        %v235 = vld [vmem:[%s181 + $0x158] sm:$0xff]
        %v236 = vld [vmem:[%s181 + $0x160] sm:$0xff]
        %v237 = vld [vmem:[%s181 + $0x168] sm:$0xff]
        %v238 = vld [vmem:[%s181 + $0x170] sm:$0xff]
        %v239 = vld [vmem:[%s181 + $0x178] sm:$0xff]
        %v240 = vld [vmem:[%s181 + $0x180] sm:$0xff]
        %v241 = vld [vmem:[%s181 + $0x188] sm:$0xff]
        %v242 = vld [vmem:[%s181 + $0x190] sm:$0xff]
        %v243 = vld [vmem:[%s181 + $0x198] sm:$0xff]
        %v244 = vld [vmem:[%s181 + $0x1a0] sm:$0xff]
        %v245 = vld [vmem:[%s181 + $0x1a8] sm:$0xff]
        %v246 = vld [vmem:[%s181 + $0x1b0] sm:$0xff]
        %v247 = vld [vmem:[%s181 + $0x1b8] sm:$0xff]
        %v248 = vld [vmem:[%s181 + $0x1c0] sm:$0xff]
        %v249 = vld [vmem:[%s181 + $0x1c8] sm:$0xff]
        %v250 = vld [vmem:[%s181 + $0x1d0] sm:$0xff]
        %v251 = vld [vmem:[%s181 + $0x1d8] sm:$0xff]
        %v252 = vld [vmem:[%s181 + $0x1e0] sm:$0xff]
        %v253 = vld [vmem:[%s181 + $0x1e8] sm:$0xff]
        %v254 = vld [vmem:[%s181 + $0x1f0] sm:$0xff]
        %v255 = vld [vmem:[%s181 + $0x1f8] sm:$0xff]
        %v256 = vmul.f32 %v192, %v192
        %v257 = vmul.f32 %v193, %v193
        %v258 = vmul.f32 %v194, %v194
        %v259 = vmul.f32 %v195, %v195
        %v260 = vmul.f32 %v196, %v196
        %v261 = vmul.f32 %v197, %v197
        %v262 = vmul.f32 %v198, %v198
        %v263 = vmul.f32 %v199, %v199
        %v264 = vmul.f32 %v200, %v200
        %v265 = vmul.f32 %v201, %v201
        %v266 = vmul.f32 %v202, %v202
        %v267 = vmul.f32 %v203, %v203
        %v268 = vmul.f32 %v204, %v204
        %v269 = vmul.f32 %v205, %v205
        %v270 = vmul.f32 %v206, %v206
        %v271 = vmul.f32 %v207, %v207
        %v272 = vmul.f32 %v208, %v208
        %v273 = vmul.f32 %v209, %v209
        %v274 = vmul.f32 %v210, %v210
        %v275 = vmul.f32 %v211, %v211
        %v276 = vmul.f32 %v212, %v212
        %v277 = vmul.f32 %v213, %v213
        %v278 = vmul.f32 %v214, %v214
        %v279 = vmul.f32 %v215, %v215
        %v280 = vmul.f32 %v216, %v216
        %v281 = vmul.f32 %v217, %v217
        %v282 = vmul.f32 %v218, %v218
        %v283 = vmul.f32 %v219, %v219
        %v284 = vmul.f32 %v220, %v220
        %v285 = vmul.f32 %v221, %v221
        %v286 = vmul.f32 %v222, %v222
        %v287 = vmul.f32 %v223, %v223
        %v288 = vmul.f32 %v224, %v224
        %v289 = vmul.f32 %v225, %v225
        %v290 = vmul.f32 %v226, %v226
        %v291 = vmul.f32 %v227, %v227
        %v292 = vmul.f32 %v228, %v228
        %v293 = vmul.f32 %v229, %v229
        %v294 = vmul.f32 %v230, %v230
        %v295 = vmul.f32 %v231, %v231
        %v296 = vmul.f32 %v232, %v232
        %v297 = vmul.f32 %v233, %v233
        %v298 = vmul.f32 %v234, %v234
        %v299 = vmul.f32 %v235, %v235
        %v300 = vmul.f32 %v236, %v236
        %v301 = vmul.f32 %v237, %v237
        %v302 = vmul.f32 %v238, %v238
        %v303 = vmul.f32 %v239, %v239
        %v304 = vmul.f32 %v240, %v240
        %v305 = vmul.f32 %v241, %v241
        %v306 = vmul.f32 %v242, %v242
        %v307 = vmul.f32 %v243, %v243
        %v308 = vmul.f32 %v244, %v244
        %v309 = vmul.f32 %v245, %v245
        %v310 = vmul.f32 %v246, %v246
        %v311 = vmul.f32 %v247, %v247
        %v312 = vmul.f32 %v248, %v248
        %v313 = vmul.f32 %v249, %v249
        %v314 = vmul.f32 %v250, %v250
        %v315 = vmul.f32 %v251, %v251
        %v316 = vmul.f32 %v252, %v252
        %v317 = vmul.f32 %v253, %v253
        %v318 = vmul.f32 %v254, %v254
        %v319 = vmul.f32 %v255, %v255
        %vm320 = vcmask 392192
        %v321 = vsel %vm320, %v256, 0.0
        %322 = vadd.xlane.f32.xlu0 %v321
        %v323 = vpop.xlane.xlu0 %322
        %v324 = vsel %vm320, %v257, 0.0
        %325 = vadd.xlane.f32.xlu0 %v324
        %v326 = vpop.xlane.xlu0 %325
        %v327 = vsel %vm320, %v258, 0.0
        %328 = vadd.xlane.f32.xlu0 %v327
        %v329 = vpop.xlane.xlu0 %328
        %v330 = vsel %vm320, %v259, 0.0
        %331 = vadd.xlane.f32.xlu0 %v330
        %v332 = vpop.xlane.xlu0 %331
        %v333 = vsel %vm320, %v260, 0.0
        %334 = vadd.xlane.f32.xlu0 %v333
        %v335 = vpop.xlane.xlu0 %334
        %v336 = vsel %vm320, %v261, 0.0
        %337 = vadd.xlane.f32.xlu0 %v336
        %v338 = vpop.xlane.xlu0 %337
        %v339 = vsel %vm320, %v262, 0.0
        %340 = vadd.xlane.f32.xlu0 %v339
        %v341 = vpop.xlane.xlu0 %340
        %v342 = vsel %vm320, %v263, 0.0
        %343 = vadd.xlane.f32.xlu0 %v342
        %v344 = vpop.xlane.xlu0 %343
        %v345 = vsel %vm320, %v264, 0.0
        %346 = vadd.xlane.f32.xlu0 %v345
        %v347 = vpop.xlane.xlu0 %346
        %v348 = vsel %vm320, %v265, 0.0
        %349 = vadd.xlane.f32.xlu0 %v348
        %v350 = vpop.xlane.xlu0 %349
        %v351 = vsel %vm320, %v266, 0.0
        %352 = vadd.xlane.f32.xlu0 %v351
        %v353 = vpop.xlane.xlu0 %352
        %v354 = vsel %vm320, %v267, 0.0
        %355 = vadd.xlane.f32.xlu0 %v354
        %v356 = vpop.xlane.xlu0 %355
        %v357 = vsel %vm320, %v268, 0.0
        %358 = vadd.xlane.f32.xlu0 %v357
        %v359 = vpop.xlane.xlu0 %358
        %v360 = vsel %vm320, %v269, 0.0
        %361 = vadd.xlane.f32.xlu0 %v360
        %v362 = vpop.xlane.xlu0 %361
        %v363 = vsel %vm320, %v270, 0.0
        %364 = vadd.xlane.f32.xlu0 %v363
        %v365 = vpop.xlane.xlu0 %364
        %v366 = vsel %vm320, %v271, 0.0
        %367 = vadd.xlane.f32.xlu0 %v366
        %v368 = vpop.xlane.xlu0 %367
        %v369 = vsel %vm320, %v272, 0.0
        %370 = vadd.xlane.f32.xlu0 %v369
        %v371 = vpop.xlane.xlu0 %370
        %v372 = vsel %vm320, %v273, 0.0
        %373 = vadd.xlane.f32.xlu0 %v372
        %v374 = vpop.xlane.xlu0 %373
        %v375 = vsel %vm320, %v274, 0.0
        %376 = vadd.xlane.f32.xlu0 %v375
        %v377 = vpop.xlane.xlu0 %376
        %v378 = vsel %vm320, %v275, 0.0
        %379 = vadd.xlane.f32.xlu0 %v378
        %v380 = vpop.xlane.xlu0 %379
        %v381 = vsel %vm320, %v276, 0.0
        %382 = vadd.xlane.f32.xlu0 %v381
        %v383 = vpop.xlane.xlu0 %382
        %v384 = vsel %vm320, %v277, 0.0
        %385 = vadd.xlane.f32.xlu0 %v384
        %v386 = vpop.xlane.xlu0 %385
        %v387 = vsel %vm320, %v278, 0.0
        %388 = vadd.xlane.f32.xlu0 %v387
        %v389 = vpop.xlane.xlu0 %388
        %v390 = vsel %vm320, %v279, 0.0
        %391 = vadd.xlane.f32.xlu0 %v390
        %v392 = vpop.xlane.xlu0 %391
        %v393 = vsel %vm320, %v280, 0.0
        %394 = vadd.xlane.f32.xlu0 %v393
        %v395 = vpop.xlane.xlu0 %394
        %v396 = vsel %vm320, %v281, 0.0
        %397 = vadd.xlane.f32.xlu0 %v396
        %v398 = vpop.xlane.xlu0 %397
        %v399 = vsel %vm320, %v282, 0.0
        %400 = vadd.xlane.f32.xlu0 %v399
        %v401 = vpop.xlane.xlu0 %400
        %v402 = vsel %vm320, %v283, 0.0
        %403 = vadd.xlane.f32.xlu0 %v402
        %v404 = vpop.xlane.xlu0 %403
        %v405 = vsel %vm320, %v284, 0.0
        %406 = vadd.xlane.f32.xlu0 %v405
        %v407 = vpop.xlane.xlu0 %406
        %v408 = vsel %vm320, %v285, 0.0
        %409 = vadd.xlane.f32.xlu0 %v408
        %v410 = vpop.xlane.xlu0 %409
        %v411 = vsel %vm320, %v286, 0.0
        %412 = vadd.xlane.f32.xlu0 %v411
        %v413 = vpop.xlane.xlu0 %412
        %v414 = vsel %vm320, %v287, 0.0
        %415 = vadd.xlane.f32.xlu0 %v414
        %v416 = vpop.xlane.xlu0 %415
        %v417 = vsel %vm320, %v288, 0.0
        %418 = vadd.xlane.f32.xlu0 %v417
        %v419 = vpop.xlane.xlu0 %418
        %v420 = vsel %vm320, %v289, 0.0
        %421 = vadd.xlane.f32.xlu0 %v420
        %v422 = vpop.xlane.xlu0 %421
        %v423 = vsel %vm320, %v290, 0.0
        %424 = vadd.xlane.f32.xlu0 %v423
        %v425 = vpop.xlane.xlu0 %424
        %v426 = vsel %vm320, %v291, 0.0
        %427 = vadd.xlane.f32.xlu0 %v426
        %v428 = vpop.xlane.xlu0 %427
        %v429 = vsel %vm320, %v292, 0.0
        %430 = vadd.xlane.f32.xlu0 %v429
        %v431 = vpop.xlane.xlu0 %430
        %v432 = vsel %vm320, %v293, 0.0
        %433 = vadd.xlane.f32.xlu0 %v432
        %v434 = vpop.xlane.xlu0 %433
        %v435 = vsel %vm320, %v294, 0.0
        %436 = vadd.xlane.f32.xlu0 %v435
        %v437 = vpop.xlane.xlu0 %436
        %v438 = vsel %vm320, %v295, 0.0
        %439 = vadd.xlane.f32.xlu0 %v438
        %v440 = vpop.xlane.xlu0 %439
        %v441 = vsel %vm320, %v296, 0.0
        %442 = vadd.xlane.f32.xlu0 %v441
        %v443 = vpop.xlane.xlu0 %442
        %v444 = vsel %vm320, %v297, 0.0
        %445 = vadd.xlane.f32.xlu0 %v444
        %v446 = vpop.xlane.xlu0 %445
        %v447 = vsel %vm320, %v298, 0.0
        %448 = vadd.xlane.f32.xlu0 %v447
        %v449 = vpop.xlane.xlu0 %448
        %v450 = vsel %vm320, %v299, 0.0
        %451 = vadd.xlane.f32.xlu0 %v450
        %v452 = vpop.xlane.xlu0 %451
        %v453 = vsel %vm320, %v300, 0.0
        %454 = vadd.xlane.f32.xlu0 %v453
        %v455 = vpop.xlane.xlu0 %454
        %v456 = vsel %vm320, %v301, 0.0
        %457 = vadd.xlane.f32.xlu0 %v456
        %v458 = vpop.xlane.xlu0 %457
        %v459 = vsel %vm320, %v302, 0.0
        %460 = vadd.xlane.f32.xlu0 %v459
        %v461 = vpop.xlane.xlu0 %460
        %v462 = vsel %vm320, %v303, 0.0
        %463 = vadd.xlane.f32.xlu0 %v462
        %v464 = vpop.xlane.xlu0 %463
        %v465 = vsel %vm320, %v304, 0.0
        %466 = vadd.xlane.f32.xlu0 %v465
        %v467 = vpop.xlane.xlu0 %466
        %v468 = vsel %vm320, %v305, 0.0
        %469 = vadd.xlane.f32.xlu0 %v468
        %v470 = vpop.xlane.xlu0 %469
        %v471 = vsel %vm320, %v306, 0.0
        %472 = vadd.xlane.f32.xlu0 %v471
        %v473 = vpop.xlane.xlu0 %472
        %v474 = vsel %vm320, %v307, 0.0
        %475 = vadd.xlane.f32.xlu0 %v474
        %v476 = vpop.xlane.xlu0 %475
        %v477 = vsel %vm320, %v308, 0.0
        %478 = vadd.xlane.f32.xlu0 %v477
        %v479 = vpop.xlane.xlu0 %478
        %v480 = vsel %vm320, %v309, 0.0
        %481 = vadd.xlane.f32.xlu0 %v480
        %v482 = vpop.xlane.xlu0 %481
        %v483 = vsel %vm320, %v310, 0.0
        %484 = vadd.xlane.f32.xlu0 %v483
        %v485 = vpop.xlane.xlu0 %484
        %v486 = vsel %vm320, %v311, 0.0
        %487 = vadd.xlane.f32.xlu0 %v486
        %v488 = vpop.xlane.xlu0 %487
        %v489 = vsel %vm320, %v312, 0.0
        %490 = vadd.xlane.f32.xlu0 %v489
        %v491 = vpop.xlane.xlu0 %490
        %v492 = vsel %vm320, %v313, 0.0
        %493 = vadd.xlane.f32.xlu0 %v492
        %v494 = vpop.xlane.xlu0 %493
        %v495 = vsel %vm320, %v314, 0.0
        %496 = vadd.xlane.f32.xlu0 %v495
        %v497 = vpop.xlane.xlu0 %496
        %v498 = vsel %vm320, %v315, 0.0
        %499 = vadd.xlane.f32.xlu0 %v498
        %v500 = vpop.xlane.xlu0 %499
        %v501 = vsel %vm320, %v316, 0.0
        %502 = vadd.xlane.f32.xlu0 %v501
        %v503 = vpop.xlane.xlu0 %502
        %v504 = vsel %vm320, %v317, 0.0
        %505 = vadd.xlane.f32.xlu0 %v504
        %v506 = vpop.xlane.xlu0 %505
        %v507 = vsel %vm320, %v318, 0.0
        %508 = vadd.xlane.f32.xlu0 %v507
        %v509 = vpop.xlane.xlu0 %508
        %v510 = vsel %vm320, %v319, 0.0
        %511 = vadd.xlane.f32.xlu0 %v510
        %v512 = vpop.xlane.xlu0 %511
        %v513 = vrcp.pop 48.0
        %v514 = vmul.f32 %v323, %v513
        %v515 = vmul.f32 %v326, %v513
        %v516 = vmul.f32 %v329, %v513
        %v517 = vmul.f32 %v332, %v513
        %v518 = vmul.f32 %v335, %v513
        %v519 = vmul.f32 %v338, %v513
        %v520 = vmul.f32 %v341, %v513
        %v521 = vmul.f32 %v344, %v513
        %v522 = vmul.f32 %v347, %v513
        %v523 = vmul.f32 %v350, %v513
        %v524 = vmul.f32 %v353, %v513
        %v525 = vmul.f32 %v356, %v513
        %v526 = vmul.f32 %v359, %v513
        %v527 = vmul.f32 %v362, %v513
        %v528 = vmul.f32 %v365, %v513
        %v529 = vmul.f32 %v368, %v513
        %v530 = vmul.f32 %v371, %v513
        %v531 = vmul.f32 %v374, %v513
        %v532 = vmul.f32 %v377, %v513
        %v533 = vmul.f32 %v380, %v513
        %v534 = vmul.f32 %v383, %v513
        %v535 = vmul.f32 %v386, %v513
        %v536 = vmul.f32 %v389, %v513
        %v537 = vmul.f32 %v392, %v513
        %v538 = vmul.f32 %v395, %v513
        %v539 = vmul.f32 %v398, %v513
        %v540 = vmul.f32 %v401, %v513
        %v541 = vmul.f32 %v404, %v513
        %v542 = vmul.f32 %v407, %v513
        %v543 = vmul.f32 %v410, %v513
        %v544 = vmul.f32 %v413, %v513
        %v545 = vmul.f32 %v416, %v513
        %v546 = vmul.f32 %v419, %v513
        %v547 = vmul.f32 %v422, %v513
        %v548 = vmul.f32 %v425, %v513
        %v549 = vmul.f32 %v428, %v513
        %v550 = vmul.f32 %v431, %v513
        %v551 = vmul.f32 %v434, %v513
        %v552 = vmul.f32 %v437, %v513
        %v553 = vmul.f32 %v440, %v513
        %v554 = vmul.f32 %v443, %v513
        %v555 = vmul.f32 %v446, %v513
        %v556 = vmul.f32 %v449, %v513
        %v557 = vmul.f32 %v452, %v513
        %v558 = vmul.f32 %v455, %v513
        %v559 = vmul.f32 %v458, %v513
        %v560 = vmul.f32 %v461, %v513
        %v561 = vmul.f32 %v464, %v513
        %v562 = vmul.f32 %v467, %v513
        %v563 = vmul.f32 %v470, %v513
        %v564 = vmul.f32 %v473, %v513
        %v565 = vmul.f32 %v476, %v513
        %v566 = vmul.f32 %v479, %v513
        %v567 = vmul.f32 %v482, %v513
        %v568 = vmul.f32 %v485, %v513
        %v569 = vmul.f32 %v488, %v513
        %v570 = vmul.f32 %v491, %v513
        %v571 = vmul.f32 %v494, %v513
        %v572 = vmul.f32 %v497, %v513
        %v573 = vmul.f32 %v500, %v513
        %v574 = vmul.f32 %v503, %v513
        %v575 = vmul.f32 %v506, %v513
        %v576 = vmul.f32 %v509, %v513
        %v577 = vmul.f32 %v512, %v513
        %v578 = vld [vmem:[%s1] sm:$0x1]
        %v579 = vadd.f32 %v514, 1e-06
        %v580 = vadd.f32 %v515, 1e-06
        %v581 = vadd.f32 %v516, 1e-06
        %v582 = vadd.f32 %v517, 1e-06
        %v583 = vadd.f32 %v518, 1e-06
        %v584 = vadd.f32 %v519, 1e-06
        %v585 = vadd.f32 %v520, 1e-06
        %v586 = vadd.f32 %v521, 1e-06
        %v587 = vadd.f32 %v522, 1e-06
        %v588 = vadd.f32 %v523, 1e-06
        %v589 = vadd.f32 %v524, 1e-06
        %v590 = vadd.f32 %v525, 1e-06
        %v591 = vadd.f32 %v526, 1e-06
        %v592 = vadd.f32 %v527, 1e-06
        %v593 = vadd.f32 %v528, 1e-06
        %v594 = vadd.f32 %v529, 1e-06
        %v595 = vadd.f32 %v530, 1e-06
        %v596 = vadd.f32 %v531, 1e-06
        %v597 = vadd.f32 %v532, 1e-06
        %v598 = vadd.f32 %v533, 1e-06
        %v599 = vadd.f32 %v534, 1e-06
        %v600 = vadd.f32 %v535, 1e-06
        %v601 = vadd.f32 %v536, 1e-06
        %v602 = vadd.f32 %v537, 1e-06
        %v603 = vadd.f32 %v538, 1e-06
        %v604 = vadd.f32 %v539, 1e-06
        %v605 = vadd.f32 %v540, 1e-06
        %v606 = vadd.f32 %v541, 1e-06
        %v607 = vadd.f32 %v542, 1e-06
        %v608 = vadd.f32 %v543, 1e-06
        %v609 = vadd.f32 %v544, 1e-06
        %v610 = vadd.f32 %v545, 1e-06
        %v611 = vadd.f32 %v546, 1e-06
        %v612 = vadd.f32 %v547, 1e-06
        %v613 = vadd.f32 %v548, 1e-06
        %v614 = vadd.f32 %v549, 1e-06
        %v615 = vadd.f32 %v550, 1e-06
        %v616 = vadd.f32 %v551, 1e-06
        %v617 = vadd.f32 %v552, 1e-06
        %v618 = vadd.f32 %v553, 1e-06
        %v619 = vadd.f32 %v554, 1e-06
        %v620 = vadd.f32 %v555, 1e-06
        %v621 = vadd.f32 %v556, 1e-06
        %v622 = vadd.f32 %v557, 1e-06
        %v623 = vadd.f32 %v558, 1e-06
        %v624 = vadd.f32 %v559, 1e-06
        %v625 = vadd.f32 %v560, 1e-06
        %v626 = vadd.f32 %v561, 1e-06
        %v627 = vadd.f32 %v562, 1e-06
        %v628 = vadd.f32 %v563, 1e-06
        %v629 = vadd.f32 %v564, 1e-06
        %v630 = vadd.f32 %v565, 1e-06
        %v631 = vadd.f32 %v566, 1e-06
        %v632 = vadd.f32 %v567, 1e-06
        %v633 = vadd.f32 %v568, 1e-06
        %v634 = vadd.f32 %v569, 1e-06
        %v635 = vadd.f32 %v570, 1e-06
        %v636 = vadd.f32 %v571, 1e-06
        %v637 = vadd.f32 %v572, 1e-06
        %v638 = vadd.f32 %v573, 1e-06
        %v639 = vadd.f32 %v574, 1e-06
        %v640 = vadd.f32 %v575, 1e-06
        %v641 = vadd.f32 %v576, 1e-06
        %v642 = vadd.f32 %v577, 1e-06
        %v643 = vrsqrt.pop %v579
        %v644 = vrsqrt.pop %v580
        %v645 = vrsqrt.pop %v581
        %v646 = vrsqrt.pop %v582
        %v647 = vrsqrt.pop %v583
        %v648 = vrsqrt.pop %v584
        %v649 = vrsqrt.pop %v585
        %v650 = vrsqrt.pop %v586
        %v651 = vrsqrt.pop %v587
        %v652 = vrsqrt.pop %v588
        %v653 = vrsqrt.pop %v589
        %v654 = vrsqrt.pop %v590
        %v655 = vrsqrt.pop %v591
        %v656 = vrsqrt.pop %v592
        %v657 = vrsqrt.pop %v593
        %v658 = vrsqrt.pop %v594
        %v659 = vrsqrt.pop %v595
        %v660 = vrsqrt.pop %v596
        %v661 = vrsqrt.pop %v597
        %v662 = vrsqrt.pop %v598
        %v663 = vrsqrt.pop %v599
        %v664 = vrsqrt.pop %v600
        %v665 = vrsqrt.pop %v601
        %v666 = vrsqrt.pop %v602
        %v667 = vrsqrt.pop %v603
        %v668 = vrsqrt.pop %v604
        %v669 = vrsqrt.pop %v605
        %v670 = vrsqrt.pop %v606
        %v671 = vrsqrt.pop %v607
        %v672 = vrsqrt.pop %v608
        %v673 = vrsqrt.pop %v609
        %v674 = vrsqrt.pop %v610
        %v675 = vrsqrt.pop %v611
        %v676 = vrsqrt.pop %v612
        %v677 = vrsqrt.pop %v613
        %v678 = vrsqrt.pop %v614
        %v679 = vrsqrt.pop %v615
        %v680 = vrsqrt.pop %v616
        %v681 = vrsqrt.pop %v617
        %v682 = vrsqrt.pop %v618
        %v683 = vrsqrt.pop %v619
        %v684 = vrsqrt.pop %v620
        %v685 = vrsqrt.pop %v621
        %v686 = vrsqrt.pop %v622
        %v687 = vrsqrt.pop %v623
        %v688 = vrsqrt.pop %v624
        %v689 = vrsqrt.pop %v625
        %v690 = vrsqrt.pop %v626
        %v691 = vrsqrt.pop %v627
        %v692 = vrsqrt.pop %v628
        %v693 = vrsqrt.pop %v629
        %v694 = vrsqrt.pop %v630
        %v695 = vrsqrt.pop %v631
        %v696 = vrsqrt.pop %v632
        %v697 = vrsqrt.pop %v633
        %v698 = vrsqrt.pop %v634
        %v699 = vrsqrt.pop %v635
        %v700 = vrsqrt.pop %v636
        %v701 = vrsqrt.pop %v637
        %v702 = vrsqrt.pop %v638
        %v703 = vrsqrt.pop %v639
        %v704 = vrsqrt.pop %v640
        %v705 = vrsqrt.pop %v641
        %v706 = vrsqrt.pop %v642
        %v707 = vmul.f32 %v192, %v643
        %v708 = vmul.f32 %v193, %v644
        %v709 = vmul.f32 %v194, %v645
        %v710 = vmul.f32 %v195, %v646
        %v711 = vmul.f32 %v196, %v647
        %v712 = vmul.f32 %v197, %v648
        %v713 = vmul.f32 %v198, %v649
        %v714 = vmul.f32 %v199, %v650
        %v715 = vmul.f32 %v200, %v651
        %v716 = vmul.f32 %v201, %v652
        %v717 = vmul.f32 %v202, %v653
        %v718 = vmul.f32 %v203, %v654
        %v719 = vmul.f32 %v204, %v655
        %v720 = vmul.f32 %v205, %v656
        %v721 = vmul.f32 %v206, %v657
        %v722 = vmul.f32 %v207, %v658
        %v723 = vmul.f32 %v208, %v659
        %v724 = vmul.f32 %v209, %v660
        %v725 = vmul.f32 %v210, %v661
        %v726 = vmul.f32 %v211, %v662
        %v727 = vmul.f32 %v212, %v663
        %v728 = vmul.f32 %v213, %v664
        %v729 = vmul.f32 %v214, %v665
        %v730 = vmul.f32 %v215, %v666
        %v731 = vmul.f32 %v216, %v667
        %v732 = vmul.f32 %v217, %v668
        %v733 = vmul.f32 %v218, %v669
        %v734 = vmul.f32 %v219, %v670
        %v735 = vmul.f32 %v220, %v671
        %v736 = vmul.f32 %v221, %v672
        %v737 = vmul.f32 %v222, %v673
        %v738 = vmul.f32 %v223, %v674
        %v739 = vmul.f32 %v224, %v675
        %v740 = vmul.f32 %v225, %v676
        %v741 = vmul.f32 %v226, %v677
        %v742 = vmul.f32 %v227, %v678
        %v743 = vmul.f32 %v228, %v679
        %v744 = vmul.f32 %v229, %v680
        %v745 = vmul.f32 %v230, %v681
        %v746 = vmul.f32 %v231, %v682
        %v747 = vmul.f32 %v232, %v683
        %v748 = vmul.f32 %v233, %v684
        %v749 = vmul.f32 %v234, %v685
        %v750 = vmul.f32 %v235, %v686
        %v751 = vmul.f32 %v236, %v687
        %v752 = vmul.f32 %v237, %v688
        %v753 = vmul.f32 %v238, %v689
        %v754 = vmul.f32 %v239, %v690
        %v755 = vmul.f32 %v240, %v691
        %v756 = vmul.f32 %v241, %v692
        %v757 = vmul.f32 %v242, %v693
        %v758 = vmul.f32 %v243, %v694
        %v759 = vmul.f32 %v244, %v695
        %v760 = vmul.f32 %v245, %v696
        %v761 = vmul.f32 %v246, %v697
        %v762 = vmul.f32 %v247, %v698
        %v763 = vmul.f32 %v248, %v699
        %v764 = vmul.f32 %v249, %v700
        %v765 = vmul.f32 %v250, %v701
        %v766 = vmul.f32 %v251, %v702
        %v767 = vmul.f32 %v252, %v703
        %v768 = vmul.f32 %v253, %v704
        %v769 = vmul.f32 %v254, %v705
        %v770 = vmul.f32 %v255, %v706
        %v772 = vlaneseq
        %v773 = vshrl.u32 %v772, 7
        %v774 = vsub.s32 0, %v773
        %v775 = vrot.slane %v578, %v774
        %v777 = vmul.f32 %v775, %v707
        %v778 = vmul.f32 %v775, %v708
        %v779 = vmul.f32 %v775, %v709
        %v780 = vmul.f32 %v775, %v710
        %v781 = vmul.f32 %v775, %v711
        %v782 = vmul.f32 %v775, %v712
        %v783 = vmul.f32 %v775, %v713
        %v784 = vmul.f32 %v775, %v714
        %v785 = vmul.f32 %v775, %v715
        %v786 = vmul.f32 %v775, %v716
        %v787 = vmul.f32 %v775, %v717
        %v788 = vmul.f32 %v775, %v718
        %v789 = vmul.f32 %v775, %v719
        %v790 = vmul.f32 %v775, %v720
        %v791 = vmul.f32 %v775, %v721
        %v792 = vmul.f32 %v775, %v722
        %v793 = vmul.f32 %v775, %v723
        %v794 = vmul.f32 %v775, %v724
        %v795 = vmul.f32 %v775, %v725
        %v796 = vmul.f32 %v775, %v726
        %v797 = vmul.f32 %v775, %v727
        %v798 = vmul.f32 %v775, %v728
        %v799 = vmul.f32 %v775, %v729
        %v800 = vmul.f32 %v775, %v730
        %v801 = vmul.f32 %v775, %v731
        %v802 = vmul.f32 %v775, %v732
        %v803 = vmul.f32 %v775, %v733
        %v804 = vmul.f32 %v775, %v734
        %v805 = vmul.f32 %v775, %v735
        %v806 = vmul.f32 %v775, %v736
        %v807 = vmul.f32 %v775, %v737
        %v808 = vmul.f32 %v775, %v738
        %v809 = vmul.f32 %v775, %v739
        %v810 = vmul.f32 %v775, %v740
        %v811 = vmul.f32 %v775, %v741
        %v812 = vmul.f32 %v775, %v742
        %v813 = vmul.f32 %v775, %v743
        %v814 = vmul.f32 %v775, %v744
        %v815 = vmul.f32 %v775, %v745
        %v816 = vmul.f32 %v775, %v746
        %v817 = vmul.f32 %v775, %v747
        %v818 = vmul.f32 %v775, %v748
        %v819 = vmul.f32 %v775, %v749
        %v820 = vmul.f32 %v775, %v750
        %v821 = vmul.f32 %v775, %v751
        %v822 = vmul.f32 %v775, %v752
        %v823 = vmul.f32 %v775, %v753
        %v824 = vmul.f32 %v775, %v754
        %v825 = vmul.f32 %v775, %v755
        %v826 = vmul.f32 %v775, %v756
        %v827 = vmul.f32 %v775, %v757
        %v828 = vmul.f32 %v775, %v758
        %v829 = vmul.f32 %v775, %v759
        %v830 = vmul.f32 %v775, %v760
        %v831 = vmul.f32 %v775, %v761
        %v832 = vmul.f32 %v775, %v762
        %v833 = vmul.f32 %v775, %v763
        %v834 = vmul.f32 %v775, %v764
        %v835 = vmul.f32 %v775, %v765
        %v836 = vmul.f32 %v775, %v766
        %v837 = vmul.f32 %v775, %v767
        %v838 = vmul.f32 %v775, %v768
        %v839 = vmul.f32 %v775, %v769
        %v840 = vmul.f32 %v775, %v770
        %v841 = vld [vmem:[%s2] sm:$0xff]
        %v842 = vld [vmem:[%s2 + $0x8] sm:$0xff]
        %v843 = vld [vmem:[%s2 + $0x10] sm:$0xff]
        %v844 = vld [vmem:[%s2 + $0x18] sm:$0xff]
        %v845 = vld [vmem:[%s2 + $0x20] sm:$0xff]
        %v846 = vld [vmem:[%s2 + $0x28] sm:$0xff]
        %v848 = vsel %vm320, %v777, 0
        %v851 = vsel %vm320, %v778, 0
        %v854 = vsel %vm320, %v779, 0
        %v857 = vsel %vm320, %v780, 0
        %v860 = vsel %vm320, %v781, 0
        %v863 = vsel %vm320, %v782, 0
        %v866 = vsel %vm320, %v783, 0
        %v869 = vsel %vm320, %v784, 0
        %v872 = vsel %vm320, %v785, 0
        %v875 = vsel %vm320, %v786, 0
        %v878 = vsel %vm320, %v787, 0
        %v881 = vsel %vm320, %v788, 0
        %v884 = vsel %vm320, %v789, 0
        %v887 = vsel %vm320, %v790, 0
        %v890 = vsel %vm320, %v791, 0
        %v893 = vsel %vm320, %v792, 0
        %v896 = vsel %vm320, %v793, 0
        %v899 = vsel %vm320, %v794, 0
        %v902 = vsel %vm320, %v795, 0
        %v905 = vsel %vm320, %v796, 0
        %v908 = vsel %vm320, %v797, 0
        %v911 = vsel %vm320, %v798, 0
        %v914 = vsel %vm320, %v799, 0
        %v917 = vsel %vm320, %v800, 0
        %v920 = vsel %vm320, %v801, 0
        %v923 = vsel %vm320, %v802, 0
        %v926 = vsel %vm320, %v803, 0
        %v929 = vsel %vm320, %v804, 0
        %v932 = vsel %vm320, %v805, 0
        %v935 = vsel %vm320, %v806, 0
        %v938 = vsel %vm320, %v807, 0
        %v941 = vsel %vm320, %v808, 0
        %v944 = vsel %vm320, %v809, 0
        %v947 = vsel %vm320, %v810, 0
        %v950 = vsel %vm320, %v811, 0
        %v953 = vsel %vm320, %v812, 0
        %v956 = vsel %vm320, %v813, 0
        %v959 = vsel %vm320, %v814, 0
        %v962 = vsel %vm320, %v815, 0
        %v965 = vsel %vm320, %v816, 0
        %v968 = vsel %vm320, %v817, 0
        %v971 = vsel %vm320, %v818, 0
        %v974 = vsel %vm320, %v819, 0
        %v977 = vsel %vm320, %v820, 0
        %v980 = vsel %vm320, %v821, 0
        %v983 = vsel %vm320, %v822, 0
        %v986 = vsel %vm320, %v823, 0
        %v989 = vsel %vm320, %v824, 0
        %v992 = vsel %vm320, %v825, 0
        %v995 = vsel %vm320, %v826, 0
        %v998 = vsel %vm320, %v827, 0
        %v1001 = vsel %vm320, %v828, 0
        %v1004 = vsel %vm320, %v829, 0
        %v1007 = vsel %vm320, %v830, 0
        %v1010 = vsel %vm320, %v831, 0
        %v1013 = vsel %vm320, %v832, 0
        %v1016 = vsel %vm320, %v833, 0
        %v1019 = vsel %vm320, %v834, 0
        %v1022 = vsel %vm320, %v835, 0
        %v1025 = vsel %vm320, %v836, 0
        %v1028 = vsel %vm320, %v837, 0
        %v1031 = vsel %vm320, %v838, 0
        %v1034 = vsel %vm320, %v839, 0
        %v1037 = vsel %vm320, %v840, 0
        %1039 = vmatprep.subr.mxu0 0.0
        %1040 = vmatpush1.msra.mxu0 %v841
        %1041 = vmatprep.subr.mxu0 0.0
        %1042 = vmatpush1.msra.mxu0 %v842
        %1043 = vmatprep.subr.mxu0 0.0
        %1044 = vmatpush1.msra.mxu0 %v843
        %1045 = vmatprep.subr.mxu0 0.0
        %1046 = vmatpush1.msra.mxu0 %v844
        %1047 = vmatprep.subr.mxu0 0.0
        %1048 = vmatpush1.msra.mxu0 %v845
        %1049 = vmatprep.subr.mxu0 0.0
        %1050 = vmatpush1.msra.mxu0 %v846
        %1051 = vmatprep.subr.mxu0 0.0
        %1052 = vmatpush1.msra.mxu0 0.0
        %1053 = vmatprep.subr.mxu0 0.0
        %1054 = vmatpush1.msra.mxu0 0.0
        %1055 = vmatprep.subr.mxu0 0.0
        %1056 = vmatpush1.msra.mxu0 0.0
        %1057 = vmatprep.subr.mxu0 0.0
        %1058 = vmatpush1.msra.mxu0 0.0
        %1059 = vmatprep.subr.mxu0 0.0
        %1060 = vmatpush1.msra.mxu0 0.0
        %1061 = vmatprep.subr.mxu0 0.0
        %1062 = vmatpush1.msra.mxu0 0.0
        %1063 = vmatprep.subr.mxu0 0.0
        %1064 = vmatpush1.msra.mxu0 0.0
        %1065 = vmatprep.subr.mxu0 0.0
        %1066 = vmatpush1.msra.mxu0 0.0
        %1067 = vmatprep.subr.mxu0 0.0
        %1068 = vmatpush1.msra.mxu0 0.0
        %1069 = vmatprep.subr.mxu0 0.0
        %1070 = vmatpush1.msra.mxu0 0.0
        %1071 = vmatprep.subr.mxu0 0.0
        %1072 = vmatpush1.msra.mxu0 0.0
        %1073 = vmatprep.subr.mxu0 0.0
        %1074 = vmatpush1.msra.mxu0 0.0
        %1075 = vmatprep.subr.mxu0 0.0
        %1076 = vmatpush1.msra.mxu0 0.0
        %1077 = vmatprep.subr.mxu0 0.0
        %1078 = vmatpush1.msra.mxu0 0.0
        %1079 = vmatprep.subr.mxu0 0.0
        %1080 = vmatpush1.msra.mxu0 0.0
        %1081 = vmatprep.subr.mxu0 0.0
        %1082 = vmatpush1.msra.mxu0 0.0
        %1083 = vmatprep.subr.mxu0 0.0
        %1084 = vmatpush1.msra.mxu0 0.0
        %1085 = vmatprep.subr.mxu0 0.0
        %1086 = vmatpush1.msra.mxu0 0.0
        %1087 = vmatprep.subr.mxu0 0.0
        %1088 = vmatpush1.msra.mxu0 0.0
        %1089 = vmatprep.subr.mxu0 0.0
        %1090 = vmatpush1.msra.mxu0 0.0
        %1091 = vmatprep.subr.mxu0 0.0
        %1092 = vmatpush1.msra.mxu0 0.0
        %1093 = vmatprep.subr.mxu0 0.0
        %1094 = vmatpush1.msra.mxu0 0.0
        %1095 = vmatprep.subr.mxu0 0.0
        %1096 = vmatpush1.msra.mxu0 0.0
        %1097 = vmatprep.subr.mxu0 0.0
        %1098 = vmatpush1.msra.mxu0 0.0
        %1099 = vmatprep.subr.mxu0 0.0
        %1100 = vmatpush1.msra.mxu0 0.0
        %1101 = vmatprep.subr.mxu0 0.0
        %1102 = vmatpush1.msra.mxu0 0.0
        %1103 = vmatprep.mubr.f32.mxu0 0.0
        %1104 = vmatmul.mubr.f32.gmra.mrb[0].mxu0 %v848
        %v1105 = vpop.f32.mrb[0].mxu0
        %v1106 = vadd.f32 0.0, %v1105
        %v1107 = vpop.f32.mrb[0].mxu0
        %1108 = vmatprep.mubr.f32.mxu0 0.0
        %1109 = vmatmul.mubr.f32.gmra.mrb[0].mxu0 %v851
        %v1110 = vpop.f32.mrb[0].mxu0
        %v1111 = vadd.f32 0.0, %v1110
        %v1112 = vpop.f32.mrb[0].mxu0
        %1113 = vmatprep.mubr.f32.mxu0 0.0
        %1114 = vmatmul.mubr.f32.gmra.mrb[0].mxu0 %v854
        %v1115 = vpop.f32.mrb[0].mxu0
        %v1116 = vadd.f32 0.0, %v1115
        %v1117 = vpop.f32.mrb[0].mxu0
        %1118 = vmatprep.mubr.f32.mxu0 0.0
        %1119 = vmatmul.mubr.f32.gmra.mrb[0].mxu0 %v857
        %v1120 = vpop.f32.mrb[0].mxu0
        %v1121 = vadd.f32 0.0, %v1120
        %v1122 = vpop.f32.mrb[0].mxu0
        %1123 = vmatprep.mubr.f32.mxu0 0.0
        %1124 = vmatmul.mubr.f32.gmra.mrb[0].mxu0 %v860
        %v1125 = vpop.f32.mrb[0].mxu0
        %v1126 = vadd.f32 0.0, %v1125
        %v1127 = vpop.f32.mrb[0].mxu0
        %1128 = vmatprep.mubr.f32.mxu0 0.0
        %1129 = vmatmul.mubr.f32.gmra.mrb[0].mxu0 %v863
        %v1130 = vpop.f32.mrb[0].mxu0
        %v1131 = vadd.f32 0.0, %v1130
        %v1132 = vpop.f32.mrb[0].mxu0
        %1133 = vmatprep.mubr.f32.mxu0 0.0
        %1134 = vmatmul.mubr.f32.gmra.mrb[0].mxu0 %v866
        %v1135 = vpop.f32.mrb[0].mxu0
        %v1136 = vadd.f32 0.0, %v1135
        %v1137 = vpop.f32.mrb[0].mxu0
        %1138 = vmatprep.mubr.f32.mxu0 0.0
        %1139 = vmatmul.mubr.f32.gmra.mrb[0].mxu0 %v869
        %v1140 = vpop.f32.mrb[0].mxu0
        %v1141 = vadd.f32 0.0, %v1140
        %v1142 = vpop.f32.mrb[0].mxu0
        %1143 = vmatprep.mubr.f32.mxu0 0.0
        %1144 = vmatmul.mubr.f32.gmra.mrb[0].mxu0 %v872
        %v1145 = vpop.f32.mrb[0].mxu0
        %v1146 = vadd.f32 0.0, %v1145
        %v1147 = vpop.f32.mrb[0].mxu0
        %1148 = vmatprep.mubr.f32.mxu0 0.0
        %1149 = vmatmul.mubr.f32.gmra.mrb[0].mxu0 %v875
        %v1150 = vpop.f32.mrb[0].mxu0
        %v1151 = vadd.f32 0.0, %v1150
        %v1152 = vpop.f32.mrb[0].mxu0
        %1153 = vmatprep.mubr.f32.mxu0 0.0
        %1154 = vmatmul.mubr.f32.gmra.mrb[0].mxu0 %v878
        %v1155 = vpop.f32.mrb[0].mxu0
        %v1156 = vadd.f32 0.0, %v1155
        %v1157 = vpop.f32.mrb[0].mxu0
        %1158 = vmatprep.mubr.f32.mxu0 0.0
        %1159 = vmatmul.mubr.f32.gmra.mrb[0].mxu0 %v881
        %v1160 = vpop.f32.mrb[0].mxu0
        %v1161 = vadd.f32 0.0, %v1160
        %v1162 = vpop.f32.mrb[0].mxu0
        %1163 = vmatprep.mubr.f32.mxu0 0.0
        %1164 = vmatmul.mubr.f32.gmra.mrb[0].mxu0 %v884
        %v1165 = vpop.f32.mrb[0].mxu0
        %v1166 = vadd.f32 0.0, %v1165
        %v1167 = vpop.f32.mrb[0].mxu0
        %1168 = vmatprep.mubr.f32.mxu0 0.0
        %1169 = vmatmul.mubr.f32.gmra.mrb[0].mxu0 %v887
        %v1170 = vpop.f32.mrb[0].mxu0
        %v1171 = vadd.f32 0.0, %v1170
        %v1172 = vpop.f32.mrb[0].mxu0
        %1173 = vmatprep.mubr.f32.mxu0 0.0
        %1174 = vmatmul.mubr.f32.gmra.mrb[0].mxu0 %v890
        %v1175 = vpop.f32.mrb[0].mxu0
        %v1176 = vadd.f32 0.0, %v1175
        %v1177 = vpop.f32.mrb[0].mxu0
        %1178 = vmatprep.mubr.f32.mxu0 0.0
        %1179 = vmatmul.mubr.f32.gmra.mrb[0].mxu0 %v893
        %v1180 = vpop.f32.mrb[0].mxu0
        %v1181 = vadd.f32 0.0, %v1180
        %v1182 = vpop.f32.mrb[0].mxu0
        %1183 = vmatprep.mubr.f32.mxu0 0.0
        %1184 = vmatmul.mubr.f32.gmra.mrb[0].mxu0 %v896
        %v1185 = vpop.f32.mrb[0].mxu0
        %v1186 = vadd.f32 0.0, %v1185
        %v1187 = vpop.f32.mrb[0].mxu0
        %1188 = vmatprep.mubr.f32.mxu0 0.0
        %1189 = vmatmul.mubr.f32.gmra.mrb[0].mxu0 %v899
        %v1190 = vpop.f32.mrb[0].mxu0
        %v1191 = vadd.f32 0.0, %v1190
        %v1192 = vpop.f32.mrb[0].mxu0
        %1193 = vmatprep.mubr.f32.mxu0 0.0
        %1194 = vmatmul.mubr.f32.gmra.mrb[0].mxu0 %v902
        %v1195 = vpop.f32.mrb[0].mxu0
        %v1196 = vadd.f32 0.0, %v1195
        %v1197 = vpop.f32.mrb[0].mxu0
        %1198 = vmatprep.mubr.f32.mxu0 0.0
        %1199 = vmatmul.mubr.f32.gmra.mrb[0].mxu0 %v905
        %v1200 = vpop.f32.mrb[0].mxu0
        %v1201 = vadd.f32 0.0, %v1200
        %v1202 = vpop.f32.mrb[0].mxu0
        %1203 = vmatprep.mubr.f32.mxu0 0.0
        %1204 = vmatmul.mubr.f32.gmra.mrb[0].mxu0 %v908
        %v1205 = vpop.f32.mrb[0].mxu0
        %v1206 = vadd.f32 0.0, %v1205
        %v1207 = vpop.f32.mrb[0].mxu0
        %1208 = vmatprep.mubr.f32.mxu0 0.0
        %1209 = vmatmul.mubr.f32.gmra.mrb[0].mxu0 %v911
        %v1210 = vpop.f32.mrb[0].mxu0
        %v1211 = vadd.f32 0.0, %v1210
        %v1212 = vpop.f32.mrb[0].mxu0
        %1213 = vmatprep.mubr.f32.mxu0 0.0
        %1214 = vmatmul.mubr.f32.gmra.mrb[0].mxu0 %v914
        %v1215 = vpop.f32.mrb[0].mxu0
        %v1216 = vadd.f32 0.0, %v1215
        %v1217 = vpop.f32.mrb[0].mxu0
        %1218 = vmatprep.mubr.f32.mxu0 0.0
        %1219 = vmatmul.mubr.f32.gmra.mrb[0].mxu0 %v917
        %v1220 = vpop.f32.mrb[0].mxu0
        %v1221 = vadd.f32 0.0, %v1220
        %v1222 = vpop.f32.mrb[0].mxu0
        %1223 = vmatprep.mubr.f32.mxu0 0.0
        %1224 = vmatmul.mubr.f32.gmra.mrb[0].mxu0 %v920
        %v1225 = vpop.f32.mrb[0].mxu0
        %v1226 = vadd.f32 0.0, %v1225
        %v1227 = vpop.f32.mrb[0].mxu0
        %1228 = vmatprep.mubr.f32.mxu0 0.0
        %1229 = vmatmul.mubr.f32.gmra.mrb[0].mxu0 %v923
        %v1230 = vpop.f32.mrb[0].mxu0
        %v1231 = vadd.f32 0.0, %v1230
        %v1232 = vpop.f32.mrb[0].mxu0
        %1233 = vmatprep.mubr.f32.mxu0 0.0
        %1234 = vmatmul.mubr.f32.gmra.mrb[0].mxu0 %v926
        %v1235 = vpop.f32.mrb[0].mxu0
        %v1236 = vadd.f32 0.0, %v1235
        %v1237 = vpop.f32.mrb[0].mxu0
        %1238 = vmatprep.mubr.f32.mxu0 0.0
        %1239 = vmatmul.mubr.f32.gmra.mrb[0].mxu0 %v929
        %v1240 = vpop.f32.mrb[0].mxu0
        %v1241 = vadd.f32 0.0, %v1240
        %v1242 = vpop.f32.mrb[0].mxu0
        %1243 = vmatprep.mubr.f32.mxu0 0.0
        %1244 = vmatmul.mubr.f32.gmra.mrb[0].mxu0 %v932
        %v1245 = vpop.f32.mrb[0].mxu0
        %v1246 = vadd.f32 0.0, %v1245
        %v1247 = vpop.f32.mrb[0].mxu0
        %1248 = vmatprep.mubr.f32.mxu0 0.0
        %1249 = vmatmul.mubr.f32.gmra.mrb[0].mxu0 %v935
        %v1250 = vpop.f32.mrb[0].mxu0
        %v1251 = vadd.f32 0.0, %v1250
        %v1252 = vpop.f32.mrb[0].mxu0
        %1253 = vmatprep.mubr.f32.mxu0 0.0
        %1254 = vmatmul.mubr.f32.gmra.mrb[0].mxu0 %v938
        %v1255 = vpop.f32.mrb[0].mxu0
        %v1256 = vadd.f32 0.0, %v1255
        %v1257 = vpop.f32.mrb[0].mxu0
        %1258 = vmatprep.mubr.f32.mxu0 0.0
        %1259 = vmatmul.mubr.f32.gmra.mrb[0].mxu0 %v941
        %v1260 = vpop.f32.mrb[0].mxu0
        %v1261 = vadd.f32 0.0, %v1260
        %v1262 = vpop.f32.mrb[0].mxu0
        %1263 = vmatprep.mubr.f32.mxu0 0.0
        %1264 = vmatmul.mubr.f32.gmra.mrb[0].mxu0 %v944
        %v1265 = vpop.f32.mrb[0].mxu0
        %v1266 = vadd.f32 0.0, %v1265
        %v1267 = vpop.f32.mrb[0].mxu0
        %1268 = vmatprep.mubr.f32.mxu0 0.0
        %1269 = vmatmul.mubr.f32.gmra.mrb[0].mxu0 %v947
        %v1270 = vpop.f32.mrb[0].mxu0
        %v1271 = vadd.f32 0.0, %v1270
        %v1272 = vpop.f32.mrb[0].mxu0
        %1273 = vmatprep.mubr.f32.mxu0 0.0
        %1274 = vmatmul.mubr.f32.gmra.mrb[0].mxu0 %v950
        %v1275 = vpop.f32.mrb[0].mxu0
        %v1276 = vadd.f32 0.0, %v1275
        %v1277 = vpop.f32.mrb[0].mxu0
        %1278 = vmatprep.mubr.f32.mxu0 0.0
        %1279 = vmatmul.mubr.f32.gmra.mrb[0].mxu0 %v953
        %v1280 = vpop.f32.mrb[0].mxu0
        %v1281 = vadd.f32 0.0, %v1280
        %v1282 = vpop.f32.mrb[0].mxu0
        %1283 = vmatprep.mubr.f32.mxu0 0.0
        %1284 = vmatmul.mubr.f32.gmra.mrb[0].mxu0 %v956
        %v1285 = vpop.f32.mrb[0].mxu0
        %v1286 = vadd.f32 0.0, %v1285
        %v1287 = vpop.f32.mrb[0].mxu0
        %1288 = vmatprep.mubr.f32.mxu0 0.0
        %1289 = vmatmul.mubr.f32.gmra.mrb[0].mxu0 %v959
        %v1290 = vpop.f32.mrb[0].mxu0
        %v1291 = vadd.f32 0.0, %v1290
        %v1292 = vpop.f32.mrb[0].mxu0
        %1293 = vmatprep.mubr.f32.mxu0 0.0
        %1294 = vmatmul.mubr.f32.gmra.mrb[0].mxu0 %v962
        %v1295 = vpop.f32.mrb[0].mxu0
        %v1296 = vadd.f32 0.0, %v1295
        %v1297 = vpop.f32.mrb[0].mxu0
        %1298 = vmatprep.mubr.f32.mxu0 0.0
        %1299 = vmatmul.mubr.f32.gmra.mrb[0].mxu0 %v965
        %v1300 = vpop.f32.mrb[0].mxu0
        %v1301 = vadd.f32 0.0, %v1300
        %v1302 = vpop.f32.mrb[0].mxu0
        %1303 = vmatprep.mubr.f32.mxu0 0.0
        %1304 = vmatmul.mubr.f32.gmra.mrb[0].mxu0 %v968
        %v1305 = vpop.f32.mrb[0].mxu0
        %v1306 = vadd.f32 0.0, %v1305
        %v1307 = vpop.f32.mrb[0].mxu0
        %1308 = vmatprep.mubr.f32.mxu0 0.0
        %1309 = vmatmul.mubr.f32.gmra.mrb[0].mxu0 %v971
        %v1310 = vpop.f32.mrb[0].mxu0
        %v1311 = vadd.f32 0.0, %v1310
        %v1312 = vpop.f32.mrb[0].mxu0
        %1313 = vmatprep.mubr.f32.mxu0 0.0
        %1314 = vmatmul.mubr.f32.gmra.mrb[0].mxu0 %v974
        %v1315 = vpop.f32.mrb[0].mxu0
        %v1316 = vadd.f32 0.0, %v1315
        %v1317 = vpop.f32.mrb[0].mxu0
        %1318 = vmatprep.mubr.f32.mxu0 0.0
        %1319 = vmatmul.mubr.f32.gmra.mrb[0].mxu0 %v977
        %v1320 = vpop.f32.mrb[0].mxu0
        %v1321 = vadd.f32 0.0, %v1320
        %v1322 = vpop.f32.mrb[0].mxu0
        %1323 = vmatprep.mubr.f32.mxu0 0.0
        %1324 = vmatmul.mubr.f32.gmra.mrb[0].mxu0 %v980
        %v1325 = vpop.f32.mrb[0].mxu0
        %v1326 = vadd.f32 0.0, %v1325
        %v1327 = vpop.f32.mrb[0].mxu0
        %1328 = vmatprep.mubr.f32.mxu0 0.0
        %1329 = vmatmul.mubr.f32.gmra.mrb[0].mxu0 %v983
        %v1330 = vpop.f32.mrb[0].mxu0
        %v1331 = vadd.f32 0.0, %v1330
        %v1332 = vpop.f32.mrb[0].mxu0
        %1333 = vmatprep.mubr.f32.mxu0 0.0
        %1334 = vmatmul.mubr.f32.gmra.mrb[0].mxu0 %v986
        %v1335 = vpop.f32.mrb[0].mxu0
        %v1336 = vadd.f32 0.0, %v1335
        %v1337 = vpop.f32.mrb[0].mxu0
        %1338 = vmatprep.mubr.f32.mxu0 0.0
        %1339 = vmatmul.mubr.f32.gmra.mrb[0].mxu0 %v989
        %v1340 = vpop.f32.mrb[0].mxu0
        %v1341 = vadd.f32 0.0, %v1340
        %v1342 = vpop.f32.mrb[0].mxu0
        %1343 = vmatprep.mubr.f32.mxu0 0.0
        %1344 = vmatmul.mubr.f32.gmra.mrb[0].mxu0 %v992
        %v1345 = vpop.f32.mrb[0].mxu0
        %v1346 = vadd.f32 0.0, %v1345
        %v1347 = vpop.f32.mrb[0].mxu0
        %1348 = vmatprep.mubr.f32.mxu0 0.0
        %1349 = vmatmul.mubr.f32.gmra.mrb[0].mxu0 %v995
        %v1350 = vpop.f32.mrb[0].mxu0
        %v1351 = vadd.f32 0.0, %v1350
        %v1352 = vpop.f32.mrb[0].mxu0
        %1353 = vmatprep.mubr.f32.mxu0 0.0
        %1354 = vmatmul.mubr.f32.gmra.mrb[0].mxu0 %v998
        %v1355 = vpop.f32.mrb[0].mxu0
        %v1356 = vadd.f32 0.0, %v1355
        %v1357 = vpop.f32.mrb[0].mxu0
        %1358 = vmatprep.mubr.f32.mxu0 0.0
        %1359 = vmatmul.mubr.f32.gmra.mrb[0].mxu0 %v1001
        %v1360 = vpop.f32.mrb[0].mxu0
        %v1361 = vadd.f32 0.0, %v1360
        %v1362 = vpop.f32.mrb[0].mxu0
        %1363 = vmatprep.mubr.f32.mxu0 0.0
        %1364 = vmatmul.mubr.f32.gmra.mrb[0].mxu0 %v1004
        %v1365 = vpop.f32.mrb[0].mxu0
        %v1366 = vadd.f32 0.0, %v1365
        %v1367 = vpop.f32.mrb[0].mxu0
        %1368 = vmatprep.mubr.f32.mxu0 0.0
        %1369 = vmatmul.mubr.f32.gmra.mrb[0].mxu0 %v1007
        %v1370 = vpop.f32.mrb[0].mxu0
        %v1371 = vadd.f32 0.0, %v1370
        %v1372 = vpop.f32.mrb[0].mxu0
        %1373 = vmatprep.mubr.f32.mxu0 0.0
        %1374 = vmatmul.mubr.f32.gmra.mrb[0].mxu0 %v1010
        %v1375 = vpop.f32.mrb[0].mxu0
        %v1376 = vadd.f32 0.0, %v1375
        %v1377 = vpop.f32.mrb[0].mxu0
        %1378 = vmatprep.mubr.f32.mxu0 0.0
        %1379 = vmatmul.mubr.f32.gmra.mrb[0].mxu0 %v1013
        %v1380 = vpop.f32.mrb[0].mxu0
        %v1381 = vadd.f32 0.0, %v1380
        %v1382 = vpop.f32.mrb[0].mxu0
        %1383 = vmatprep.mubr.f32.mxu0 0.0
        %1384 = vmatmul.mubr.f32.gmra.mrb[0].mxu0 %v1016
        %v1385 = vpop.f32.mrb[0].mxu0
        %v1386 = vadd.f32 0.0, %v1385
        %v1387 = vpop.f32.mrb[0].mxu0
        %1388 = vmatprep.mubr.f32.mxu0 0.0
        %1389 = vmatmul.mubr.f32.gmra.mrb[0].mxu0 %v1019
        %v1390 = vpop.f32.mrb[0].mxu0
        %v1391 = vadd.f32 0.0, %v1390
        %v1392 = vpop.f32.mrb[0].mxu0
        %1393 = vmatprep.mubr.f32.mxu0 0.0
        %1394 = vmatmul.mubr.f32.gmra.mrb[0].mxu0 %v1022
        %v1395 = vpop.f32.mrb[0].mxu0
        %v1396 = vadd.f32 0.0, %v1395
        %v1397 = vpop.f32.mrb[0].mxu0
        %1398 = vmatprep.mubr.f32.mxu0 0.0
        %1399 = vmatmul.mubr.f32.gmra.mrb[0].mxu0 %v1025
        %v1400 = vpop.f32.mrb[0].mxu0
        %v1401 = vadd.f32 0.0, %v1400
        %v1402 = vpop.f32.mrb[0].mxu0
        %1403 = vmatprep.mubr.f32.mxu0 0.0
        %1404 = vmatmul.mubr.f32.gmra.mrb[0].mxu0 %v1028
        %v1405 = vpop.f32.mrb[0].mxu0
        %v1406 = vadd.f32 0.0, %v1405
        %v1407 = vpop.f32.mrb[0].mxu0
        %1408 = vmatprep.mubr.f32.mxu0 0.0
        %1409 = vmatmul.mubr.f32.gmra.mrb[0].mxu0 %v1031
        %v1410 = vpop.f32.mrb[0].mxu0
        %v1411 = vadd.f32 0.0, %v1410
        %v1412 = vpop.f32.mrb[0].mxu0
        %1413 = vmatprep.mubr.f32.mxu0 0.0
        %1414 = vmatmul.mubr.f32.gmra.mrb[0].mxu0 %v1034
        %v1415 = vpop.f32.mrb[0].mxu0
        %v1416 = vadd.f32 0.0, %v1415
        %v1417 = vpop.f32.mrb[0].mxu0
        %1418 = vmatprep.mubr.f32.mxu0 0.0
        %1419 = vmatmul.mubr.f32.gmra.mrb[0].mxu0 %v1037
        %v1420 = vpop.f32.mrb[0].mxu0
        %v1421 = vadd.f32 0.0, %v1420
        %v1422 = vpop.f32.mrb[0].mxu0
        %1423 = vdwg.mxu0
        %v1424 = vadd.f32 %v192, %v1106
        %v1425 = vadd.f32 %v193, %v1111
        %v1426 = vadd.f32 %v194, %v1116
        %v1427 = vadd.f32 %v195, %v1121
        %v1428 = vadd.f32 %v196, %v1126
        %v1429 = vadd.f32 %v197, %v1131
        %v1430 = vadd.f32 %v198, %v1136
        %v1431 = vadd.f32 %v199, %v1141
        %v1432 = vadd.f32 %v200, %v1146
        %v1433 = vadd.f32 %v201, %v1151
        %v1434 = vadd.f32 %v202, %v1156
        %v1435 = vadd.f32 %v203, %v1161
        %v1436 = vadd.f32 %v204, %v1166
        %v1437 = vadd.f32 %v205, %v1171
        %v1438 = vadd.f32 %v206, %v1176
        %v1439 = vadd.f32 %v207, %v1181
        %v1440 = vadd.f32 %v208, %v1186
        %v1441 = vadd.f32 %v209, %v1191
        %v1442 = vadd.f32 %v210, %v1196
        %v1443 = vadd.f32 %v211, %v1201
        %v1444 = vadd.f32 %v212, %v1206
        %v1445 = vadd.f32 %v213, %v1211
        %v1446 = vadd.f32 %v214, %v1216
        %v1447 = vadd.f32 %v215, %v1221
        %v1448 = vadd.f32 %v216, %v1226
        %v1449 = vadd.f32 %v217, %v1231
        %v1450 = vadd.f32 %v218, %v1236
        %v1451 = vadd.f32 %v219, %v1241
        %v1452 = vadd.f32 %v220, %v1246
        %v1453 = vadd.f32 %v221, %v1251
        %v1454 = vadd.f32 %v222, %v1256
        %v1455 = vadd.f32 %v223, %v1261
        %v1456 = vadd.f32 %v224, %v1266
        %v1457 = vadd.f32 %v225, %v1271
        %v1458 = vadd.f32 %v226, %v1276
        %v1459 = vadd.f32 %v227, %v1281
        %v1460 = vadd.f32 %v228, %v1286
        %v1461 = vadd.f32 %v229, %v1291
        %v1462 = vadd.f32 %v230, %v1296
        %v1463 = vadd.f32 %v231, %v1301
        %v1464 = vadd.f32 %v232, %v1306
        %v1465 = vadd.f32 %v233, %v1311
        %v1466 = vadd.f32 %v234, %v1316
        %v1467 = vadd.f32 %v235, %v1321
        %v1468 = vadd.f32 %v236, %v1326
        %v1469 = vadd.f32 %v237, %v1331
        %v1470 = vadd.f32 %v238, %v1336
        %v1471 = vadd.f32 %v239, %v1341
        %v1472 = vadd.f32 %v240, %v1346
        %v1473 = vadd.f32 %v241, %v1351
        %v1474 = vadd.f32 %v242, %v1356
        %v1475 = vadd.f32 %v243, %v1361
        %v1476 = vadd.f32 %v244, %v1366
        %v1477 = vadd.f32 %v245, %v1371
        %v1478 = vadd.f32 %v246, %v1376
        %v1479 = vadd.f32 %v247, %v1381
        %v1480 = vadd.f32 %v248, %v1386
        %v1481 = vadd.f32 %v249, %v1391
        %v1482 = vadd.f32 %v250, %v1396
        %v1483 = vadd.f32 %v251, %v1401
        %v1484 = vadd.f32 %v252, %v1406
        %v1485 = vadd.f32 %v253, %v1411
        %v1486 = vadd.f32 %v254, %v1416
        %v1487 = vadd.f32 %v255, %v1421
        %v1488 = vmul.f32 %v1424, %v1424
        %v1489 = vmul.f32 %v1425, %v1425
        %v1490 = vmul.f32 %v1426, %v1426
        %v1491 = vmul.f32 %v1427, %v1427
        %v1492 = vmul.f32 %v1428, %v1428
        %v1493 = vmul.f32 %v1429, %v1429
        %v1494 = vmul.f32 %v1430, %v1430
        %v1495 = vmul.f32 %v1431, %v1431
        %v1496 = vmul.f32 %v1432, %v1432
        %v1497 = vmul.f32 %v1433, %v1433
        %v1498 = vmul.f32 %v1434, %v1434
        %v1499 = vmul.f32 %v1435, %v1435
        %v1500 = vmul.f32 %v1436, %v1436
        %v1501 = vmul.f32 %v1437, %v1437
        %v1502 = vmul.f32 %v1438, %v1438
        %v1503 = vmul.f32 %v1439, %v1439
        %v1504 = vmul.f32 %v1440, %v1440
        %v1505 = vmul.f32 %v1441, %v1441
        %v1506 = vmul.f32 %v1442, %v1442
        %v1507 = vmul.f32 %v1443, %v1443
        %v1508 = vmul.f32 %v1444, %v1444
        %v1509 = vmul.f32 %v1445, %v1445
        %v1510 = vmul.f32 %v1446, %v1446
        %v1511 = vmul.f32 %v1447, %v1447
        %v1512 = vmul.f32 %v1448, %v1448
        %v1513 = vmul.f32 %v1449, %v1449
        %v1514 = vmul.f32 %v1450, %v1450
        %v1515 = vmul.f32 %v1451, %v1451
        %v1516 = vmul.f32 %v1452, %v1452
        %v1517 = vmul.f32 %v1453, %v1453
        %v1518 = vmul.f32 %v1454, %v1454
        %v1519 = vmul.f32 %v1455, %v1455
        %v1520 = vmul.f32 %v1456, %v1456
        %v1521 = vmul.f32 %v1457, %v1457
        %v1522 = vmul.f32 %v1458, %v1458
        %v1523 = vmul.f32 %v1459, %v1459
        %v1524 = vmul.f32 %v1460, %v1460
        %v1525 = vmul.f32 %v1461, %v1461
        %v1526 = vmul.f32 %v1462, %v1462
        %v1527 = vmul.f32 %v1463, %v1463
        %v1528 = vmul.f32 %v1464, %v1464
        %v1529 = vmul.f32 %v1465, %v1465
        %v1530 = vmul.f32 %v1466, %v1466
        %v1531 = vmul.f32 %v1467, %v1467
        %v1532 = vmul.f32 %v1468, %v1468
        %v1533 = vmul.f32 %v1469, %v1469
        %v1534 = vmul.f32 %v1470, %v1470
        %v1535 = vmul.f32 %v1471, %v1471
        %v1536 = vmul.f32 %v1472, %v1472
        %v1537 = vmul.f32 %v1473, %v1473
        %v1538 = vmul.f32 %v1474, %v1474
        %v1539 = vmul.f32 %v1475, %v1475
        %v1540 = vmul.f32 %v1476, %v1476
        %v1541 = vmul.f32 %v1477, %v1477
        %v1542 = vmul.f32 %v1478, %v1478
        %v1543 = vmul.f32 %v1479, %v1479
        %v1544 = vmul.f32 %v1480, %v1480
        %v1545 = vmul.f32 %v1481, %v1481
        %v1546 = vmul.f32 %v1482, %v1482
        %v1547 = vmul.f32 %v1483, %v1483
        %v1548 = vmul.f32 %v1484, %v1484
        %v1549 = vmul.f32 %v1485, %v1485
        %v1550 = vmul.f32 %v1486, %v1486
        %v1551 = vmul.f32 %v1487, %v1487
        %v1552 = vsel %vm320, %v1488, 0.0
        %1553 = vadd.xlane.f32.xlu0 %v1552
        %v1554 = vpop.xlane.xlu0 %1553
        %v1555 = vsel %vm320, %v1489, 0.0
        %1556 = vadd.xlane.f32.xlu0 %v1555
        %v1557 = vpop.xlane.xlu0 %1556
        %v1558 = vsel %vm320, %v1490, 0.0
        %1559 = vadd.xlane.f32.xlu0 %v1558
        %v1560 = vpop.xlane.xlu0 %1559
        %v1561 = vsel %vm320, %v1491, 0.0
        %1562 = vadd.xlane.f32.xlu0 %v1561
        %v1563 = vpop.xlane.xlu0 %1562
        %v1564 = vsel %vm320, %v1492, 0.0
        %1565 = vadd.xlane.f32.xlu0 %v1564
        %v1566 = vpop.xlane.xlu0 %1565
        %v1567 = vsel %vm320, %v1493, 0.0
        %1568 = vadd.xlane.f32.xlu0 %v1567
        %v1569 = vpop.xlane.xlu0 %1568
        %v1570 = vsel %vm320, %v1494, 0.0
        %1571 = vadd.xlane.f32.xlu0 %v1570
        %v1572 = vpop.xlane.xlu0 %1571
        %v1573 = vsel %vm320, %v1495, 0.0
        %1574 = vadd.xlane.f32.xlu0 %v1573
        %v1575 = vpop.xlane.xlu0 %1574
        %v1576 = vsel %vm320, %v1496, 0.0
        %1577 = vadd.xlane.f32.xlu0 %v1576
        %v1578 = vpop.xlane.xlu0 %1577
        %v1579 = vsel %vm320, %v1497, 0.0
        %1580 = vadd.xlane.f32.xlu0 %v1579
        %v1581 = vpop.xlane.xlu0 %1580
        %v1582 = vsel %vm320, %v1498, 0.0
        %1583 = vadd.xlane.f32.xlu0 %v1582
        %v1584 = vpop.xlane.xlu0 %1583
        %v1585 = vsel %vm320, %v1499, 0.0
        %1586 = vadd.xlane.f32.xlu0 %v1585
        %v1587 = vpop.xlane.xlu0 %1586
        %v1588 = vsel %vm320, %v1500, 0.0
        %1589 = vadd.xlane.f32.xlu0 %v1588
        %v1590 = vpop.xlane.xlu0 %1589
        %v1591 = vsel %vm320, %v1501, 0.0
        %1592 = vadd.xlane.f32.xlu0 %v1591
        %v1593 = vpop.xlane.xlu0 %1592
        %v1594 = vsel %vm320, %v1502, 0.0
        %1595 = vadd.xlane.f32.xlu0 %v1594
        %v1596 = vpop.xlane.xlu0 %1595
        %v1597 = vsel %vm320, %v1503, 0.0
        %1598 = vadd.xlane.f32.xlu0 %v1597
        %v1599 = vpop.xlane.xlu0 %1598
        %v1600 = vsel %vm320, %v1504, 0.0
        %1601 = vadd.xlane.f32.xlu0 %v1600
        %v1602 = vpop.xlane.xlu0 %1601
        %v1603 = vsel %vm320, %v1505, 0.0
        %1604 = vadd.xlane.f32.xlu0 %v1603
        %v1605 = vpop.xlane.xlu0 %1604
        %v1606 = vsel %vm320, %v1506, 0.0
        %1607 = vadd.xlane.f32.xlu0 %v1606
        %v1608 = vpop.xlane.xlu0 %1607
        %v1609 = vsel %vm320, %v1507, 0.0
        %1610 = vadd.xlane.f32.xlu0 %v1609
        %v1611 = vpop.xlane.xlu0 %1610
        %v1612 = vsel %vm320, %v1508, 0.0
        %1613 = vadd.xlane.f32.xlu0 %v1612
        %v1614 = vpop.xlane.xlu0 %1613
        %v1615 = vsel %vm320, %v1509, 0.0
        %1616 = vadd.xlane.f32.xlu0 %v1615
        %v1617 = vpop.xlane.xlu0 %1616
        %v1618 = vsel %vm320, %v1510, 0.0
        %1619 = vadd.xlane.f32.xlu0 %v1618
        %v1620 = vpop.xlane.xlu0 %1619
        %v1621 = vsel %vm320, %v1511, 0.0
        %1622 = vadd.xlane.f32.xlu0 %v1621
        %v1623 = vpop.xlane.xlu0 %1622
        %v1624 = vsel %vm320, %v1512, 0.0
        %1625 = vadd.xlane.f32.xlu0 %v1624
        %v1626 = vpop.xlane.xlu0 %1625
        %v1627 = vsel %vm320, %v1513, 0.0
        %1628 = vadd.xlane.f32.xlu0 %v1627
        %v1629 = vpop.xlane.xlu0 %1628
        %v1630 = vsel %vm320, %v1514, 0.0
        %1631 = vadd.xlane.f32.xlu0 %v1630
        %v1632 = vpop.xlane.xlu0 %1631
        %v1633 = vsel %vm320, %v1515, 0.0
        %1634 = vadd.xlane.f32.xlu0 %v1633
        %v1635 = vpop.xlane.xlu0 %1634
        %v1636 = vsel %vm320, %v1516, 0.0
        %1637 = vadd.xlane.f32.xlu0 %v1636
        %v1638 = vpop.xlane.xlu0 %1637
        %v1639 = vsel %vm320, %v1517, 0.0
        %1640 = vadd.xlane.f32.xlu0 %v1639
        %v1641 = vpop.xlane.xlu0 %1640
        %v1642 = vsel %vm320, %v1518, 0.0
        %1643 = vadd.xlane.f32.xlu0 %v1642
        %v1644 = vpop.xlane.xlu0 %1643
        %v1645 = vsel %vm320, %v1519, 0.0
        %1646 = vadd.xlane.f32.xlu0 %v1645
        %v1647 = vpop.xlane.xlu0 %1646
        %v1648 = vsel %vm320, %v1520, 0.0
        %1649 = vadd.xlane.f32.xlu0 %v1648
        %v1650 = vpop.xlane.xlu0 %1649
        %v1651 = vsel %vm320, %v1521, 0.0
        %1652 = vadd.xlane.f32.xlu0 %v1651
        %v1653 = vpop.xlane.xlu0 %1652
        %v1654 = vsel %vm320, %v1522, 0.0
        %1655 = vadd.xlane.f32.xlu0 %v1654
        %v1656 = vpop.xlane.xlu0 %1655
        %v1657 = vsel %vm320, %v1523, 0.0
        %1658 = vadd.xlane.f32.xlu0 %v1657
        %v1659 = vpop.xlane.xlu0 %1658
        %v1660 = vsel %vm320, %v1524, 0.0
        %1661 = vadd.xlane.f32.xlu0 %v1660
        %v1662 = vpop.xlane.xlu0 %1661
        %v1663 = vsel %vm320, %v1525, 0.0
        %1664 = vadd.xlane.f32.xlu0 %v1663
        %v1665 = vpop.xlane.xlu0 %1664
        %v1666 = vsel %vm320, %v1526, 0.0
        %1667 = vadd.xlane.f32.xlu0 %v1666
        %v1668 = vpop.xlane.xlu0 %1667
        %v1669 = vsel %vm320, %v1527, 0.0
        %1670 = vadd.xlane.f32.xlu0 %v1669
        %v1671 = vpop.xlane.xlu0 %1670
        %v1672 = vsel %vm320, %v1528, 0.0
        %1673 = vadd.xlane.f32.xlu0 %v1672
        %v1674 = vpop.xlane.xlu0 %1673
        %v1675 = vsel %vm320, %v1529, 0.0
        %1676 = vadd.xlane.f32.xlu0 %v1675
        %v1677 = vpop.xlane.xlu0 %1676
        %v1678 = vsel %vm320, %v1530, 0.0
        %1679 = vadd.xlane.f32.xlu0 %v1678
        %v1680 = vpop.xlane.xlu0 %1679
        %v1681 = vsel %vm320, %v1531, 0.0
        %1682 = vadd.xlane.f32.xlu0 %v1681
        %v1683 = vpop.xlane.xlu0 %1682
        %v1684 = vsel %vm320, %v1532, 0.0
        %1685 = vadd.xlane.f32.xlu0 %v1684
        %v1686 = vpop.xlane.xlu0 %1685
        %v1687 = vsel %vm320, %v1533, 0.0
        %1688 = vadd.xlane.f32.xlu0 %v1687
        %v1689 = vpop.xlane.xlu0 %1688
        %v1690 = vsel %vm320, %v1534, 0.0
        %1691 = vadd.xlane.f32.xlu0 %v1690
        %v1692 = vpop.xlane.xlu0 %1691
        %v1693 = vsel %vm320, %v1535, 0.0
        %1694 = vadd.xlane.f32.xlu0 %v1693
        %v1695 = vpop.xlane.xlu0 %1694
        %v1696 = vsel %vm320, %v1536, 0.0
        %1697 = vadd.xlane.f32.xlu0 %v1696
        %v1698 = vpop.xlane.xlu0 %1697
        %v1699 = vsel %vm320, %v1537, 0.0
        %1700 = vadd.xlane.f32.xlu0 %v1699
        %v1701 = vpop.xlane.xlu0 %1700
        %v1702 = vsel %vm320, %v1538, 0.0
        %1703 = vadd.xlane.f32.xlu0 %v1702
        %v1704 = vpop.xlane.xlu0 %1703
        %v1705 = vsel %vm320, %v1539, 0.0
        %1706 = vadd.xlane.f32.xlu0 %v1705
        %v1707 = vpop.xlane.xlu0 %1706
        %v1708 = vsel %vm320, %v1540, 0.0
        %1709 = vadd.xlane.f32.xlu0 %v1708
        %v1710 = vpop.xlane.xlu0 %1709
        %v1711 = vsel %vm320, %v1541, 0.0
        %1712 = vadd.xlane.f32.xlu0 %v1711
        %v1713 = vpop.xlane.xlu0 %1712
        %v1714 = vsel %vm320, %v1542, 0.0
        %1715 = vadd.xlane.f32.xlu0 %v1714
        %v1716 = vpop.xlane.xlu0 %1715
        %v1717 = vsel %vm320, %v1543, 0.0
        %1718 = vadd.xlane.f32.xlu0 %v1717
        %v1719 = vpop.xlane.xlu0 %1718
        %v1720 = vsel %vm320, %v1544, 0.0
        %1721 = vadd.xlane.f32.xlu0 %v1720
        %v1722 = vpop.xlane.xlu0 %1721
        %v1723 = vsel %vm320, %v1545, 0.0
        %1724 = vadd.xlane.f32.xlu0 %v1723
        %v1725 = vpop.xlane.xlu0 %1724
        %v1726 = vsel %vm320, %v1546, 0.0
        %1727 = vadd.xlane.f32.xlu0 %v1726
        %v1728 = vpop.xlane.xlu0 %1727
        %v1729 = vsel %vm320, %v1547, 0.0
        %1730 = vadd.xlane.f32.xlu0 %v1729
        %v1731 = vpop.xlane.xlu0 %1730
        %v1732 = vsel %vm320, %v1548, 0.0
        %1733 = vadd.xlane.f32.xlu0 %v1732
        %v1734 = vpop.xlane.xlu0 %1733
        %v1735 = vsel %vm320, %v1549, 0.0
        %1736 = vadd.xlane.f32.xlu0 %v1735
        %v1737 = vpop.xlane.xlu0 %1736
        %v1738 = vsel %vm320, %v1550, 0.0
        %1739 = vadd.xlane.f32.xlu0 %v1738
        %v1740 = vpop.xlane.xlu0 %1739
        %v1741 = vsel %vm320, %v1551, 0.0
        %1742 = vadd.xlane.f32.xlu0 %v1741
        %v1743 = vpop.xlane.xlu0 %1742
        %v1744 = vmul.f32 %v1554, %v513
        %v1745 = vmul.f32 %v1557, %v513
        %v1746 = vmul.f32 %v1560, %v513
        %v1747 = vmul.f32 %v1563, %v513
        %v1748 = vmul.f32 %v1566, %v513
        %v1749 = vmul.f32 %v1569, %v513
        %v1750 = vmul.f32 %v1572, %v513
        %v1751 = vmul.f32 %v1575, %v513
        %v1752 = vmul.f32 %v1578, %v513
        %v1753 = vmul.f32 %v1581, %v513
        %v1754 = vmul.f32 %v1584, %v513
        %v1755 = vmul.f32 %v1587, %v513
        %v1756 = vmul.f32 %v1590, %v513
        %v1757 = vmul.f32 %v1593, %v513
        %v1758 = vmul.f32 %v1596, %v513
        %v1759 = vmul.f32 %v1599, %v513
        %v1760 = vmul.f32 %v1602, %v513
        %v1761 = vmul.f32 %v1605, %v513
        %v1762 = vmul.f32 %v1608, %v513
        %v1763 = vmul.f32 %v1611, %v513
        %v1764 = vmul.f32 %v1614, %v513
        %v1765 = vmul.f32 %v1617, %v513
        %v1766 = vmul.f32 %v1620, %v513
        %v1767 = vmul.f32 %v1623, %v513
        %v1768 = vmul.f32 %v1626, %v513
        %v1769 = vmul.f32 %v1629, %v513
        %v1770 = vmul.f32 %v1632, %v513
        %v1771 = vmul.f32 %v1635, %v513
        %v1772 = vmul.f32 %v1638, %v513
        %v1773 = vmul.f32 %v1641, %v513
        %v1774 = vmul.f32 %v1644, %v513
        %v1775 = vmul.f32 %v1647, %v513
        %v1776 = vmul.f32 %v1650, %v513
        %v1777 = vmul.f32 %v1653, %v513
        %v1778 = vmul.f32 %v1656, %v513
        %v1779 = vmul.f32 %v1659, %v513
        %v1780 = vmul.f32 %v1662, %v513
        %v1781 = vmul.f32 %v1665, %v513
        %v1782 = vmul.f32 %v1668, %v513
        %v1783 = vmul.f32 %v1671, %v513
        %v1784 = vmul.f32 %v1674, %v513
        %v1785 = vmul.f32 %v1677, %v513
        %v1786 = vmul.f32 %v1680, %v513
        %v1787 = vmul.f32 %v1683, %v513
        %v1788 = vmul.f32 %v1686, %v513
        %v1789 = vmul.f32 %v1689, %v513
        %v1790 = vmul.f32 %v1692, %v513
        %v1791 = vmul.f32 %v1695, %v513
        %v1792 = vmul.f32 %v1698, %v513
        %v1793 = vmul.f32 %v1701, %v513
        %v1794 = vmul.f32 %v1704, %v513
        %v1795 = vmul.f32 %v1707, %v513
        %v1796 = vmul.f32 %v1710, %v513
        %v1797 = vmul.f32 %v1713, %v513
        %v1798 = vmul.f32 %v1716, %v513
        %v1799 = vmul.f32 %v1719, %v513
        %v1800 = vmul.f32 %v1722, %v513
        %v1801 = vmul.f32 %v1725, %v513
        %v1802 = vmul.f32 %v1728, %v513
        %v1803 = vmul.f32 %v1731, %v513
        %v1804 = vmul.f32 %v1734, %v513
        %v1805 = vmul.f32 %v1737, %v513
        %v1806 = vmul.f32 %v1740, %v513
        %v1807 = vmul.f32 %v1743, %v513
        %s1808 = scalar_lea.vmem %s1, 1
        %v1809 = vld [vmem:[%s1808] sm:$0x1]
        %v1810 = vadd.f32 %v1744, 1e-06
        %v1811 = vadd.f32 %v1745, 1e-06
        %v1812 = vadd.f32 %v1746, 1e-06
        %v1813 = vadd.f32 %v1747, 1e-06
        %v1814 = vadd.f32 %v1748, 1e-06
        %v1815 = vadd.f32 %v1749, 1e-06
        %v1816 = vadd.f32 %v1750, 1e-06
        %v1817 = vadd.f32 %v1751, 1e-06
        %v1818 = vadd.f32 %v1752, 1e-06
        %v1819 = vadd.f32 %v1753, 1e-06
        %v1820 = vadd.f32 %v1754, 1e-06
        %v1821 = vadd.f32 %v1755, 1e-06
        %v1822 = vadd.f32 %v1756, 1e-06
        %v1823 = vadd.f32 %v1757, 1e-06
        %v1824 = vadd.f32 %v1758, 1e-06
        %v1825 = vadd.f32 %v1759, 1e-06
        %v1826 = vadd.f32 %v1760, 1e-06
        %v1827 = vadd.f32 %v1761, 1e-06
        %v1828 = vadd.f32 %v1762, 1e-06
        %v1829 = vadd.f32 %v1763, 1e-06
        %v1830 = vadd.f32 %v1764, 1e-06
        %v1831 = vadd.f32 %v1765, 1e-06
        %v1832 = vadd.f32 %v1766, 1e-06
        %v1833 = vadd.f32 %v1767, 1e-06
        %v1834 = vadd.f32 %v1768, 1e-06
        %v1835 = vadd.f32 %v1769, 1e-06
        %v1836 = vadd.f32 %v1770, 1e-06
        %v1837 = vadd.f32 %v1771, 1e-06
        %v1838 = vadd.f32 %v1772, 1e-06
        %v1839 = vadd.f32 %v1773, 1e-06
        %v1840 = vadd.f32 %v1774, 1e-06
        %v1841 = vadd.f32 %v1775, 1e-06
        %v1842 = vadd.f32 %v1776, 1e-06
        %v1843 = vadd.f32 %v1777, 1e-06
        %v1844 = vadd.f32 %v1778, 1e-06
        %v1845 = vadd.f32 %v1779, 1e-06
        %v1846 = vadd.f32 %v1780, 1e-06
        %v1847 = vadd.f32 %v1781, 1e-06
        %v1848 = vadd.f32 %v1782, 1e-06
        %v1849 = vadd.f32 %v1783, 1e-06
        %v1850 = vadd.f32 %v1784, 1e-06
        %v1851 = vadd.f32 %v1785, 1e-06
        %v1852 = vadd.f32 %v1786, 1e-06
        %v1853 = vadd.f32 %v1787, 1e-06
        %v1854 = vadd.f32 %v1788, 1e-06
        %v1855 = vadd.f32 %v1789, 1e-06
        %v1856 = vadd.f32 %v1790, 1e-06
        %v1857 = vadd.f32 %v1791, 1e-06
        %v1858 = vadd.f32 %v1792, 1e-06
        %v1859 = vadd.f32 %v1793, 1e-06
        %v1860 = vadd.f32 %v1794, 1e-06
        %v1861 = vadd.f32 %v1795, 1e-06
        %v1862 = vadd.f32 %v1796, 1e-06
        %v1863 = vadd.f32 %v1797, 1e-06
        %v1864 = vadd.f32 %v1798, 1e-06
        %v1865 = vadd.f32 %v1799, 1e-06
        %v1866 = vadd.f32 %v1800, 1e-06
        %v1867 = vadd.f32 %v1801, 1e-06
        %v1868 = vadd.f32 %v1802, 1e-06
        %v1869 = vadd.f32 %v1803, 1e-06
        %v1870 = vadd.f32 %v1804, 1e-06
        %v1871 = vadd.f32 %v1805, 1e-06
        %v1872 = vadd.f32 %v1806, 1e-06
        %v1873 = vadd.f32 %v1807, 1e-06
        %v1874 = vrsqrt.pop %v1810
        %v1875 = vrsqrt.pop %v1811
        %v1876 = vrsqrt.pop %v1812
        %v1877 = vrsqrt.pop %v1813
        %v1878 = vrsqrt.pop %v1814
        %v1879 = vrsqrt.pop %v1815
        %v1880 = vrsqrt.pop %v1816
        %v1881 = vrsqrt.pop %v1817
        %v1882 = vrsqrt.pop %v1818
        %v1883 = vrsqrt.pop %v1819
        %v1884 = vrsqrt.pop %v1820
        %v1885 = vrsqrt.pop %v1821
        %v1886 = vrsqrt.pop %v1822
        %v1887 = vrsqrt.pop %v1823
        %v1888 = vrsqrt.pop %v1824
        %v1889 = vrsqrt.pop %v1825
        %v1890 = vrsqrt.pop %v1826
        %v1891 = vrsqrt.pop %v1827
        %v1892 = vrsqrt.pop %v1828
        %v1893 = vrsqrt.pop %v1829
        %v1894 = vrsqrt.pop %v1830
        %v1895 = vrsqrt.pop %v1831
        %v1896 = vrsqrt.pop %v1832
        %v1897 = vrsqrt.pop %v1833
        %v1898 = vrsqrt.pop %v1834
        %v1899 = vrsqrt.pop %v1835
        %v1900 = vrsqrt.pop %v1836
        %v1901 = vrsqrt.pop %v1837
        %v1902 = vrsqrt.pop %v1838
        %v1903 = vrsqrt.pop %v1839
        %v1904 = vrsqrt.pop %v1840
        %v1905 = vrsqrt.pop %v1841
        %v1906 = vrsqrt.pop %v1842
        %v1907 = vrsqrt.pop %v1843
        %v1908 = vrsqrt.pop %v1844
        %v1909 = vrsqrt.pop %v1845
        %v1910 = vrsqrt.pop %v1846
        %v1911 = vrsqrt.pop %v1847
        %v1912 = vrsqrt.pop %v1848
        %v1913 = vrsqrt.pop %v1849
        %v1914 = vrsqrt.pop %v1850
        %v1915 = vrsqrt.pop %v1851
        %v1916 = vrsqrt.pop %v1852
        %v1917 = vrsqrt.pop %v1853
        %v1918 = vrsqrt.pop %v1854
        %v1919 = vrsqrt.pop %v1855
        %v1920 = vrsqrt.pop %v1856
        %v1921 = vrsqrt.pop %v1857
        %v1922 = vrsqrt.pop %v1858
        %v1923 = vrsqrt.pop %v1859
        %v1924 = vrsqrt.pop %v1860
        %v1925 = vrsqrt.pop %v1861
        %v1926 = vrsqrt.pop %v1862
        %v1927 = vrsqrt.pop %v1863
        %v1928 = vrsqrt.pop %v1864
        %v1929 = vrsqrt.pop %v1865
        %v1930 = vrsqrt.pop %v1866
        %v1931 = vrsqrt.pop %v1867
        %v1932 = vrsqrt.pop %v1868
        %v1933 = vrsqrt.pop %v1869
        %v1934 = vrsqrt.pop %v1870
        %v1935 = vrsqrt.pop %v1871
        %v1936 = vrsqrt.pop %v1872
        %v1937 = vrsqrt.pop %v1873
        %v1938 = vmul.f32 %v1424, %v1874
        %v1939 = vmul.f32 %v1425, %v1875
        %v1940 = vmul.f32 %v1426, %v1876
        %v1941 = vmul.f32 %v1427, %v1877
        %v1942 = vmul.f32 %v1428, %v1878
        %v1943 = vmul.f32 %v1429, %v1879
        %v1944 = vmul.f32 %v1430, %v1880
        %v1945 = vmul.f32 %v1431, %v1881
        %v1946 = vmul.f32 %v1432, %v1882
        %v1947 = vmul.f32 %v1433, %v1883
        %v1948 = vmul.f32 %v1434, %v1884
        %v1949 = vmul.f32 %v1435, %v1885
        %v1950 = vmul.f32 %v1436, %v1886
        %v1951 = vmul.f32 %v1437, %v1887
        %v1952 = vmul.f32 %v1438, %v1888
        %v1953 = vmul.f32 %v1439, %v1889
        %v1954 = vmul.f32 %v1440, %v1890
        %v1955 = vmul.f32 %v1441, %v1891
        %v1956 = vmul.f32 %v1442, %v1892
        %v1957 = vmul.f32 %v1443, %v1893
        %v1958 = vmul.f32 %v1444, %v1894
        %v1959 = vmul.f32 %v1445, %v1895
        %v1960 = vmul.f32 %v1446, %v1896
        %v1961 = vmul.f32 %v1447, %v1897
        %v1962 = vmul.f32 %v1448, %v1898
        %v1963 = vmul.f32 %v1449, %v1899
        %v1964 = vmul.f32 %v1450, %v1900
        %v1965 = vmul.f32 %v1451, %v1901
        %v1966 = vmul.f32 %v1452, %v1902
        %v1967 = vmul.f32 %v1453, %v1903
        %v1968 = vmul.f32 %v1454, %v1904
        %v1969 = vmul.f32 %v1455, %v1905
        %v1970 = vmul.f32 %v1456, %v1906
        %v1971 = vmul.f32 %v1457, %v1907
        %v1972 = vmul.f32 %v1458, %v1908
        %v1973 = vmul.f32 %v1459, %v1909
        %v1974 = vmul.f32 %v1460, %v1910
        %v1975 = vmul.f32 %v1461, %v1911
        %v1976 = vmul.f32 %v1462, %v1912
        %v1977 = vmul.f32 %v1463, %v1913
        %v1978 = vmul.f32 %v1464, %v1914
        %v1979 = vmul.f32 %v1465, %v1915
        %v1980 = vmul.f32 %v1466, %v1916
        %v1981 = vmul.f32 %v1467, %v1917
        %v1982 = vmul.f32 %v1468, %v1918
        %v1983 = vmul.f32 %v1469, %v1919
        %v1984 = vmul.f32 %v1470, %v1920
        %v1985 = vmul.f32 %v1471, %v1921
        %v1986 = vmul.f32 %v1472, %v1922
        %v1987 = vmul.f32 %v1473, %v1923
        %v1988 = vmul.f32 %v1474, %v1924
        %v1989 = vmul.f32 %v1475, %v1925
        %v1990 = vmul.f32 %v1476, %v1926
        %v1991 = vmul.f32 %v1477, %v1927
        %v1992 = vmul.f32 %v1478, %v1928
        %v1993 = vmul.f32 %v1479, %v1929
        %v1994 = vmul.f32 %v1480, %v1930
        %v1995 = vmul.f32 %v1481, %v1931
        %v1996 = vmul.f32 %v1482, %v1932
        %v1997 = vmul.f32 %v1483, %v1933
        %v1998 = vmul.f32 %v1484, %v1934
        %v1999 = vmul.f32 %v1485, %v1935
        %v2000 = vmul.f32 %v1486, %v1936
        %v2001 = vmul.f32 %v1487, %v1937
        %v2003 = vlaneseq
        %v2004 = vshrl.u32 %v2003, 7
        %v2005 = vsub.s32 0, %v2004
        %v2006 = vrot.slane %v1809, %v2005
        %v2008 = vmul.f32 %v2006, %v1938
        %v2009 = vmul.f32 %v2006, %v1939
        %v2010 = vmul.f32 %v2006, %v1940
        %v2011 = vmul.f32 %v2006, %v1941
        %v2012 = vmul.f32 %v2006, %v1942
        %v2013 = vmul.f32 %v2006, %v1943
        %v2014 = vmul.f32 %v2006, %v1944
        %v2015 = vmul.f32 %v2006, %v1945
        %v2016 = vmul.f32 %v2006, %v1946
        %v2017 = vmul.f32 %v2006, %v1947
        %v2018 = vmul.f32 %v2006, %v1948
        %v2019 = vmul.f32 %v2006, %v1949
        %v2020 = vmul.f32 %v2006, %v1950
        %v2021 = vmul.f32 %v2006, %v1951
        %v2022 = vmul.f32 %v2006, %v1952
        %v2023 = vmul.f32 %v2006, %v1953
        %v2024 = vmul.f32 %v2006, %v1954
        %v2025 = vmul.f32 %v2006, %v1955
        %v2026 = vmul.f32 %v2006, %v1956
        %v2027 = vmul.f32 %v2006, %v1957
        %v2028 = vmul.f32 %v2006, %v1958
        %v2029 = vmul.f32 %v2006, %v1959
        %v2030 = vmul.f32 %v2006, %v1960
        %v2031 = vmul.f32 %v2006, %v1961
        %v2032 = vmul.f32 %v2006, %v1962
        %v2033 = vmul.f32 %v2006, %v1963
        %v2034 = vmul.f32 %v2006, %v1964
        %v2035 = vmul.f32 %v2006, %v1965
        %v2036 = vmul.f32 %v2006, %v1966
        %v2037 = vmul.f32 %v2006, %v1967
        %v2038 = vmul.f32 %v2006, %v1968
        %v2039 = vmul.f32 %v2006, %v1969
        %v2040 = vmul.f32 %v2006, %v1970
        %v2041 = vmul.f32 %v2006, %v1971
        %v2042 = vmul.f32 %v2006, %v1972
        %v2043 = vmul.f32 %v2006, %v1973
        %v2044 = vmul.f32 %v2006, %v1974
        %v2045 = vmul.f32 %v2006, %v1975
        %v2046 = vmul.f32 %v2006, %v1976
        %v2047 = vmul.f32 %v2006, %v1977
        %v2048 = vmul.f32 %v2006, %v1978
        %v2049 = vmul.f32 %v2006, %v1979
        %v2050 = vmul.f32 %v2006, %v1980
        %v2051 = vmul.f32 %v2006, %v1981
        %v2052 = vmul.f32 %v2006, %v1982
        %v2053 = vmul.f32 %v2006, %v1983
        %v2054 = vmul.f32 %v2006, %v1984
        %v2055 = vmul.f32 %v2006, %v1985
        %v2056 = vmul.f32 %v2006, %v1986
        %v2057 = vmul.f32 %v2006, %v1987
        %v2058 = vmul.f32 %v2006, %v1988
        %v2059 = vmul.f32 %v2006, %v1989
        %v2060 = vmul.f32 %v2006, %v1990
        %v2061 = vmul.f32 %v2006, %v1991
        %v2062 = vmul.f32 %v2006, %v1992
        %v2063 = vmul.f32 %v2006, %v1993
        %v2064 = vmul.f32 %v2006, %v1994
        %v2065 = vmul.f32 %v2006, %v1995
        %v2066 = vmul.f32 %v2006, %v1996
        %v2067 = vmul.f32 %v2006, %v1997
        %v2068 = vmul.f32 %v2006, %v1998
        %v2069 = vmul.f32 %v2006, %v1999
        %v2070 = vmul.f32 %v2006, %v2000
        %v2071 = vmul.f32 %v2006, %v2001
        %s2072 = scalar_lea.vmem %s2, 48
        %v2073 = vld [vmem:[%s2072] sm:$0xff]
        %v2074 = vld [vmem:[%s2072 + $0x8] sm:$0xff]
        %v2075 = vld [vmem:[%s2072 + $0x10] sm:$0xff]
        %v2076 = vld [vmem:[%s2072 + $0x18] sm:$0xff]
        %v2077 = vld [vmem:[%s2072 + $0x20] sm:$0xff]
        %v2078 = vld [vmem:[%s2072 + $0x28] sm:$0xff]
        %v2080 = vsel %vm320, %v2008, 0
        %v2083 = vsel %vm320, %v2009, 0
        %v2086 = vsel %vm320, %v2010, 0
        %v2089 = vsel %vm320, %v2011, 0
        %v2092 = vsel %vm320, %v2012, 0
        %v2095 = vsel %vm320, %v2013, 0
        %v2098 = vsel %vm320, %v2014, 0
        %v2101 = vsel %vm320, %v2015, 0
        %v2104 = vsel %vm320, %v2016, 0
        %v2107 = vsel %vm320, %v2017, 0
        %v2110 = vsel %vm320, %v2018, 0
        %v2113 = vsel %vm320, %v2019, 0
        %v2116 = vsel %vm320, %v2020, 0
        %v2119 = vsel %vm320, %v2021, 0
        %v2122 = vsel %vm320, %v2022, 0
        %v2125 = vsel %vm320, %v2023, 0
        %v2128 = vsel %vm320, %v2024, 0
        %v2131 = vsel %vm320, %v2025, 0
        %v2134 = vsel %vm320, %v2026, 0
        %v2137 = vsel %vm320, %v2027, 0
        %v2140 = vsel %vm320, %v2028, 0
        %v2143 = vsel %vm320, %v2029, 0
        %v2146 = vsel %vm320, %v2030, 0
        %v2149 = vsel %vm320, %v2031, 0
        %v2152 = vsel %vm320, %v2032, 0
        %v2155 = vsel %vm320, %v2033, 0
        %v2158 = vsel %vm320, %v2034, 0
        %v2161 = vsel %vm320, %v2035, 0
        %v2164 = vsel %vm320, %v2036, 0
        %v2167 = vsel %vm320, %v2037, 0
        %v2170 = vsel %vm320, %v2038, 0
        %v2173 = vsel %vm320, %v2039, 0
        %v2176 = vsel %vm320, %v2040, 0
        %v2179 = vsel %vm320, %v2041, 0
        %v2182 = vsel %vm320, %v2042, 0
        %v2185 = vsel %vm320, %v2043, 0
        %v2188 = vsel %vm320, %v2044, 0
        %v2191 = vsel %vm320, %v2045, 0
        %v2194 = vsel %vm320, %v2046, 0
        %v2197 = vsel %vm320, %v2047, 0
        %v2200 = vsel %vm320, %v2048, 0
        %v2203 = vsel %vm320, %v2049, 0
        %v2206 = vsel %vm320, %v2050, 0
        %v2209 = vsel %vm320, %v2051, 0
        %v2212 = vsel %vm320, %v2052, 0
        %v2215 = vsel %vm320, %v2053, 0
        %v2218 = vsel %vm320, %v2054, 0
        %v2221 = vsel %vm320, %v2055, 0
        %v2224 = vsel %vm320, %v2056, 0
        %v2227 = vsel %vm320, %v2057, 0
        %v2230 = vsel %vm320, %v2058, 0
        %v2233 = vsel %vm320, %v2059, 0
        %v2236 = vsel %vm320, %v2060, 0
        %v2239 = vsel %vm320, %v2061, 0
        %v2242 = vsel %vm320, %v2062, 0
        %v2245 = vsel %vm320, %v2063, 0
        %v2248 = vsel %vm320, %v2064, 0
        %v2251 = vsel %vm320, %v2065, 0
        %v2254 = vsel %vm320, %v2066, 0
        %v2257 = vsel %vm320, %v2067, 0
        %v2260 = vsel %vm320, %v2068, 0
        %v2263 = vsel %vm320, %v2069, 0
        %v2266 = vsel %vm320, %v2070, 0
        %v2269 = vsel %vm320, %v2071, 0
        %2271 = vmatprep.subr.mxu0 0.0
        %2272 = vmatpush1.msra.mxu0 %v2073
        %2273 = vmatprep.subr.mxu0 0.0
        %2274 = vmatpush1.msra.mxu0 %v2074
        %2275 = vmatprep.subr.mxu0 0.0
        %2276 = vmatpush1.msra.mxu0 %v2075
        %2277 = vmatprep.subr.mxu0 0.0
        %2278 = vmatpush1.msra.mxu0 %v2076
        %2279 = vmatprep.subr.mxu0 0.0
        %2280 = vmatpush1.msra.mxu0 %v2077
        %2281 = vmatprep.subr.mxu0 0.0
        %2282 = vmatpush1.msra.mxu0 %v2078
        %2283 = vmatprep.subr.mxu0 0.0
        %2284 = vmatpush1.msra.mxu0 0.0
        %2285 = vmatprep.subr.mxu0 0.0
        %2286 = vmatpush1.msra.mxu0 0.0
        %2287 = vmatprep.subr.mxu0 0.0
        %2288 = vmatpush1.msra.mxu0 0.0
        %2289 = vmatprep.subr.mxu0 0.0
        %2290 = vmatpush1.msra.mxu0 0.0
        %2291 = vmatprep.subr.mxu0 0.0
        %2292 = vmatpush1.msra.mxu0 0.0
        %2293 = vmatprep.subr.mxu0 0.0
        %2294 = vmatpush1.msra.mxu0 0.0
        %2295 = vmatprep.subr.mxu0 0.0
        %2296 = vmatpush1.msra.mxu0 0.0
        %2297 = vmatprep.subr.mxu0 0.0
        %2298 = vmatpush1.msra.mxu0 0.0
        %2299 = vmatprep.subr.mxu0 0.0
        %2300 = vmatpush1.msra.mxu0 0.0
        %2301 = vmatprep.subr.mxu0 0.0
        %2302 = vmatpush1.msra.mxu0 0.0
        %2303 = vmatprep.subr.mxu0 0.0
        %2304 = vmatpush1.msra.mxu0 0.0
        %2305 = vmatprep.subr.mxu0 0.0
        %2306 = vmatpush1.msra.mxu0 0.0
        %2307 = vmatprep.subr.mxu0 0.0
        %2308 = vmatpush1.msra.mxu0 0.0
        %2309 = vmatprep.subr.mxu0 0.0
        %2310 = vmatpush1.msra.mxu0 0.0
        %2311 = vmatprep.subr.mxu0 0.0
        %2312 = vmatpush1.msra.mxu0 0.0
        %2313 = vmatprep.subr.mxu0 0.0
        %2314 = vmatpush1.msra.mxu0 0.0
        %2315 = vmatprep.subr.mxu0 0.0
        %2316 = vmatpush1.msra.mxu0 0.0
        %2317 = vmatprep.subr.mxu0 0.0
        %2318 = vmatpush1.msra.mxu0 0.0
        %2319 = vmatprep.subr.mxu0 0.0
        %2320 = vmatpush1.msra.mxu0 0.0
        %2321 = vmatprep.subr.mxu0 0.0
        %2322 = vmatpush1.msra.mxu0 0.0
        %2323 = vmatprep.subr.mxu0 0.0
        %2324 = vmatpush1.msra.mxu0 0.0
        %2325 = vmatprep.subr.mxu0 0.0
        %2326 = vmatpush1.msra.mxu0 0.0
        %2327 = vmatprep.subr.mxu0 0.0
        %2328 = vmatpush1.msra.mxu0 0.0
        %2329 = vmatprep.subr.mxu0 0.0
        %2330 = vmatpush1.msra.mxu0 0.0
        %2331 = vmatprep.subr.mxu0 0.0
        %2332 = vmatpush1.msra.mxu0 0.0
        %2333 = vmatprep.subr.mxu0 0.0
        %2334 = vmatpush1.msra.mxu0 0.0
        %2335 = vmatprep.mubr.f32.mxu0 0.0
        %2336 = vmatmul.mubr.f32.gmra.mrb[0].mxu0 %v2080
        %v2337 = vpop.f32.mrb[0].mxu0
        %v2338 = vadd.f32 0.0, %v2337
        %v2339 = vpop.f32.mrb[0].mxu0
        %2340 = vmatprep.mubr.f32.mxu0 0.0
        %2341 = vmatmul.mubr.f32.gmra.mrb[0].mxu0 %v2083
        %v2342 = vpop.f32.mrb[0].mxu0
        %v2343 = vadd.f32 0.0, %v2342
        %v2344 = vpop.f32.mrb[0].mxu0
        %2345 = vmatprep.mubr.f32.mxu0 0.0
        %2346 = vmatmul.mubr.f32.gmra.mrb[0].mxu0 %v2086
        %v2347 = vpop.f32.mrb[0].mxu0
        %v2348 = vadd.f32 0.0, %v2347
        %v2349 = vpop.f32.mrb[0].mxu0
        %2350 = vmatprep.mubr.f32.mxu0 0.0
        %2351 = vmatmul.mubr.f32.gmra.mrb[0].mxu0 %v2089
        %v2352 = vpop.f32.mrb[0].mxu0
        %v2353 = vadd.f32 0.0, %v2352
        %v2354 = vpop.f32.mrb[0].mxu0
        %2355 = vmatprep.mubr.f32.mxu0 0.0
        %2356 = vmatmul.mubr.f32.gmra.mrb[0].mxu0 %v2092
        %v2357 = vpop.f32.mrb[0].mxu0
        %v2358 = vadd.f32 0.0, %v2357
        %v2359 = vpop.f32.mrb[0].mxu0
        %2360 = vmatprep.mubr.f32.mxu0 0.0
        %2361 = vmatmul.mubr.f32.gmra.mrb[0].mxu0 %v2095
        %v2362 = vpop.f32.mrb[0].mxu0
        %v2363 = vadd.f32 0.0, %v2362
        %v2364 = vpop.f32.mrb[0].mxu0
        %2365 = vmatprep.mubr.f32.mxu0 0.0
        %2366 = vmatmul.mubr.f32.gmra.mrb[0].mxu0 %v2098
        %v2367 = vpop.f32.mrb[0].mxu0
        %v2368 = vadd.f32 0.0, %v2367
        %v2369 = vpop.f32.mrb[0].mxu0
        %2370 = vmatprep.mubr.f32.mxu0 0.0
        %2371 = vmatmul.mubr.f32.gmra.mrb[0].mxu0 %v2101
        %v2372 = vpop.f32.mrb[0].mxu0
        %v2373 = vadd.f32 0.0, %v2372
        %v2374 = vpop.f32.mrb[0].mxu0
        %2375 = vmatprep.mubr.f32.mxu0 0.0
        %2376 = vmatmul.mubr.f32.gmra.mrb[0].mxu0 %v2104
        %v2377 = vpop.f32.mrb[0].mxu0
        %v2378 = vadd.f32 0.0, %v2377
        %v2379 = vpop.f32.mrb[0].mxu0
        %2380 = vmatprep.mubr.f32.mxu0 0.0
        %2381 = vmatmul.mubr.f32.gmra.mrb[0].mxu0 %v2107
        %v2382 = vpop.f32.mrb[0].mxu0
        %v2383 = vadd.f32 0.0, %v2382
        %v2384 = vpop.f32.mrb[0].mxu0
        %2385 = vmatprep.mubr.f32.mxu0 0.0
        %2386 = vmatmul.mubr.f32.gmra.mrb[0].mxu0 %v2110
        %v2387 = vpop.f32.mrb[0].mxu0
        %v2388 = vadd.f32 0.0, %v2387
        %v2389 = vpop.f32.mrb[0].mxu0
        %2390 = vmatprep.mubr.f32.mxu0 0.0
        %2391 = vmatmul.mubr.f32.gmra.mrb[0].mxu0 %v2113
        %v2392 = vpop.f32.mrb[0].mxu0
        %v2393 = vadd.f32 0.0, %v2392
        %v2394 = vpop.f32.mrb[0].mxu0
        %2395 = vmatprep.mubr.f32.mxu0 0.0
        %2396 = vmatmul.mubr.f32.gmra.mrb[0].mxu0 %v2116
        %v2397 = vpop.f32.mrb[0].mxu0
        %v2398 = vadd.f32 0.0, %v2397
        %v2399 = vpop.f32.mrb[0].mxu0
        %2400 = vmatprep.mubr.f32.mxu0 0.0
        %2401 = vmatmul.mubr.f32.gmra.mrb[0].mxu0 %v2119
        %v2402 = vpop.f32.mrb[0].mxu0
        %v2403 = vadd.f32 0.0, %v2402
        %v2404 = vpop.f32.mrb[0].mxu0
        %2405 = vmatprep.mubr.f32.mxu0 0.0
        %2406 = vmatmul.mubr.f32.gmra.mrb[0].mxu0 %v2122
        %v2407 = vpop.f32.mrb[0].mxu0
        %v2408 = vadd.f32 0.0, %v2407
        %v2409 = vpop.f32.mrb[0].mxu0
        %2410 = vmatprep.mubr.f32.mxu0 0.0
        %2411 = vmatmul.mubr.f32.gmra.mrb[0].mxu0 %v2125
        %v2412 = vpop.f32.mrb[0].mxu0
        %v2413 = vadd.f32 0.0, %v2412
        %v2414 = vpop.f32.mrb[0].mxu0
        %2415 = vmatprep.mubr.f32.mxu0 0.0
        %2416 = vmatmul.mubr.f32.gmra.mrb[0].mxu0 %v2128
        %v2417 = vpop.f32.mrb[0].mxu0
        %v2418 = vadd.f32 0.0, %v2417
        %v2419 = vpop.f32.mrb[0].mxu0
        %2420 = vmatprep.mubr.f32.mxu0 0.0
        %2421 = vmatmul.mubr.f32.gmra.mrb[0].mxu0 %v2131
        %v2422 = vpop.f32.mrb[0].mxu0
        %v2423 = vadd.f32 0.0, %v2422
        %v2424 = vpop.f32.mrb[0].mxu0
        %2425 = vmatprep.mubr.f32.mxu0 0.0
        %2426 = vmatmul.mubr.f32.gmra.mrb[0].mxu0 %v2134
        %v2427 = vpop.f32.mrb[0].mxu0
        %v2428 = vadd.f32 0.0, %v2427
        %v2429 = vpop.f32.mrb[0].mxu0
        %2430 = vmatprep.mubr.f32.mxu0 0.0
        %2431 = vmatmul.mubr.f32.gmra.mrb[0].mxu0 %v2137
        %v2432 = vpop.f32.mrb[0].mxu0
        %v2433 = vadd.f32 0.0, %v2432
        %v2434 = vpop.f32.mrb[0].mxu0
        %2435 = vmatprep.mubr.f32.mxu0 0.0
        %2436 = vmatmul.mubr.f32.gmra.mrb[0].mxu0 %v2140
        %v2437 = vpop.f32.mrb[0].mxu0
        %v2438 = vadd.f32 0.0, %v2437
        %v2439 = vpop.f32.mrb[0].mxu0
        %2440 = vmatprep.mubr.f32.mxu0 0.0
        %2441 = vmatmul.mubr.f32.gmra.mrb[0].mxu0 %v2143
        %v2442 = vpop.f32.mrb[0].mxu0
        %v2443 = vadd.f32 0.0, %v2442
        %v2444 = vpop.f32.mrb[0].mxu0
        %2445 = vmatprep.mubr.f32.mxu0 0.0
        %2446 = vmatmul.mubr.f32.gmra.mrb[0].mxu0 %v2146
        %v2447 = vpop.f32.mrb[0].mxu0
        %v2448 = vadd.f32 0.0, %v2447
        %v2449 = vpop.f32.mrb[0].mxu0
        %2450 = vmatprep.mubr.f32.mxu0 0.0
        %2451 = vmatmul.mubr.f32.gmra.mrb[0].mxu0 %v2149
        %v2452 = vpop.f32.mrb[0].mxu0
        %v2453 = vadd.f32 0.0, %v2452
        %v2454 = vpop.f32.mrb[0].mxu0
        %2455 = vmatprep.mubr.f32.mxu0 0.0
        %2456 = vmatmul.mubr.f32.gmra.mrb[0].mxu0 %v2152
        %v2457 = vpop.f32.mrb[0].mxu0
        %v2458 = vadd.f32 0.0, %v2457
        %v2459 = vpop.f32.mrb[0].mxu0
        %2460 = vmatprep.mubr.f32.mxu0 0.0
        %2461 = vmatmul.mubr.f32.gmra.mrb[0].mxu0 %v2155
        %v2462 = vpop.f32.mrb[0].mxu0
        %v2463 = vadd.f32 0.0, %v2462
        %v2464 = vpop.f32.mrb[0].mxu0
        %2465 = vmatprep.mubr.f32.mxu0 0.0
        %2466 = vmatmul.mubr.f32.gmra.mrb[0].mxu0 %v2158
        %v2467 = vpop.f32.mrb[0].mxu0
        %v2468 = vadd.f32 0.0, %v2467
        %v2469 = vpop.f32.mrb[0].mxu0
        %2470 = vmatprep.mubr.f32.mxu0 0.0
        %2471 = vmatmul.mubr.f32.gmra.mrb[0].mxu0 %v2161
        %v2472 = vpop.f32.mrb[0].mxu0
        %v2473 = vadd.f32 0.0, %v2472
        %v2474 = vpop.f32.mrb[0].mxu0
        %2475 = vmatprep.mubr.f32.mxu0 0.0
        %2476 = vmatmul.mubr.f32.gmra.mrb[0].mxu0 %v2164
        %v2477 = vpop.f32.mrb[0].mxu0
        %v2478 = vadd.f32 0.0, %v2477
        %v2479 = vpop.f32.mrb[0].mxu0
        %2480 = vmatprep.mubr.f32.mxu0 0.0
        %2481 = vmatmul.mubr.f32.gmra.mrb[0].mxu0 %v2167
        %v2482 = vpop.f32.mrb[0].mxu0
        %v2483 = vadd.f32 0.0, %v2482
        %v2484 = vpop.f32.mrb[0].mxu0
        %2485 = vmatprep.mubr.f32.mxu0 0.0
        %2486 = vmatmul.mubr.f32.gmra.mrb[0].mxu0 %v2170
        %v2487 = vpop.f32.mrb[0].mxu0
        %v2488 = vadd.f32 0.0, %v2487
        %v2489 = vpop.f32.mrb[0].mxu0
        %2490 = vmatprep.mubr.f32.mxu0 0.0
        %2491 = vmatmul.mubr.f32.gmra.mrb[0].mxu0 %v2173
        %v2492 = vpop.f32.mrb[0].mxu0
        %v2493 = vadd.f32 0.0, %v2492
        %v2494 = vpop.f32.mrb[0].mxu0
        %2495 = vmatprep.mubr.f32.mxu0 0.0
        %2496 = vmatmul.mubr.f32.gmra.mrb[0].mxu0 %v2176
        %v2497 = vpop.f32.mrb[0].mxu0
        %v2498 = vadd.f32 0.0, %v2497
        %v2499 = vpop.f32.mrb[0].mxu0
        %2500 = vmatprep.mubr.f32.mxu0 0.0
        %2501 = vmatmul.mubr.f32.gmra.mrb[0].mxu0 %v2179
        %v2502 = vpop.f32.mrb[0].mxu0
        %v2503 = vadd.f32 0.0, %v2502
        %v2504 = vpop.f32.mrb[0].mxu0
        %2505 = vmatprep.mubr.f32.mxu0 0.0
        %2506 = vmatmul.mubr.f32.gmra.mrb[0].mxu0 %v2182
        %v2507 = vpop.f32.mrb[0].mxu0
        %v2508 = vadd.f32 0.0, %v2507
        %v2509 = vpop.f32.mrb[0].mxu0
        %2510 = vmatprep.mubr.f32.mxu0 0.0
        %2511 = vmatmul.mubr.f32.gmra.mrb[0].mxu0 %v2185
        %v2512 = vpop.f32.mrb[0].mxu0
        %v2513 = vadd.f32 0.0, %v2512
        %v2514 = vpop.f32.mrb[0].mxu0
        %2515 = vmatprep.mubr.f32.mxu0 0.0
        %2516 = vmatmul.mubr.f32.gmra.mrb[0].mxu0 %v2188
        %v2517 = vpop.f32.mrb[0].mxu0
        %v2518 = vadd.f32 0.0, %v2517
        %v2519 = vpop.f32.mrb[0].mxu0
        %2520 = vmatprep.mubr.f32.mxu0 0.0
        %2521 = vmatmul.mubr.f32.gmra.mrb[0].mxu0 %v2191
        %v2522 = vpop.f32.mrb[0].mxu0
        %v2523 = vadd.f32 0.0, %v2522
        %v2524 = vpop.f32.mrb[0].mxu0
        %2525 = vmatprep.mubr.f32.mxu0 0.0
        %2526 = vmatmul.mubr.f32.gmra.mrb[0].mxu0 %v2194
        %v2527 = vpop.f32.mrb[0].mxu0
        %v2528 = vadd.f32 0.0, %v2527
        %v2529 = vpop.f32.mrb[0].mxu0
        %2530 = vmatprep.mubr.f32.mxu0 0.0
        %2531 = vmatmul.mubr.f32.gmra.mrb[0].mxu0 %v2197
        %v2532 = vpop.f32.mrb[0].mxu0
        %v2533 = vadd.f32 0.0, %v2532
        %v2534 = vpop.f32.mrb[0].mxu0
        %2535 = vmatprep.mubr.f32.mxu0 0.0
        %2536 = vmatmul.mubr.f32.gmra.mrb[0].mxu0 %v2200
        %v2537 = vpop.f32.mrb[0].mxu0
        %v2538 = vadd.f32 0.0, %v2537
        %v2539 = vpop.f32.mrb[0].mxu0
        %2540 = vmatprep.mubr.f32.mxu0 0.0
        %2541 = vmatmul.mubr.f32.gmra.mrb[0].mxu0 %v2203
        %v2542 = vpop.f32.mrb[0].mxu0
        %v2543 = vadd.f32 0.0, %v2542
        %v2544 = vpop.f32.mrb[0].mxu0
        %2545 = vmatprep.mubr.f32.mxu0 0.0
        %2546 = vmatmul.mubr.f32.gmra.mrb[0].mxu0 %v2206
        %v2547 = vpop.f32.mrb[0].mxu0
        %v2548 = vadd.f32 0.0, %v2547
        %v2549 = vpop.f32.mrb[0].mxu0
        %2550 = vmatprep.mubr.f32.mxu0 0.0
        %2551 = vmatmul.mubr.f32.gmra.mrb[0].mxu0 %v2209
        %v2552 = vpop.f32.mrb[0].mxu0
        %v2553 = vadd.f32 0.0, %v2552
        %v2554 = vpop.f32.mrb[0].mxu0
        %2555 = vmatprep.mubr.f32.mxu0 0.0
        %2556 = vmatmul.mubr.f32.gmra.mrb[0].mxu0 %v2212
        %v2557 = vpop.f32.mrb[0].mxu0
        %v2558 = vadd.f32 0.0, %v2557
        %v2559 = vpop.f32.mrb[0].mxu0
        %2560 = vmatprep.mubr.f32.mxu0 0.0
        %2561 = vmatmul.mubr.f32.gmra.mrb[0].mxu0 %v2215
        %v2562 = vpop.f32.mrb[0].mxu0
        %v2563 = vadd.f32 0.0, %v2562
        %v2564 = vpop.f32.mrb[0].mxu0
        %2565 = vmatprep.mubr.f32.mxu0 0.0
        %2566 = vmatmul.mubr.f32.gmra.mrb[0].mxu0 %v2218
        %v2567 = vpop.f32.mrb[0].mxu0
        %v2568 = vadd.f32 0.0, %v2567
        %v2569 = vpop.f32.mrb[0].mxu0
        %2570 = vmatprep.mubr.f32.mxu0 0.0
        %2571 = vmatmul.mubr.f32.gmra.mrb[0].mxu0 %v2221
        %v2572 = vpop.f32.mrb[0].mxu0
        %v2573 = vadd.f32 0.0, %v2572
        %v2574 = vpop.f32.mrb[0].mxu0
        %2575 = vmatprep.mubr.f32.mxu0 0.0
        %2576 = vmatmul.mubr.f32.gmra.mrb[0].mxu0 %v2224
        %v2577 = vpop.f32.mrb[0].mxu0
        %v2578 = vadd.f32 0.0, %v2577
        %v2579 = vpop.f32.mrb[0].mxu0
        %2580 = vmatprep.mubr.f32.mxu0 0.0
        %2581 = vmatmul.mubr.f32.gmra.mrb[0].mxu0 %v2227
        %v2582 = vpop.f32.mrb[0].mxu0
        %v2583 = vadd.f32 0.0, %v2582
        %v2584 = vpop.f32.mrb[0].mxu0
        %2585 = vmatprep.mubr.f32.mxu0 0.0
        %2586 = vmatmul.mubr.f32.gmra.mrb[0].mxu0 %v2230
        %v2587 = vpop.f32.mrb[0].mxu0
        %v2588 = vadd.f32 0.0, %v2587
        %v2589 = vpop.f32.mrb[0].mxu0
        %2590 = vmatprep.mubr.f32.mxu0 0.0
        %2591 = vmatmul.mubr.f32.gmra.mrb[0].mxu0 %v2233
        %v2592 = vpop.f32.mrb[0].mxu0
        %v2593 = vadd.f32 0.0, %v2592
        %v2594 = vpop.f32.mrb[0].mxu0
        %2595 = vmatprep.mubr.f32.mxu0 0.0
        %2596 = vmatmul.mubr.f32.gmra.mrb[0].mxu0 %v2236
        %v2597 = vpop.f32.mrb[0].mxu0
        %v2598 = vadd.f32 0.0, %v2597
        %v2599 = vpop.f32.mrb[0].mxu0
        %2600 = vmatprep.mubr.f32.mxu0 0.0
        %2601 = vmatmul.mubr.f32.gmra.mrb[0].mxu0 %v2239
        %v2602 = vpop.f32.mrb[0].mxu0
        %v2603 = vadd.f32 0.0, %v2602
        %v2604 = vpop.f32.mrb[0].mxu0
        %2605 = vmatprep.mubr.f32.mxu0 0.0
        %2606 = vmatmul.mubr.f32.gmra.mrb[0].mxu0 %v2242
        %v2607 = vpop.f32.mrb[0].mxu0
        %v2608 = vadd.f32 0.0, %v2607
        %v2609 = vpop.f32.mrb[0].mxu0
        %2610 = vmatprep.mubr.f32.mxu0 0.0
        %2611 = vmatmul.mubr.f32.gmra.mrb[0].mxu0 %v2245
        %v2612 = vpop.f32.mrb[0].mxu0
        %v2613 = vadd.f32 0.0, %v2612
        %v2614 = vpop.f32.mrb[0].mxu0
        %2615 = vmatprep.mubr.f32.mxu0 0.0
        %2616 = vmatmul.mubr.f32.gmra.mrb[0].mxu0 %v2248
        %v2617 = vpop.f32.mrb[0].mxu0
        %v2618 = vadd.f32 0.0, %v2617
        %v2619 = vpop.f32.mrb[0].mxu0
        %2620 = vmatprep.mubr.f32.mxu0 0.0
        %2621 = vmatmul.mubr.f32.gmra.mrb[0].mxu0 %v2251
        %v2622 = vpop.f32.mrb[0].mxu0
        %v2623 = vadd.f32 0.0, %v2622
        %v2624 = vpop.f32.mrb[0].mxu0
        %2625 = vmatprep.mubr.f32.mxu0 0.0
        %2626 = vmatmul.mubr.f32.gmra.mrb[0].mxu0 %v2254
        %v2627 = vpop.f32.mrb[0].mxu0
        %v2628 = vadd.f32 0.0, %v2627
        %v2629 = vpop.f32.mrb[0].mxu0
        %2630 = vmatprep.mubr.f32.mxu0 0.0
        %2631 = vmatmul.mubr.f32.gmra.mrb[0].mxu0 %v2257
        %v2632 = vpop.f32.mrb[0].mxu0
        %v2633 = vadd.f32 0.0, %v2632
        %v2634 = vpop.f32.mrb[0].mxu0
        %2635 = vmatprep.mubr.f32.mxu0 0.0
        %2636 = vmatmul.mubr.f32.gmra.mrb[0].mxu0 %v2260
        %v2637 = vpop.f32.mrb[0].mxu0
        %v2638 = vadd.f32 0.0, %v2637
        %v2639 = vpop.f32.mrb[0].mxu0
        %2640 = vmatprep.mubr.f32.mxu0 0.0
        %2641 = vmatmul.mubr.f32.gmra.mrb[0].mxu0 %v2263
        %v2642 = vpop.f32.mrb[0].mxu0
        %v2643 = vadd.f32 0.0, %v2642
        %v2644 = vpop.f32.mrb[0].mxu0
        %2645 = vmatprep.mubr.f32.mxu0 0.0
        %2646 = vmatmul.mubr.f32.gmra.mrb[0].mxu0 %v2266
        %v2647 = vpop.f32.mrb[0].mxu0
        %v2648 = vadd.f32 0.0, %v2647
        %v2649 = vpop.f32.mrb[0].mxu0
        %2650 = vmatprep.mubr.f32.mxu0 0.0
        %2651 = vmatmul.mubr.f32.gmra.mrb[0].mxu0 %v2269
        %v2652 = vpop.f32.mrb[0].mxu0
        %v2653 = vadd.f32 0.0, %v2652
        %v2654 = vpop.f32.mrb[0].mxu0
        %2655 = vdwg.mxu0
        %v2656 = vadd.f32 %v1424, %v2338
        %v2657 = vadd.f32 %v1425, %v2343
        %v2658 = vadd.f32 %v1426, %v2348
        %v2659 = vadd.f32 %v1427, %v2353
        %v2660 = vadd.f32 %v1428, %v2358
        %v2661 = vadd.f32 %v1429, %v2363
        %v2662 = vadd.f32 %v1430, %v2368
        %v2663 = vadd.f32 %v1431, %v2373
        %v2664 = vadd.f32 %v1432, %v2378
        %v2665 = vadd.f32 %v1433, %v2383
        %v2666 = vadd.f32 %v1434, %v2388
        %v2667 = vadd.f32 %v1435, %v2393
        %v2668 = vadd.f32 %v1436, %v2398
        %v2669 = vadd.f32 %v1437, %v2403
        %v2670 = vadd.f32 %v1438, %v2408
        %v2671 = vadd.f32 %v1439, %v2413
        %v2672 = vadd.f32 %v1440, %v2418
        %v2673 = vadd.f32 %v1441, %v2423
        %v2674 = vadd.f32 %v1442, %v2428
        %v2675 = vadd.f32 %v1443, %v2433
        %v2676 = vadd.f32 %v1444, %v2438
        %v2677 = vadd.f32 %v1445, %v2443
        %v2678 = vadd.f32 %v1446, %v2448
        %v2679 = vadd.f32 %v1447, %v2453
        %v2680 = vadd.f32 %v1448, %v2458
        %v2681 = vadd.f32 %v1449, %v2463
        %v2682 = vadd.f32 %v1450, %v2468
        %v2683 = vadd.f32 %v1451, %v2473
        %v2684 = vadd.f32 %v1452, %v2478
        %v2685 = vadd.f32 %v1453, %v2483
        %v2686 = vadd.f32 %v1454, %v2488
        %v2687 = vadd.f32 %v1455, %v2493
        %v2688 = vadd.f32 %v1456, %v2498
        %v2689 = vadd.f32 %v1457, %v2503
        %v2690 = vadd.f32 %v1458, %v2508
        %v2691 = vadd.f32 %v1459, %v2513
        %v2692 = vadd.f32 %v1460, %v2518
        %v2693 = vadd.f32 %v1461, %v2523
        %v2694 = vadd.f32 %v1462, %v2528
        %v2695 = vadd.f32 %v1463, %v2533
        %v2696 = vadd.f32 %v1464, %v2538
        %v2697 = vadd.f32 %v1465, %v2543
        %v2698 = vadd.f32 %v1466, %v2548
        %v2699 = vadd.f32 %v1467, %v2553
        %v2700 = vadd.f32 %v1468, %v2558
        %v2701 = vadd.f32 %v1469, %v2563
        %v2702 = vadd.f32 %v1470, %v2568
        %v2703 = vadd.f32 %v1471, %v2573
        %v2704 = vadd.f32 %v1472, %v2578
        %v2705 = vadd.f32 %v1473, %v2583
        %v2706 = vadd.f32 %v1474, %v2588
        %v2707 = vadd.f32 %v1475, %v2593
        %v2708 = vadd.f32 %v1476, %v2598
        %v2709 = vadd.f32 %v1477, %v2603
        %v2710 = vadd.f32 %v1478, %v2608
        %v2711 = vadd.f32 %v1479, %v2613
        %v2712 = vadd.f32 %v1480, %v2618
        %v2713 = vadd.f32 %v1481, %v2623
        %v2714 = vadd.f32 %v1482, %v2628
        %v2715 = vadd.f32 %v1483, %v2633
        %v2716 = vadd.f32 %v1484, %v2638
        %v2717 = vadd.f32 %v1485, %v2643
        %v2718 = vadd.f32 %v1486, %v2648
        %v2719 = vadd.f32 %v1487, %v2653
        %2720 = vst.msk [vmem:[%s172] sm:$0xff] %vm320, %v2656
        %2721 = vst.msk [vmem:[%s172 + $0x8] sm:$0xff] %vm320, %v2657
        %2722 = vst.msk [vmem:[%s172 + $0x10] sm:$0xff] %vm320, %v2658
        %2723 = vst.msk [vmem:[%s172 + $0x18] sm:$0xff] %vm320, %v2659
        %2724 = vst.msk [vmem:[%s172 + $0x20] sm:$0xff] %vm320, %v2660
        %2725 = vst.msk [vmem:[%s172 + $0x28] sm:$0xff] %vm320, %v2661
        %2726 = vst.msk [vmem:[%s172 + $0x30] sm:$0xff] %vm320, %v2662
        %2727 = vst.msk [vmem:[%s172 + $0x38] sm:$0xff] %vm320, %v2663
        %2728 = vst.msk [vmem:[%s172 + $0x40] sm:$0xff] %vm320, %v2664
        %2729 = vst.msk [vmem:[%s172 + $0x48] sm:$0xff] %vm320, %v2665
        %2730 = vst.msk [vmem:[%s172 + $0x50] sm:$0xff] %vm320, %v2666
        %2731 = vst.msk [vmem:[%s172 + $0x58] sm:$0xff] %vm320, %v2667
        %2732 = vst.msk [vmem:[%s172 + $0x60] sm:$0xff] %vm320, %v2668
        %2733 = vst.msk [vmem:[%s172 + $0x68] sm:$0xff] %vm320, %v2669
        %2734 = vst.msk [vmem:[%s172 + $0x70] sm:$0xff] %vm320, %v2670
        %2735 = vst.msk [vmem:[%s172 + $0x78] sm:$0xff] %vm320, %v2671
        %2736 = vst.msk [vmem:[%s172 + $0x80] sm:$0xff] %vm320, %v2672
        %2737 = vst.msk [vmem:[%s172 + $0x88] sm:$0xff] %vm320, %v2673
        %2738 = vst.msk [vmem:[%s172 + $0x90] sm:$0xff] %vm320, %v2674
        %2739 = vst.msk [vmem:[%s172 + $0x98] sm:$0xff] %vm320, %v2675
        %2740 = vst.msk [vmem:[%s172 + $0xa0] sm:$0xff] %vm320, %v2676
        %2741 = vst.msk [vmem:[%s172 + $0xa8] sm:$0xff] %vm320, %v2677
        %2742 = vst.msk [vmem:[%s172 + $0xb0] sm:$0xff] %vm320, %v2678
        %2743 = vst.msk [vmem:[%s172 + $0xb8] sm:$0xff] %vm320, %v2679
        %2744 = vst.msk [vmem:[%s172 + $0xc0] sm:$0xff] %vm320, %v2680
        %2745 = vst.msk [vmem:[%s172 + $0xc8] sm:$0xff] %vm320, %v2681
        %2746 = vst.msk [vmem:[%s172 + $0xd0] sm:$0xff] %vm320, %v2682
        %2747 = vst.msk [vmem:[%s172 + $0xd8] sm:$0xff] %vm320, %v2683
        %2748 = vst.msk [vmem:[%s172 + $0xe0] sm:$0xff] %vm320, %v2684
        %2749 = vst.msk [vmem:[%s172 + $0xe8] sm:$0xff] %vm320, %v2685
        %2750 = vst.msk [vmem:[%s172 + $0xf0] sm:$0xff] %vm320, %v2686
        %2751 = vst.msk [vmem:[%s172 + $0xf8] sm:$0xff] %vm320, %v2687
        %2752 = vst.msk [vmem:[%s172 + $0x100] sm:$0xff] %vm320, %v2688
        %2753 = vst.msk [vmem:[%s172 + $0x108] sm:$0xff] %vm320, %v2689
        %2754 = vst.msk [vmem:[%s172 + $0x110] sm:$0xff] %vm320, %v2690
        %2755 = vst.msk [vmem:[%s172 + $0x118] sm:$0xff] %vm320, %v2691
        %2756 = vst.msk [vmem:[%s172 + $0x120] sm:$0xff] %vm320, %v2692
        %2757 = vst.msk [vmem:[%s172 + $0x128] sm:$0xff] %vm320, %v2693
        %2758 = vst.msk [vmem:[%s172 + $0x130] sm:$0xff] %vm320, %v2694
        %2759 = vst.msk [vmem:[%s172 + $0x138] sm:$0xff] %vm320, %v2695
        %2760 = vst.msk [vmem:[%s172 + $0x140] sm:$0xff] %vm320, %v2696
        %2761 = vst.msk [vmem:[%s172 + $0x148] sm:$0xff] %vm320, %v2697
        %2762 = vst.msk [vmem:[%s172 + $0x150] sm:$0xff] %vm320, %v2698
        %2763 = vst.msk [vmem:[%s172 + $0x158] sm:$0xff] %vm320, %v2699
        %2764 = vst.msk [vmem:[%s172 + $0x160] sm:$0xff] %vm320, %v2700
        %2765 = vst.msk [vmem:[%s172 + $0x168] sm:$0xff] %vm320, %v2701
        %2766 = vst.msk [vmem:[%s172 + $0x170] sm:$0xff] %vm320, %v2702
        %2767 = vst.msk [vmem:[%s172 + $0x178] sm:$0xff] %vm320, %v2703
        %2768 = vst.msk [vmem:[%s172 + $0x180] sm:$0xff] %vm320, %v2704
        %2769 = vst.msk [vmem:[%s172 + $0x188] sm:$0xff] %vm320, %v2705
        %2770 = vst.msk [vmem:[%s172 + $0x190] sm:$0xff] %vm320, %v2706
        %2771 = vst.msk [vmem:[%s172 + $0x198] sm:$0xff] %vm320, %v2707
        %2772 = vst.msk [vmem:[%s172 + $0x1a0] sm:$0xff] %vm320, %v2708
        %2773 = vst.msk [vmem:[%s172 + $0x1a8] sm:$0xff] %vm320, %v2709
        %2774 = vst.msk [vmem:[%s172 + $0x1b0] sm:$0xff] %vm320, %v2710
        %2775 = vst.msk [vmem:[%s172 + $0x1b8] sm:$0xff] %vm320, %v2711
        %2776 = vst.msk [vmem:[%s172 + $0x1c0] sm:$0xff] %vm320, %v2712
        %2777 = vst.msk [vmem:[%s172 + $0x1c8] sm:$0xff] %vm320, %v2713
        %2778 = vst.msk [vmem:[%s172 + $0x1d0] sm:$0xff] %vm320, %v2714
        %2779 = vst.msk [vmem:[%s172 + $0x1d8] sm:$0xff] %vm320, %v2715
        %2780 = vst.msk [vmem:[%s172 + $0x1e0] sm:$0xff] %vm320, %v2716
        %2781 = vst.msk [vmem:[%s172 + $0x1e8] sm:$0xff] %vm320, %v2717
        %2782 = vst.msk [vmem:[%s172 + $0x1f0] sm:$0xff] %vm320, %v2718
        %2783 = vst.msk [vmem:[%s172 + $0x1f8] sm:$0xff] %vm320, %v2719
        %s2784 = sand.u32 %s90, 1
        %s2785 = sand.u32 %s90, 1
        %s2786 = smul.addr %s2785, 512
        %s2787 = scalar_lea.vmem [#allocation2], %s2786
        // Predicated region
        $region33: #{tpu_custom_call.1} parent=31 // pred_check
          %p2788 = pneg %p100
        $region34: #{tpu_custom_call.1} parent=31 // pred_check_branch
          %2790 = sbr.rel (%p2788) target = $region36
        $region35: #{tpu_custom_call.1} parent=31 // pred_region
          %s2791 = smul.u32 64, %s14
          %s2792 = ssub.s32 125, %s2791
          %p2793 = scmp.lt.s32.totalorder %s2792, 64
          %s2794 = scalar_select %p2793, %s2792, 64
          %s2795 = smul.u32 128, %s2794
          %p2796 = scmp.ne.s32.totalorder 0, %s2795
          %s2797 = smul.addr %s2791, 8
          %s2798 = scalar_lea.vmem %s3, %s2797
          // Predicated region
          $region37: #{tpu_custom_call.1} parent=35 // pred_check
            %p2799 = pneg %p2796
          $region38: #{tpu_custom_call.1} parent=35 // pred_check_branch
            %2801 = sbr.rel (%p2799) target = $region40
          $region39: #{tpu_custom_call.1} parent=35 // pred_region
            // Predicated region
            $region41: #{tpu_custom_call.1} parent=39 // pred_check
              _
            $region42: #{tpu_custom_call.1} parent=39 // pred_check_branch
              %2803 = sbr.rel (0) target = $region44
            $region43: #{tpu_custom_call.1} parent=39 // pred_region
              // Predicated region
              $region63: #{tpu_custom_call.1} parent=43 // pred_check
                _
              $region64: #{tpu_custom_call.1} parent=43 // pred_check_branch
                %2978 = sbr.rel (0) target = $region66
              $region65: #{tpu_custom_call.1} parent=43 // pred_region
                %s2979 = sshrl.u32 %s2794, 6
                // While loop
                $region67: #{tpu_custom_call.1} parent=65 // loop_pre_header
                  _
                $region68: #{tpu_custom_call.1} parent=65 // loop_header
                  %s2981 = sphi 0, %s2983
                  %p2982 = scmp.ge.s32.totalorder %s2981, %s2979
                  %s2986 = sphi 0, %s3119
                  %s2987 = sphi %s2787, %s3122
                  %s2988 = sphi %s2798, %s3123
                $region69: #{tpu_custom_call.1} parent=65 // loop_header_branch
                  %2985 = sbr.rel (%p2982) target = $region73
                $region70: #{tpu_custom_call.1} parent=65 // loop_body
                  %v2989 = vld [vmem:[%s2987] sm:$0xff]
                  %2990 = vst [vmem:[%s2988] sm:$0xff] %v2989
                  %v2991 = vld [vmem:[%s2987 + $0x8] sm:$0xff]
                  %2992 = vst [vmem:[%s2988 + $0x8] sm:$0xff] %v2991
                  %v2993 = vld [vmem:[%s2987 + $0x10] sm:$0xff]
                  %2994 = vst [vmem:[%s2988 + $0x10] sm:$0xff] %v2993
                  %v2995 = vld [vmem:[%s2987 + $0x18] sm:$0xff]
                  %2996 = vst [vmem:[%s2988 + $0x18] sm:$0xff] %v2995
                  %v2997 = vld [vmem:[%s2987 + $0x20] sm:$0xff]
                  %2998 = vst [vmem:[%s2988 + $0x20] sm:$0xff] %v2997
                  %v2999 = vld [vmem:[%s2987 + $0x28] sm:$0xff]
                  %3000 = vst [vmem:[%s2988 + $0x28] sm:$0xff] %v2999
                  %v3001 = vld [vmem:[%s2987 + $0x30] sm:$0xff]
                  %3002 = vst [vmem:[%s2988 + $0x30] sm:$0xff] %v3001
                  %v3003 = vld [vmem:[%s2987 + $0x38] sm:$0xff]
                  %3004 = vst [vmem:[%s2988 + $0x38] sm:$0xff] %v3003
                  %v3005 = vld [vmem:[%s2987 + $0x40] sm:$0xff]
                  %3006 = vst [vmem:[%s2988 + $0x40] sm:$0xff] %v3005
                  %v3007 = vld [vmem:[%s2987 + $0x48] sm:$0xff]
                  %3008 = vst [vmem:[%s2988 + $0x48] sm:$0xff] %v3007
                  %v3009 = vld [vmem:[%s2987 + $0x50] sm:$0xff]
                  %3010 = vst [vmem:[%s2988 + $0x50] sm:$0xff] %v3009
                  %v3011 = vld [vmem:[%s2987 + $0x58] sm:$0xff]
                  %3012 = vst [vmem:[%s2988 + $0x58] sm:$0xff] %v3011
                  %v3013 = vld [vmem:[%s2987 + $0x60] sm:$0xff]
                  %3014 = vst [vmem:[%s2988 + $0x60] sm:$0xff] %v3013
                  %v3015 = vld [vmem:[%s2987 + $0x68] sm:$0xff]
                  %3016 = vst [vmem:[%s2988 + $0x68] sm:$0xff] %v3015
                  %v3017 = vld [vmem:[%s2987 + $0x70] sm:$0xff]
                  %3018 = vst [vmem:[%s2988 + $0x70] sm:$0xff] %v3017
                  %v3019 = vld [vmem:[%s2987 + $0x78] sm:$0xff]
                  %3020 = vst [vmem:[%s2988 + $0x78] sm:$0xff] %v3019
                  %v3021 = vld [vmem:[%s2987 + $0x80] sm:$0xff]
                  %3022 = vst [vmem:[%s2988 + $0x80] sm:$0xff] %v3021
                  %v3023 = vld [vmem:[%s2987 + $0x88] sm:$0xff]
                  %3024 = vst [vmem:[%s2988 + $0x88] sm:$0xff] %v3023
                  %v3025 = vld [vmem:[%s2987 + $0x90] sm:$0xff]
                  %3026 = vst [vmem:[%s2988 + $0x90] sm:$0xff] %v3025
                  %v3027 = vld [vmem:[%s2987 + $0x98] sm:$0xff]
                  %3028 = vst [vmem:[%s2988 + $0x98] sm:$0xff] %v3027
                  %v3029 = vld [vmem:[%s2987 + $0xa0] sm:$0xff]
                  %3030 = vst [vmem:[%s2988 + $0xa0] sm:$0xff] %v3029
                  %v3031 = vld [vmem:[%s2987 + $0xa8] sm:$0xff]
                  %3032 = vst [vmem:[%s2988 + $0xa8] sm:$0xff] %v3031
                  %v3033 = vld [vmem:[%s2987 + $0xb0] sm:$0xff]
                  %3034 = vst [vmem:[%s2988 + $0xb0] sm:$0xff] %v3033
                  %v3035 = vld [vmem:[%s2987 + $0xb8] sm:$0xff]
                  %3036 = vst [vmem:[%s2988 + $0xb8] sm:$0xff] %v3035
                  %v3037 = vld [vmem:[%s2987 + $0xc0] sm:$0xff]
                  %3038 = vst [vmem:[%s2988 + $0xc0] sm:$0xff] %v3037
                  %v3039 = vld [vmem:[%s2987 + $0xc8] sm:$0xff]
                  %3040 = vst [vmem:[%s2988 + $0xc8] sm:$0xff] %v3039
                  %v3041 = vld [vmem:[%s2987 + $0xd0] sm:$0xff]
                  %3042 = vst [vmem:[%s2988 + $0xd0] sm:$0xff] %v3041
                  %v3043 = vld [vmem:[%s2987 + $0xd8] sm:$0xff]
                  %3044 = vst [vmem:[%s2988 + $0xd8] sm:$0xff] %v3043
                  %v3045 = vld [vmem:[%s2987 + $0xe0] sm:$0xff]
                  %3046 = vst [vmem:[%s2988 + $0xe0] sm:$0xff] %v3045
                  %v3047 = vld [vmem:[%s2987 + $0xe8] sm:$0xff]
                  %3048 = vst [vmem:[%s2988 + $0xe8] sm:$0xff] %v3047
                  %v3049 = vld [vmem:[%s2987 + $0xf0] sm:$0xff]
                  %3050 = vst [vmem:[%s2988 + $0xf0] sm:$0xff] %v3049
                  %v3051 = vld [vmem:[%s2987 + $0xf8] sm:$0xff]
                  %3052 = vst [vmem:[%s2988 + $0xf8] sm:$0xff] %v3051
                  %v3053 = vld [vmem:[%s2987 + $0x100] sm:$0xff]
                  %3054 = vst [vmem:[%s2988 + $0x100] sm:$0xff] %v3053
                  %v3055 = vld [vmem:[%s2987 + $0x108] sm:$0xff]
                  %3056 = vst [vmem:[%s2988 + $0x108] sm:$0xff] %v3055
                  %v3057 = vld [vmem:[%s2987 + $0x110] sm:$0xff]
                  %3058 = vst [vmem:[%s2988 + $0x110] sm:$0xff] %v3057
                  %v3059 = vld [vmem:[%s2987 + $0x118] sm:$0xff]
                  %3060 = vst [vmem:[%s2988 + $0x118] sm:$0xff] %v3059
                  %v3061 = vld [vmem:[%s2987 + $0x120] sm:$0xff]
                  %3062 = vst [vmem:[%s2988 + $0x120] sm:$0xff] %v3061
                  %v3063 = vld [vmem:[%s2987 + $0x128] sm:$0xff]
                  %3064 = vst [vmem:[%s2988 + $0x128] sm:$0xff] %v3063
                  %v3065 = vld [vmem:[%s2987 + $0x130] sm:$0xff]
                  %3066 = vst [vmem:[%s2988 + $0x130] sm:$0xff] %v3065
                  %v3067 = vld [vmem:[%s2987 + $0x138] sm:$0xff]
                  %3068 = vst [vmem:[%s2988 + $0x138] sm:$0xff] %v3067
                  %v3069 = vld [vmem:[%s2987 + $0x140] sm:$0xff]
                  %3070 = vst [vmem:[%s2988 + $0x140] sm:$0xff] %v3069
                  %v3071 = vld [vmem:[%s2987 + $0x148] sm:$0xff]
                  %3072 = vst [vmem:[%s2988 + $0x148] sm:$0xff] %v3071
                  %v3073 = vld [vmem:[%s2987 + $0x150] sm:$0xff]
                  %3074 = vst [vmem:[%s2988 + $0x150] sm:$0xff] %v3073
                  %v3075 = vld [vmem:[%s2987 + $0x158] sm:$0xff]
                  %3076 = vst [vmem:[%s2988 + $0x158] sm:$0xff] %v3075
                  %v3077 = vld [vmem:[%s2987 + $0x160] sm:$0xff]
                  %3078 = vst [vmem:[%s2988 + $0x160] sm:$0xff] %v3077
                  %v3079 = vld [vmem:[%s2987 + $0x168] sm:$0xff]
                  %3080 = vst [vmem:[%s2988 + $0x168] sm:$0xff] %v3079
                  %v3081 = vld [vmem:[%s2987 + $0x170] sm:$0xff]
                  %3082 = vst [vmem:[%s2988 + $0x170] sm:$0xff] %v3081
                  %v3083 = vld [vmem:[%s2987 + $0x178] sm:$0xff]
                  %3084 = vst [vmem:[%s2988 + $0x178] sm:$0xff] %v3083
                  %v3085 = vld [vmem:[%s2987 + $0x180] sm:$0xff]
                  %3086 = vst [vmem:[%s2988 + $0x180] sm:$0xff] %v3085
                  %v3087 = vld [vmem:[%s2987 + $0x188] sm:$0xff]
                  %3088 = vst [vmem:[%s2988 + $0x188] sm:$0xff] %v3087
                  %v3089 = vld [vmem:[%s2987 + $0x190] sm:$0xff]
                  %3090 = vst [vmem:[%s2988 + $0x190] sm:$0xff] %v3089
                  %v3091 = vld [vmem:[%s2987 + $0x198] sm:$0xff]
                  %3092 = vst [vmem:[%s2988 + $0x198] sm:$0xff] %v3091
                  %v3093 = vld [vmem:[%s2987 + $0x1a0] sm:$0xff]
                  %3094 = vst [vmem:[%s2988 + $0x1a0] sm:$0xff] %v3093
                  %v3095 = vld [vmem:[%s2987 + $0x1a8] sm:$0xff]
                  %3096 = vst [vmem:[%s2988 + $0x1a8] sm:$0xff] %v3095
                  %v3097 = vld [vmem:[%s2987 + $0x1b0] sm:$0xff]
                  %3098 = vst [vmem:[%s2988 + $0x1b0] sm:$0xff] %v3097
                  %v3099 = vld [vmem:[%s2987 + $0x1b8] sm:$0xff]
                  %3100 = vst [vmem:[%s2988 + $0x1b8] sm:$0xff] %v3099
                  %v3101 = vld [vmem:[%s2987 + $0x1c0] sm:$0xff]
                  %3102 = vst [vmem:[%s2988 + $0x1c0] sm:$0xff] %v3101
                  %v3103 = vld [vmem:[%s2987 + $0x1c8] sm:$0xff]
                  %3104 = vst [vmem:[%s2988 + $0x1c8] sm:$0xff] %v3103
                  %v3105 = vld [vmem:[%s2987 + $0x1d0] sm:$0xff]
                  %3106 = vst [vmem:[%s2988 + $0x1d0] sm:$0xff] %v3105
                  %v3107 = vld [vmem:[%s2987 + $0x1d8] sm:$0xff]
                  %3108 = vst [vmem:[%s2988 + $0x1d8] sm:$0xff] %v3107
                  %v3109 = vld [vmem:[%s2987 + $0x1e0] sm:$0xff]
                  %3110 = vst [vmem:[%s2988 + $0x1e0] sm:$0xff] %v3109
                  %v3111 = vld [vmem:[%s2987 + $0x1e8] sm:$0xff]
                  %3112 = vst [vmem:[%s2988 + $0x1e8] sm:$0xff] %v3111
                  %v3113 = vld [vmem:[%s2987 + $0x1f0] sm:$0xff]
                  %3114 = vst [vmem:[%s2988 + $0x1f0] sm:$0xff] %v3113
                  %v3115 = vld [vmem:[%s2987 + $0x1f8] sm:$0xff]
                  %3116 = vst [vmem:[%s2988 + $0x1f8] sm:$0xff] %v3115
                  %s3117 = sadd.s32 1, %s2986
                  %p3118 = scmp.ge.s32.totalorder %s3117, %s2979
                  %s3119 = scalar_select %p3118, 0, %s3117
                  %s3120 = smul.u32 %s3119, 512
                  %s3121 = smul.u32 %s3119, 512
                  %s3122 = scalar_lea.vmem %s2787, %s3120 [#allocation2]
                  %s3123 = scalar_lea.vmem %s2798, %s3121
                $region71: #{tpu_custom_call.1} parent=65 // loop_footer
                  %s2983 = sadd.s32 %s2981, 1
                $region72: #{tpu_custom_call.1} parent=65 // loop_footer_branch
                  %2980 = sbr.rel target = $region68
                $region73: #{tpu_custom_call.1} parent=65 // loop_exit
                  _
                %s3124 = sshrl.u32 %s2794, 6
                %s3125 = sand.u32 %s2794, 63
                %s3126 = smul.u32 %s3124, 64
                %s3127 = smul.u32 8, %s3126
                %s3128 = scalar_lea.vmem %s2787, %s3127 [#allocation2]
                %s3129 = smul.u32 8, %s3126
                %s3130 = scalar_lea.vmem %s2798, %s3129
                // While loop
                $region74: #{tpu_custom_call.1} parent=65 // loop_pre_header
                  _
                $region75: #{tpu_custom_call.1} parent=65 // loop_header
                  %s3132 = sphi 0, %s3134
                  %p3133 = scmp.ge.s32.totalorder %s3132, %s3125
                  %s3137 = sphi 0, %s3144
                  %s3138 = sphi %s3128, %s3147
                  %s3139 = sphi %s3130, %s3148
                $region76: #{tpu_custom_call.1} parent=65 // loop_header_branch
                  %3136 = sbr.rel (%p3133) target = $region80
                $region77: #{tpu_custom_call.1} parent=65 // loop_body
                  %v3140 = vld [vmem:[%s3138] sm:$0xff]
                  %3141 = vst [vmem:[%s3139] sm:$0xff] %v3140
                  %s3142 = sadd.s32 1, %s3137
                  %p3143 = scmp.ge.s32.totalorder %s3142, %s3125
                  %s3144 = scalar_select %p3143, 0, %s3142
                  %s3145 = smul.u32 %s3144, 8
                  %s3146 = smul.u32 %s3144, 8
                  %s3147 = scalar_lea.vmem %s3128, %s3145 [#allocation2]
                  %s3148 = scalar_lea.vmem %s3130, %s3146
                $region78: #{tpu_custom_call.1} parent=65 // loop_footer
                  %s3134 = sadd.s32 %s3132, 1
                $region79: #{tpu_custom_call.1} parent=65 // loop_footer_branch
                  %3131 = sbr.rel target = $region75
                $region80: #{tpu_custom_call.1} parent=65 // loop_exit
                  _
              $region66: #{tpu_custom_call.1} parent=43 // pred_fallthru
                _
              // Predicated region
              $region81: #{tpu_custom_call.1} parent=43 // pred_check
                _
              $region82: #{tpu_custom_call.1} parent=43 // pred_check_branch
                %3150 = sbr.rel target = $region84
              $region83: #{tpu_custom_call.1} parent=43 // pred_region
                _
              $region84: #{tpu_custom_call.1} parent=43 // pred_fallthru
                _
            $region44: #{tpu_custom_call.1} parent=39 // pred_fallthru
              _
            // Predicated region
            $region45: #{tpu_custom_call.1} parent=39 // pred_check
              _
            $region46: #{tpu_custom_call.1} parent=39 // pred_check_branch
              %2805 = sbr.rel target = $region48
            $region47: #{tpu_custom_call.1} parent=39 // pred_region
              %s2807 = sshrl.u32 %s2794, 6
              // While loop
              $region49: #{tpu_custom_call.1} parent=47 // loop_pre_header
                _
              $region50: #{tpu_custom_call.1} parent=47 // loop_header
                %s2809 = sphi 0, %s2811
                %p2810 = scmp.ge.s32.totalorder %s2809, %s2807
                %s2814 = sphi 0, %s2947
                %s2815 = sphi %s2787, %s2950
                %s2816 = sphi %s2798, %s2951
              $region51: #{tpu_custom_call.1} parent=47 // loop_header_branch
                %2813 = sbr.rel (%p2810) target = $region55
              $region52: #{tpu_custom_call.1} parent=47 // loop_body
                %v2817 = vld [vmem:[%s2815] sm:$0xff]
                %2818 = vst [vmem:[%s2816] sm:$0xff] %v2817
                %v2819 = vld [vmem:[%s2815 + $0x8] sm:$0xff]
                %2820 = vst [vmem:[%s2816 + $0x8] sm:$0xff] %v2819
                %v2821 = vld [vmem:[%s2815 + $0x10] sm:$0xff]
                %2822 = vst [vmem:[%s2816 + $0x10] sm:$0xff] %v2821
                %v2823 = vld [vmem:[%s2815 + $0x18] sm:$0xff]
                %2824 = vst [vmem:[%s2816 + $0x18] sm:$0xff] %v2823
                %v2825 = vld [vmem:[%s2815 + $0x20] sm:$0xff]
                %2826 = vst [vmem:[%s2816 + $0x20] sm:$0xff] %v2825
                %v2827 = vld [vmem:[%s2815 + $0x28] sm:$0xff]
                %2828 = vst [vmem:[%s2816 + $0x28] sm:$0xff] %v2827
                %v2829 = vld [vmem:[%s2815 + $0x30] sm:$0xff]
                %2830 = vst [vmem:[%s2816 + $0x30] sm:$0xff] %v2829
                %v2831 = vld [vmem:[%s2815 + $0x38] sm:$0xff]
                %2832 = vst [vmem:[%s2816 + $0x38] sm:$0xff] %v2831
                %v2833 = vld [vmem:[%s2815 + $0x40] sm:$0xff]
                %2834 = vst [vmem:[%s2816 + $0x40] sm:$0xff] %v2833
                %v2835 = vld [vmem:[%s2815 + $0x48] sm:$0xff]
                %2836 = vst [vmem:[%s2816 + $0x48] sm:$0xff] %v2835
                %v2837 = vld [vmem:[%s2815 + $0x50] sm:$0xff]
                %2838 = vst [vmem:[%s2816 + $0x50] sm:$0xff] %v2837
                %v2839 = vld [vmem:[%s2815 + $0x58] sm:$0xff]
                %2840 = vst [vmem:[%s2816 + $0x58] sm:$0xff] %v2839
                %v2841 = vld [vmem:[%s2815 + $0x60] sm:$0xff]
                %2842 = vst [vmem:[%s2816 + $0x60] sm:$0xff] %v2841
                %v2843 = vld [vmem:[%s2815 + $0x68] sm:$0xff]
                %2844 = vst [vmem:[%s2816 + $0x68] sm:$0xff] %v2843
                %v2845 = vld [vmem:[%s2815 + $0x70] sm:$0xff]
                %2846 = vst [vmem:[%s2816 + $0x70] sm:$0xff] %v2845
                %v2847 = vld [vmem:[%s2815 + $0x78] sm:$0xff]
                %2848 = vst [vmem:[%s2816 + $0x78] sm:$0xff] %v2847
                %v2849 = vld [vmem:[%s2815 + $0x80] sm:$0xff]
                %2850 = vst [vmem:[%s2816 + $0x80] sm:$0xff] %v2849
                %v2851 = vld [vmem:[%s2815 + $0x88] sm:$0xff]
                %2852 = vst [vmem:[%s2816 + $0x88] sm:$0xff] %v2851
                %v2853 = vld [vmem:[%s2815 + $0x90] sm:$0xff]
                %2854 = vst [vmem:[%s2816 + $0x90] sm:$0xff] %v2853
                %v2855 = vld [vmem:[%s2815 + $0x98] sm:$0xff]
                %2856 = vst [vmem:[%s2816 + $0x98] sm:$0xff] %v2855
                %v2857 = vld [vmem:[%s2815 + $0xa0] sm:$0xff]
                %2858 = vst [vmem:[%s2816 + $0xa0] sm:$0xff] %v2857
                %v2859 = vld [vmem:[%s2815 + $0xa8] sm:$0xff]
                %2860 = vst [vmem:[%s2816 + $0xa8] sm:$0xff] %v2859
                %v2861 = vld [vmem:[%s2815 + $0xb0] sm:$0xff]
                %2862 = vst [vmem:[%s2816 + $0xb0] sm:$0xff] %v2861
                %v2863 = vld [vmem:[%s2815 + $0xb8] sm:$0xff]
                %2864 = vst [vmem:[%s2816 + $0xb8] sm:$0xff] %v2863
                %v2865 = vld [vmem:[%s2815 + $0xc0] sm:$0xff]
                %2866 = vst [vmem:[%s2816 + $0xc0] sm:$0xff] %v2865
                %v2867 = vld [vmem:[%s2815 + $0xc8] sm:$0xff]
                %2868 = vst [vmem:[%s2816 + $0xc8] sm:$0xff] %v2867
                %v2869 = vld [vmem:[%s2815 + $0xd0] sm:$0xff]
                %2870 = vst [vmem:[%s2816 + $0xd0] sm:$0xff] %v2869
                %v2871 = vld [vmem:[%s2815 + $0xd8] sm:$0xff]
                %2872 = vst [vmem:[%s2816 + $0xd8] sm:$0xff] %v2871
                %v2873 = vld [vmem:[%s2815 + $0xe0] sm:$0xff]
                %2874 = vst [vmem:[%s2816 + $0xe0] sm:$0xff] %v2873
                %v2875 = vld [vmem:[%s2815 + $0xe8] sm:$0xff]
                %2876 = vst [vmem:[%s2816 + $0xe8] sm:$0xff] %v2875
                %v2877 = vld [vmem:[%s2815 + $0xf0] sm:$0xff]
                %2878 = vst [vmem:[%s2816 + $0xf0] sm:$0xff] %v2877
                %v2879 = vld [vmem:[%s2815 + $0xf8] sm:$0xff]
                %2880 = vst [vmem:[%s2816 + $0xf8] sm:$0xff] %v2879
                %v2881 = vld [vmem:[%s2815 + $0x100] sm:$0xff]
                %2882 = vst [vmem:[%s2816 + $0x100] sm:$0xff] %v2881
                %v2883 = vld [vmem:[%s2815 + $0x108] sm:$0xff]
                %2884 = vst [vmem:[%s2816 + $0x108] sm:$0xff] %v2883
                %v2885 = vld [vmem:[%s2815 + $0x110] sm:$0xff]
                %2886 = vst [vmem:[%s2816 + $0x110] sm:$0xff] %v2885
                %v2887 = vld [vmem:[%s2815 + $0x118] sm:$0xff]
                %2888 = vst [vmem:[%s2816 + $0x118] sm:$0xff] %v2887
                %v2889 = vld [vmem:[%s2815 + $0x120] sm:$0xff]
                %2890 = vst [vmem:[%s2816 + $0x120] sm:$0xff] %v2889
                %v2891 = vld [vmem:[%s2815 + $0x128] sm:$0xff]
                %2892 = vst [vmem:[%s2816 + $0x128] sm:$0xff] %v2891
                %v2893 = vld [vmem:[%s2815 + $0x130] sm:$0xff]
                %2894 = vst [vmem:[%s2816 + $0x130] sm:$0xff] %v2893
                %v2895 = vld [vmem:[%s2815 + $0x138] sm:$0xff]
                %2896 = vst [vmem:[%s2816 + $0x138] sm:$0xff] %v2895
                %v2897 = vld [vmem:[%s2815 + $0x140] sm:$0xff]
                %2898 = vst [vmem:[%s2816 + $0x140] sm:$0xff] %v2897
                %v2899 = vld [vmem:[%s2815 + $0x148] sm:$0xff]
                %2900 = vst [vmem:[%s2816 + $0x148] sm:$0xff] %v2899
                %v2901 = vld [vmem:[%s2815 + $0x150] sm:$0xff]
                %2902 = vst [vmem:[%s2816 + $0x150] sm:$0xff] %v2901
                %v2903 = vld [vmem:[%s2815 + $0x158] sm:$0xff]
                %2904 = vst [vmem:[%s2816 + $0x158] sm:$0xff] %v2903
                %v2905 = vld [vmem:[%s2815 + $0x160] sm:$0xff]
                %2906 = vst [vmem:[%s2816 + $0x160] sm:$0xff] %v2905
                %v2907 = vld [vmem:[%s2815 + $0x168] sm:$0xff]
                %2908 = vst [vmem:[%s2816 + $0x168] sm:$0xff] %v2907
                %v2909 = vld [vmem:[%s2815 + $0x170] sm:$0xff]
                %2910 = vst [vmem:[%s2816 + $0x170] sm:$0xff] %v2909
                %v2911 = vld [vmem:[%s2815 + $0x178] sm:$0xff]
                %2912 = vst [vmem:[%s2816 + $0x178] sm:$0xff] %v2911
                %v2913 = vld [vmem:[%s2815 + $0x180] sm:$0xff]
                %2914 = vst [vmem:[%s2816 + $0x180] sm:$0xff] %v2913
                %v2915 = vld [vmem:[%s2815 + $0x188] sm:$0xff]
                %2916 = vst [vmem:[%s2816 + $0x188] sm:$0xff] %v2915
                %v2917 = vld [vmem:[%s2815 + $0x190] sm:$0xff]
                %2918 = vst [vmem:[%s2816 + $0x190] sm:$0xff] %v2917
                %v2919 = vld [vmem:[%s2815 + $0x198] sm:$0xff]
                %2920 = vst [vmem:[%s2816 + $0x198] sm:$0xff] %v2919
                %v2921 = vld [vmem:[%s2815 + $0x1a0] sm:$0xff]
                %2922 = vst [vmem:[%s2816 + $0x1a0] sm:$0xff] %v2921
                %v2923 = vld [vmem:[%s2815 + $0x1a8] sm:$0xff]
                %2924 = vst [vmem:[%s2816 + $0x1a8] sm:$0xff] %v2923
                %v2925 = vld [vmem:[%s2815 + $0x1b0] sm:$0xff]
                %2926 = vst [vmem:[%s2816 + $0x1b0] sm:$0xff] %v2925
                %v2927 = vld [vmem:[%s2815 + $0x1b8] sm:$0xff]
                %2928 = vst [vmem:[%s2816 + $0x1b8] sm:$0xff] %v2927
                %v2929 = vld [vmem:[%s2815 + $0x1c0] sm:$0xff]
                %2930 = vst [vmem:[%s2816 + $0x1c0] sm:$0xff] %v2929
                %v2931 = vld [vmem:[%s2815 + $0x1c8] sm:$0xff]
                %2932 = vst [vmem:[%s2816 + $0x1c8] sm:$0xff] %v2931
                %v2933 = vld [vmem:[%s2815 + $0x1d0] sm:$0xff]
                %2934 = vst [vmem:[%s2816 + $0x1d0] sm:$0xff] %v2933
                %v2935 = vld [vmem:[%s2815 + $0x1d8] sm:$0xff]
                %2936 = vst [vmem:[%s2816 + $0x1d8] sm:$0xff] %v2935
                %v2937 = vld [vmem:[%s2815 + $0x1e0] sm:$0xff]
                %2938 = vst [vmem:[%s2816 + $0x1e0] sm:$0xff] %v2937
                %v2939 = vld [vmem:[%s2815 + $0x1e8] sm:$0xff]
                %2940 = vst [vmem:[%s2816 + $0x1e8] sm:$0xff] %v2939
                %v2941 = vld [vmem:[%s2815 + $0x1f0] sm:$0xff]
                %2942 = vst [vmem:[%s2816 + $0x1f0] sm:$0xff] %v2941
                %v2943 = vld [vmem:[%s2815 + $0x1f8] sm:$0xff]
                %2944 = vst [vmem:[%s2816 + $0x1f8] sm:$0xff] %v2943
                %s2945 = sadd.s32 1, %s2814
                %p2946 = scmp.ge.s32.totalorder %s2945, %s2807
                %s2947 = scalar_select %p2946, 0, %s2945
                %s2948 = smul.u32 %s2947, 512
                %s2949 = smul.u32 %s2947, 512
                %s2950 = scalar_lea.vmem %s2787, %s2948 [#allocation2]
                %s2951 = scalar_lea.vmem %s2798, %s2949
              $region53: #{tpu_custom_call.1} parent=47 // loop_footer
                %s2811 = sadd.s32 %s2809, 1
              $region54: #{tpu_custom_call.1} parent=47 // loop_footer_branch
                %2808 = sbr.rel target = $region50
              $region55: #{tpu_custom_call.1} parent=47 // loop_exit
                _
              %s2952 = sshrl.u32 %s2794, 6
              %s2953 = sand.u32 %s2794, 63
              %s2954 = smul.u32 %s2952, 64
              %s2955 = smul.u32 8, %s2954
              %s2956 = scalar_lea.vmem %s2787, %s2955 [#allocation2]
              %s2957 = smul.u32 8, %s2954
              %s2958 = scalar_lea.vmem %s2798, %s2957
              // While loop
              $region56: #{tpu_custom_call.1} parent=47 // loop_pre_header
                _
              $region57: #{tpu_custom_call.1} parent=47 // loop_header
                %s2960 = sphi 0, %s2962
                %p2961 = scmp.ge.s32.totalorder %s2960, %s2953
                %s2965 = sphi 0, %s2972
                %s2966 = sphi %s2956, %s2975
                %s2967 = sphi %s2958, %s2976
              $region58: #{tpu_custom_call.1} parent=47 // loop_header_branch
                %2964 = sbr.rel (%p2961) target = $region62
              $region59: #{tpu_custom_call.1} parent=47 // loop_body
                %v2968 = vld [vmem:[%s2966] sm:$0xff]
                %2969 = vst [vmem:[%s2967] sm:$0xff] %v2968
                %s2970 = sadd.s32 1, %s2965
                %p2971 = scmp.ge.s32.totalorder %s2970, %s2953
                %s2972 = scalar_select %p2971, 0, %s2970
                %s2973 = smul.u32 %s2972, 8
                %s2974 = smul.u32 %s2972, 8
                %s2975 = scalar_lea.vmem %s2956, %s2973 [#allocation2]
                %s2976 = scalar_lea.vmem %s2958, %s2974
              $region60: #{tpu_custom_call.1} parent=47 // loop_footer
                %s2962 = sadd.s32 %s2960, 1
              $region61: #{tpu_custom_call.1} parent=47 // loop_footer_branch
                %2959 = sbr.rel target = $region57
              $region62: #{tpu_custom_call.1} parent=47 // loop_exit
                _
            $region48: #{tpu_custom_call.1} parent=39 // pred_fallthru
              _
          $region40: #{tpu_custom_call.1} parent=35 // pred_fallthru
            _
          %3151 = vnop
        $region36: #{tpu_custom_call.1} parent=31 // pred_fallthru
          _
      $region32: #{tpu_custom_call.1} parent=5 // pred_fallthru
        _
      %p3152 = scmp.le.s32.totalorder 2, %s9
      // Predicated region
      $region85: #{tpu_custom_call.1} parent=5 // pred_check
        %p3153 = pneg %p3152
      $region86: #{tpu_custom_call.1} parent=5 // pred_check_branch
        %3155 = sbr.rel (%p3153) target = $region88
      $region87: #{tpu_custom_call.1} parent=5 // pred_region
        %s3156 = ssub.s32 %s9, 2
        // Predicated region
        $region89: #{tpu_custom_call.1} parent=87 // pred_check
          %p3157 = pneg %p106
        $region90: #{tpu_custom_call.1} parent=87 // pred_check_branch
          %3159 = sbr.rel (%p3157) target = $region92
        $region91: #{tpu_custom_call.1} parent=87 // pred_region
          %s3160 = sand.u32 %s91, 1
          %s3161 = sand.u32 %s91, 1
          %s3162 = smul.addr %s3161, 512
          %s3163 = scalar_lea.vmem [#allocation2], %s3162
        $region92: #{tpu_custom_call.1} parent=87 // pred_fallthru
          _
      $region88: #{tpu_custom_call.1} parent=5 // pred_fallthru
        _
    $region6: #{tpu_custom_call.1} parent=1 // loop_footer
      %s13 = sadd.s32 1, %s9
    $region7: #{tpu_custom_call.1} parent=1 // loop_footer_branch
      %8 = sbr.rel target = $region3
    $region8: #{tpu_custom_call.1} parent=1 // loop_exit
      _

</llo_original>
